<compile_context>
chip_gen: v6e
topology: v6e:2x2x1
jax: 0.10.0
libtpu: 0.0.40
codegen_flags: <defaults>
</compile_context>

<pallas_src>
import numpy as np
import jax
import jax.numpy as jnp
from jax import lax
from jax.experimental import pallas as pl
from jax.experimental.pallas import tpu as pltpu

# ---------------------------------------------------------------------------
# Model configuration (matches the PyTorch module's declared sizes)
# ---------------------------------------------------------------------------
EMB_DIM = 256      # char embedding dim
HIDDEN = 32        # GRU hidden size (per direction)
NUM_TAGS = 5       # sbj/obj tag head size
NUM_REL = 49       # p_fc output size

# Padded / hardware-friendly layout constants
HP = 128           # one packed gate / hidden tile: fwd in lanes 0:32, bwd in 32:64
BP = 8             # batch padded to 8 sublanes (raise toward 128+ for throughput)
TAGP = 128         # merged sbj/obj head lane width (sbj @ 0:5, obj @ 64:69)
OBJ_OFF = 64       # lane offset of the obj head inside the TAGP tile
RELP = 128         # p_fc padded lane width

_VSPEC = pl.BlockSpec(memory_space=pltpu.MemorySpace.VMEM)


# ---------------------------------------------------------------------------
# Pallas kernels
# ---------------------------------------------------------------------------

def encoder_heads_kernel(emb_ref,          # (T*BP, E)        bf16
                         wih_ref,          # (E, 3*HP)        bf16  lane-packed fwd|bwd gates
                         gibias_ref,       # (1, 3*HP)        f32   bih(+bhh for r,z) folded
                         whh_ref,          # (HP, 3*HP)       bf16  block-structured
                         bhhn_ref,         # (1, HP)          f32   bhh_n (both dirs, packed)
                         wheadf_ref,       # (HP, TAGP)       bf16  head weights, fwd rows only
                         wheadb_ref,       # (HP, TAGP)       bf16  head weights, bwd rows only
                         bhead_ref,        # (1, TAGP)        f32
                         hf_ref,           # out (T, BP, HP)  bf16  packed state, fwd lanes valid @ t
                         hb_ref,           # out (T, BP, HP)  bf16  packed state, bwd lanes valid @ t
                         heads_ref,        # out (T, BP, TAGP) f32  [sbj|obj] emissions
                         gi_scr):          # scratch (T, BP, 3*HP) f32
    T, BPk, HPk = hf_ref.shape
    G3 = gi_scr.shape[-1]                                  # 3 * HP

    # -- 1) hoisted input->gate projection, both directions lane-packed,
    #       written straight into a single scratch (no duplicate copies)
    gi = jnp.dot(emb_ref[...], wih_ref[...],
                 preferred_element_type=jnp.float32) + gibias_ref[...]
    gi_scr[...] = gi.reshape(T, BPk, G3)

    # hoisted loop invariants
    lane = lax.broadcasted_iota(jnp.int32, (BPk, G3), 1)
    fwd_mask = (lane % HPk) < HIDDEN                       # fwd lanes of each gate tile
    bhhn_b = jnp.broadcast_to(bhhn_ref[...], (BPk, HPk))   # n-gate only hidden-path bias

    # -- 2) fused fwd+bwd recurrence: ONE small matmul + 3 transcendental tiles
    #       per step; both directions share the 128-lane gate tiles.
    def step(i, h):                                        # h: (BP, HP) f32
        gh = jnp.dot(h.astype(jnp.bfloat16), whh_ref[...],
                     preferred_element_type=jnp.float32)
        # merge fwd gates of time i with bwd gates of time T-1-i (one select)
        gi_m = jnp.where(fwd_mask, gi_scr[i], gi_scr[T - 1 - i])
        r = jax.nn.sigmoid(gi_m[:, 0:HPk] + gh[:, 0:HPk])
        z = jax.nn.sigmoid(gi_m[:, HPk:2 * HPk] + gh[:, HPk:2 * HPk])
        n = jnp.tanh(gi_m[:, 2 * HPk:3 * HPk] + r * (gh[:, 2 * HPk:3 * HPk] + bhhn_b))
        h_new = (1.0 - z) * n + z * h
        # unmasked (8,128) stores; fwd lanes are the time-i state, bwd lanes the
        # time-(T-1-i) state (head weights zero out the other half).
        hf_ref[i] = h_new.astype(hf_ref.dtype)
        hb_ref[T - 1 - i] = h_new.astype(hb_ref.dtype)
        return h_new

    h0 = jnp.zeros((BPk, HPk), jnp.float32)
    lax.fori_loop(0, T, step, h0, unroll=min(T, 8))

    # -- 3) merged sbj/obj heads in ONE 128-lane tile (sbj @ 0:5, obj @ 64:69);
    #       wheadf has nonzero rows only for fwd lanes, wheadb only for bwd lanes,
    #       so the "wrong-time" half of each packed state contributes nothing.
    hf2 = hf_ref[...].reshape(T * BPk, HPk)                # bf16
    hb2 = hb_ref[...].reshape(T * BPk, HPk)                # bf16
    heads = (jnp.dot(hf2, wheadf_ref[...], preferred_element_type=jnp.float32)
             + jnp.dot(hb2, wheadb_ref[...], preferred_element_type=jnp.float32)
             + bhead_ref[...])
    heads_ref[...] = heads.reshape(T, BPk, heads_ref.shape[-1])


def pfc_kernel(x_ref, w_ref, b_ref, o_ref):
    """p_fc + fused sigmoid: (Npad, 4H=128) bf16 @ (128, RELP) bf16 -> sigmoid f32."""
    o_ref[...] = jax.nn.sigmoid(
        jnp.dot(x_ref[...], w_ref[...], preferred_element_type=jnp.float32)
        + b_ref[...])


# ---------------------------------------------------------------------------
# Device wrappers
# ---------------------------------------------------------------------------

def _encode_device(text, packed):
    """Embedding lookup + bi-GRU encoder + sbj/obj heads, all on device.

    Returns batch-major (B,T,2H) vec and (B,T,5) sbj/obj emissions.
    """
    B, T = text.shape
    # time-major gather from the bf16 table; pad the int ids (free), not activations
    text_pad = jnp.pad(text, ((0, BP - B), (0, 0)))          # (BP, T) int32
    emb = packed['embedding'][text_pad.T]                    # (T, BP, E) bf16
    emb2d = emb.reshape(T * BP, EMB_DIM)

    hf, hb, heads = pl.pallas_call(
        encoder_heads_kernel,
        out_shape=(jax.ShapeDtypeStruct((T, BP, HP), jnp.bfloat16),
                   jax.ShapeDtypeStruct((T, BP, HP), jnp.bfloat16),
                   jax.ShapeDtypeStruct((T, BP, TAGP), jnp.float32)),
        in_specs=[_VSPEC] * 8,
        out_specs=(_VSPEC, _VSPEC, _VSPEC),
        scratch_shapes=[pltpu.VMEM((T, BP, 3 * HP), jnp.float32)],
        compiler_params=pltpu.CompilerParams(vmem_limit_bytes=64 * 1024 * 1024),
    )(emb2d, packed['wih'], packed['gibias'], packed['whh'], packed['bhhn'],
      packed['wheadf'], packed['wheadb'], packed['bhead'])

    # batch-major, unpadded views (device-side transposes; single host transfer)
    hf32 = hf[:, :B, 0:HIDDEN].astype(jnp.float32)                  # fwd state @ t
    hb32 = hb[:, :B, HIDDEN:2 * HIDDEN].astype(jnp.float32)         # bwd state @ t
    vec_bt = jnp.transpose(jnp.concatenate([hf32, hb32], axis=-1), (1, 0, 2))
    sbj_em = jnp.transpose(heads[:, :B, 0:NUM_TAGS], (1, 0, 2))     # (B, T, 5)
    obj_em = jnp.transpose(heads[:, :B, OBJ_OFF:OBJ_OFF + NUM_TAGS], (1, 0, 2))
    return vec_bt, sbj_em, obj_em


_encode = jax.jit(_encode_device)


@jax.jit
def _pfc_device(x_bf16, wp, bp):
    n_pad = x_bf16.shape[0]
    return pl.pallas_call(
        pfc_kernel,
        out_shape=jax.ShapeDtypeStruct((n_pad, RELP), jnp.float32),
        in_specs=[_VSPEC, _VSPEC, _VSPEC],
        out_specs=_VSPEC,
    )(x_bf16, wp, bp)


# ---------------------------------------------------------------------------
# Host-side glue: CRF Viterbi decode + span enumeration (data-dependent,
# dynamic-shape Python exactly as in the PyTorch module)
# ---------------------------------------------------------------------------

def viterbi_decode(emissions, start_t, end_t, trans):
    """emissions: (T, K) for one sequence (mask all-True)."""
    T, K = emissions.shape
    score = start_t + emissions[0]
    history = []
    for t in range(1, T):
        next_score = score[:, None] + trans + emissions[t][None, :]
        history.append(next_score.argmax(axis=0))
        score = next_score.max(axis=0)
    score = score + end_t
    best = int(score.argmax())
    tags = [best]
    for hist in reversed(history):
        best = int(hist[best])
        tags.append(best)
    tags.reverse()
    return tags


def extract_spans(tags):
    """Replicates the module's run-extraction loop over a decoded tag list."""
    index = -9
    spans = []
    for i in range(len(tags)):
        if i <= index:
            continue
        if tags[i] != 0:
            index_s = i
            index_e = i
            for j in range(len(tags[i:])):
                if tags[i:][j] == 0:
                    index_e = i + j - 1
                    break
                if j == len(tags[i:]) - 1:
                    index_e = len(tags) - 1
            spans.append((index_s, index_e))
            index = index_e
    return spans


# ---------------------------------------------------------------------------
# Deterministic parameter init (mirrors the shapes declared in __init__)
# ---------------------------------------------------------------------------

def xavier_uniform(key, shape):
    fan_out, fan_in = shape
    bound = np.sqrt(6.0 / (fan_in + fan_out))
    return jax.random.uniform(key, shape, jnp.float32, -bound, bound)


def make_params(key, vocab, emb_dim, hidden, num_tags):
    ks = jax.random.split(key, 20)
    stdv = 1.0 / np.sqrt(hidden)

    def u(k, shape, lo, hi):
        return jax.random.uniform(k, shape, jnp.float32, lo, hi)

    emb = jax.random.normal(ks[0], (vocab, emb_dim), jnp.float32)
    emb = emb.at[0].set(0.0)  # padding_idx=0

    p = {'embedding': emb}
    # bidirectional GRU (x @ W layout)
    for d, (kw, kh, kb1, kb2) in zip(('f', 'b'),
                                     ((ks[1], ks[2], ks[3], ks[4]),
                                      (ks[5], ks[6], ks[7], ks[8]))):
        p[f'wih_{d}'] = u(kw, (emb_dim, 3 * hidden), -stdv, stdv)
        p[f'whh_{d}'] = u(kh, (hidden, 3 * hidden), -stdv, stdv)
        p[f'bih_{d}'] = u(kb1, (1, 3 * hidden), -stdv, stdv)
        p[f'bhh_{d}'] = u(kb2, (1, 3 * hidden), -stdv, stdv)

    # sbj_position / obj_position / p_fc (xavier_uniform weights, zero bias)
    p['wsbj'] = xavier_uniform(ks[9], (num_tags, 2 * hidden)).T
    p['bsbj'] = jnp.zeros((1, num_tags), jnp.float32)
    p['wobj'] = xavier_uniform(ks[10], (num_tags, 2 * hidden)).T
    p['bobj'] = jnp.zeros((1, num_tags), jnp.float32)
    p['wp'] = xavier_uniform(ks[11], (NUM_REL, 4 * hidden)).T
    p['bp'] = jnp.zeros((1, NUM_REL), jnp.float32)

    # CRF params (pytorch-crf default: uniform(-0.1, 0.1)) -> host numpy
    for name, (k1, k2, k3) in zip(('sbj', 'obj'),
                                  ((ks[12], ks[13], ks[14]),
                                   (ks[15], ks[16], ks[17]))):
        p[f'{name}_start'] = np.asarray(u(k1, (num_tags,), -0.1, 0.1))
        p[f'{name}_end'] = np.asarray(u(k2, (num_tags,), -0.1, 0.1))
        p[f'{name}_trans'] = np.asarray(u(k3, (num_tags, num_tags), -0.1, 0.1))
    return p


def pack_params(p, hidden):
    """Pack raw GRU/head weights into the lane-packed, fused, bf16 layout."""
    H = hidden
    E = np.asarray(p['wih_f']).shape[0]
    G3 = 3 * HP

    wih = np.zeros((E, G3), np.float32)
    gibias = np.zeros((1, G3), np.float32)
    whh = np.zeros((HP, G3), np.float32)
    bhhn = np.zeros((1, HP), np.float32)

    for d_idx, d in enumerate(('f', 'b')):
        lane0 = d_idx * H                      # fwd -> lanes 0:H, bwd -> lanes H:2H
        wih_d = np.asarray(p[f'wih_{d}'])      # (E, 3H)
        whh_d = np.asarray(p[f'whh_{d}'])      # (H, 3H)
        bih_d = np.asarray(p[f'bih_{d}'])[0]
        bhh_d = np.asarray(p[f'bhh_{d}'])[0]
        for g in range(3):                     # r, z, n gates
            col0 = g * HP + lane0
            wih[:, col0:col0 + H] = wih_d[:, g * H:(g + 1) * H]
            whh[lane0:lane0 + H, col0:col0 + H] = whh_d[:, g * H:(g + 1) * H]
            if g < 2:   # bhh for r,z folds into the precomputed gi
                gibias[0, col0:col0 + H] = bih_d[g * H:(g + 1) * H] + bhh_d[g * H:(g + 1) * H]
            else:       # n gate: bih folds into gi, bhh stays on the gh path
                gibias[0, col0:col0 + H] = bih_d[g * H:(g + 1) * H]
                bhhn[0, lane0:lane0 + H] = bhh_d[g * H:(g + 1) * H]

    # merged sbj/obj heads: single 128-lane output tile, sbj @ 0:5, obj @ 64:69.
    wsbj = np.asarray(p['wsbj'])               # (2H, 5)
    wobj = np.asarray(p['wobj'])
    wheadf = np.zeros((HP, TAGP), np.float32)  # only fwd rows nonzero
    wheadb = np.zeros((HP, TAGP), np.float32)  # only bwd rows nonzero
    bhead = np.zeros((1, TAGP), np.float32)
    wheadf[0:H, 0:NUM_TAGS] = wsbj[:H]
    wheadf[0:H, OBJ_OFF:OBJ_OFF + NUM_TAGS] = wobj[:H]
    wheadb[H:2 * H, 0:NUM_TAGS] = wsbj[H:]
    wheadb[H:2 * H, OBJ_OFF:OBJ_OFF + NUM_TAGS] = wobj[H:]
    bhead[0, 0:NUM_TAGS] = np.asarray(p['bsbj'])[0]
    bhead[0, OBJ_OFF:OBJ_OFF + NUM_TAGS] = np.asarray(p['bobj'])[0]

    wp_pad = np.zeros((4 * H, RELP), np.float32)
    wp_pad[:, :NUM_REL] = np.asarray(p['wp'])
    bp_pad = np.zeros((1, RELP), np.float32)
    bp_pad[0, :NUM_REL] = np.asarray(p['bp'])[0]

    return {
        'embedding': jnp.asarray(p['embedding'], jnp.bfloat16),
        'wih': jnp.asarray(wih, jnp.bfloat16),
        'gibias': jnp.asarray(gibias, jnp.float32),
        'whh': jnp.asarray(whh, jnp.bfloat16),
        'bhhn': jnp.asarray(bhhn, jnp.float32),
        'wheadf': jnp.asarray(wheadf, jnp.bfloat16),
        'wheadb': jnp.asarray(wheadb, jnp.bfloat16),
        'bhead': jnp.asarray(bhead, jnp.float32),
        'wp': jnp.asarray(wp_pad, jnp.bfloat16),
        'bp': jnp.asarray(bp_pad, jnp.float32),
    }


# ---------------------------------------------------------------------------
# Forward (eval path of ModelXy.forward, is_train=False)
# ---------------------------------------------------------------------------

def forward_eval(text, params, packed):
    B, T = text.shape
    assert B <= BP, "toy eval path assumes batch <= 8 (pad bucket)"

    vec_bt, sbj_em, obj_em = _encode(text, packed)
    vec_np, sbj_np, obj_np = jax.device_get((vec_bt, sbj_em, obj_em))

    r_sbj_bounds, r_obj_bounds = [], []
    feats, pair_counts = [], []
    for b in range(B):
        sbj_tags = viterbi_decode(sbj_np[b], params['sbj_start'],
                                  params['sbj_end'], params['sbj_trans'])
        obj_tags = viterbi_decode(obj_np[b], params['obj_start'],
                                  params['obj_end'], params['obj_trans'])
        if sum(sbj_tags) == 0 or sum(obj_tags) == 0:
            r_sbj_bounds.append([(-1, -1)])
            r_obj_bounds.append([(-1, -1)])
            pair_counts.append(0)
            continue
        sspans = extract_spans(sbj_tags)
        ospans = extract_spans(obj_tags)
        sb, ob = [], []
        for s in sspans:
            for o in ospans:
                sb.append(s)
                ob.append(o)
                vs = vec_np[b][[s[0], s[1]]].mean(axis=0)   # mean of 2 endpoints
                vo = vec_np[b][[o[0], o[1]]].mean(axis=0)
                feats.append(np.concatenate([vs, vo]))
        r_sbj_bounds.append(sb)
        r_obj_bounds.append(ob)
        pair_counts.append(len(sb))

    if feats:
        N = len(feats)
        n_pad = max(8, 1 << (N - 1).bit_length())   # pow2 bucket -> few recompiles
        X = np.zeros((n_pad, 4 * HIDDEN), np.float32)
        X[:N] = np.stack(feats)
        probs_pad = _pfc_device(jnp.asarray(X, jnp.bfloat16), packed['wp'], packed['bp'])
        probs = np.asarray(jax.block_until_ready(probs_pad))[:N, :NUM_REL]
    else:
        probs = np.zeros((0, NUM_REL), np.float32)

    r_ps, off = [], 0
    for n in pair_counts:
        if n == 0:
            r_ps.append(np.zeros((1, NUM_REL), np.float32))
        else:
            r_ps.append(probs[off:off + n])
            off += n
    return r_sbj_bounds, r_obj_bounds, r_ps


# TODO(synk): training branch (CRF token-mean log-likelihood losses and the
#             BCE-with-logits loss over dynamically enumerated span pairs) is
#             not implemented; only the inference path is reproduced.


if __name__ == "__main__":
    B, T = 2, 8
    VOCAB = 100

    key = jax.random.PRNGKey(0)
    k_par, k_text = jax.random.split(key)
    params = make_params(k_par, VOCAB, EMB_DIM, HIDDEN, NUM_TAGS)
    packed = pack_params(params, HIDDEN)

    # tokens in [1, VOCAB) so there is no padding (mask all True)
    text = jax.random.randint(k_text, (B, T), 1, VOCAB, dtype=jnp.int32)

    sbj_bounds, obj_bounds, ps = forward_eval(text, params, packed)

    # make sure the p_fc kernel executes at least once regardless of decode output
    dummy = _pfc_device(jnp.zeros((8, 4 * HIDDEN), jnp.bfloat16),
                        packed['wp'], packed['bp'])
    jax.block_until_ready(dummy)

    assert len(sbj_bounds) == B and len(obj_bounds) == B and len(ps) == B
    for pr in ps:
        assert pr.shape[1] == 49
    print("KERNEL_OK")
</pallas_src>

<mosaic_0001>
module attributes {stable_mosaic.version = 11 : i64} {
  func.func @encoder_heads_kernel(%arg0: memref<64x256xbf16, #tpu.memory_space<vmem>>, %arg1: memref<256x384xbf16, #tpu.memory_space<vmem>>, %arg2: memref<1x384xf32, #tpu.memory_space<vmem>>, %arg3: memref<128x384xbf16, #tpu.memory_space<vmem>>, %arg4: memref<1x128xf32, #tpu.memory_space<vmem>>, %arg5: memref<128x128xbf16, #tpu.memory_space<vmem>>, %arg6: memref<128x128xbf16, #tpu.memory_space<vmem>>, %arg7: memref<1x128xf32, #tpu.memory_space<vmem>>, %arg8: memref<8x8x128xbf16, #tpu.memory_space<vmem>>, %arg9: memref<8x8x128xbf16, #tpu.memory_space<vmem>>, %arg10: memref<8x8x128xf32, #tpu.memory_space<vmem>>, %arg11: memref<8x8x384xf32, #tpu.memory_space<vmem>>) attributes {dimension_semantics = [], scalar_prefetch = 0 : i64, scratch_operands = 1 : i64, tpu.core_type = #tpu.core_type<tc>} {
    %c0 = arith.constant 0 : index
    %c0_0 = arith.constant 0 : index
    %0 = vector.load %arg0[%c0, %c0_0] : memref<64x256xbf16, #tpu.memory_space<vmem>>, vector<64x256xbf16>
    %c0_1 = arith.constant 0 : index
    %c0_2 = arith.constant 0 : index
    %1 = vector.load %arg1[%c0_1, %c0_2] : memref<256x384xbf16, #tpu.memory_space<vmem>>, vector<256x384xbf16>
    %cst = arith.constant dense<0.000000e+00> : vector<64x384xf32>
    %2 = tpu.matmul %0, %1, %cst {dimension_numbers = #tpu.dot_dimension_numbers<[1], [0], [0], [1], [0, 0, 1, 1], [], []>} : vector<64x256xbf16>, vector<256x384xbf16>, vector<64x384xf32> -> vector<64x384xf32>
    %c0_3 = arith.constant 0 : index
    %c0_4 = arith.constant 0 : index
    %3 = vector.load %arg2[%c0_3, %c0_4] : memref<1x384xf32, #tpu.memory_space<vmem>>, vector<1x384xf32>
    %4 = vector.broadcast %3 : vector<1x384xf32> to vector<64x384xf32>
    %5 = arith.addf %2, %4 : vector<64x384xf32>
    %6 = vector.shape_cast %5 : vector<64x384xf32> to vector<8x8x384xf32>
    %c0_5 = arith.constant 0 : index
    %c0_6 = arith.constant 0 : index
    %c0_7 = arith.constant 0 : index
    %7 = vector.load %arg11[%c0_5, %c0_6, %c0_7] : memref<8x8x384xf32, #tpu.memory_space<vmem>>, vector<8x8x384xf32>
    tpu.vector_store %arg11[%c0_5, %c0_6, %c0_7], %6 {strides = array<i32>} : memref<8x8x384xf32, #tpu.memory_space<vmem>>, vector<8x8x384xf32>,
    %8 = tpu.iota {dimensions = array<i32: 1>} : vector<8x384xi32>
    %c128_i32 = arith.constant 128 : i32
    %c0_i32 = arith.constant 0 : i32
    %9 = arith.cmpi eq, %c128_i32, %c0_i32 : i32
    %c1_i32 = arith.constant 1 : i32
    %10 = arith.select %9, %c1_i32, %c128_i32 : i32
    %11 = vector.broadcast %10 : i32 to vector<8x384xi32>
    %12 = arith.remsi %8, %11 : vector<8x384xi32>
    %c0_i32_8 = arith.constant 0 : i32
    %13 = vector.broadcast %c0_i32_8 : i32 to vector<8x384xi32>
    %14 = arith.cmpi ne, %12, %13 : vector<8x384xi32>
    %c0_i32_9 = arith.constant 0 : i32
    %15 = vector.broadcast %c0_i32_9 : i32 to vector<8x384xi32>
    %16 = arith.cmpi slt, %12, %15 : vector<8x384xi32>
    %c0_i32_10 = arith.constant 0 : i32
    %17 = arith.cmpi slt, %10, %c0_i32_10 : i32
    %18 = vector.broadcast %17 : i1 to vector<8x384xi1>
    %19 = vector.broadcast %18 : vector<8x384xi1> to vector<8x384xi1>
    %20 = arith.xori %16, %19 : vector<8x384xi1>
    %21 = arith.andi %20, %14 : vector<8x384xi1>
    %22 = vector.broadcast %10 : i32 to vector<8x384xi32>
    %23 = arith.addi %12, %22 : vector<8x384xi32>
    %24 = arith.select %21, %23, %12 : vector<8x384xi1>, vector<8x384xi32>
    %c32_i32 = arith.constant 32 : i32
    %25 = vector.broadcast %c32_i32 : i32 to vector<8x384xi32>
    %26 = arith.cmpi slt, %24, %25 : vector<8x384xi32>
    %c0_11 = arith.constant 0 : index
    %c0_12 = arith.constant 0 : index
    %27 = vector.load %arg4[%c0_11, %c0_12] : memref<1x128xf32, #tpu.memory_space<vmem>>, vector<1x128xf32>
    %28 = vector.shape_cast %27 : vector<1x128xf32> to vector<1x128xf32>
    %29 = vector.broadcast %28 : vector<1x128xf32> to vector<8x128xf32>
    %cst_13 = arith.constant 0.000000e+00 : f32
    %30 = vector.broadcast %cst_13 : f32 to vector<8x128xf32>
    %c0_i32_14 = arith.constant 0 : i32
    %31 = arith.truncf %30 : vector<8x128xf32> to vector<8x128xbf16>
    %c0_15 = arith.constant 0 : index
    %c0_16 = arith.constant 0 : index
    %32 = vector.load %arg3[%c0_15, %c0_16] : memref<128x384xbf16, #tpu.memory_space<vmem>>, vector<128x384xbf16>
    %cst_17 = arith.constant dense<0.000000e+00> : vector<8x384xf32>
    %33 = tpu.matmul %31, %32, %cst_17 {dimension_numbers = #tpu.dot_dimension_numbers<[1], [0], [0], [1], [0, 0, 1, 1], [], []>} : vector<8x128xbf16>, vector<128x384xbf16>, vector<8x384xf32> -> vector<8x384xf32>
    %34 = arith.index_cast %c0_i32_14 : i32 to index
    %c0_18 = arith.constant 0 : index
    %c0_19 = arith.constant 0 : index
    %35 = vector.load %arg11[%34, %c0_18, %c0_19] : memref<8x8x384xf32, #tpu.memory_space<vmem>>, vector<1x8x384xf32>
    %36 = vector.shape_cast %35 : vector<1x8x384xf32> to vector<8x384xf32>
    %c7_i32 = arith.constant 7 : i32
    %37 = arith.subi %c7_i32, %c0_i32_14 : i32
    %38 = arith.index_cast %37 : i32 to index
    %c0_20 = arith.constant 0 : index
    %c0_21 = arith.constant 0 : index
    %39 = vector.load %arg11[%38, %c0_20, %c0_21] : memref<8x8x384xf32, #tpu.memory_space<vmem>>, vector<1x8x384xf32>
    %40 = vector.shape_cast %39 : vector<1x8x384xf32> to vector<8x384xf32>
    %41 = arith.select %26, %36, %40 : vector<8x384xi1>, vector<8x384xf32>
    %42 = vector.extract_strided_slice %41 {offsets = [0, 0], sizes = [8, 128], strides = [1, 1]} : vector<8x384xf32> to vector<8x128xf32>
    %43 = vector.extract_strided_slice %33 {offsets = [0, 0], sizes = [8, 128], strides = [1, 1]} : vector<8x384xf32> to vector<8x128xf32>
    %44 = arith.addf %42, %43 : vector<8x128xf32>
    %45 = arith.negf %44 : vector<8x128xf32>
    %46 = math.exp %45 : vector<8x128xf32>
    %cst_22 = arith.constant 1.000000e+00 : f32
    %47 = vector.broadcast %cst_22 : f32 to vector<8x128xf32>
    %48 = arith.addf %47, %46 : vector<8x128xf32>
    %49 = arith.divf %47, %48 : vector<8x128xf32>
    %50 = vector.extract_strided_slice %41 {offsets = [0, 128], sizes = [8, 128], strides = [1, 1]} : vector<8x384xf32> to vector<8x128xf32>
    %51 = vector.extract_strided_slice %33 {offsets = [0, 128], sizes = [8, 128], strides = [1, 1]} : vector<8x384xf32> to vector<8x128xf32>
    %52 = arith.addf %50, %51 : vector<8x128xf32>
    %53 = arith.negf %52 : vector<8x128xf32>
    %54 = math.exp %53 : vector<8x128xf32>
    %cst_23 = arith.constant 1.000000e+00 : f32
    %55 = vector.broadcast %cst_23 : f32 to vector<8x128xf32>
    %56 = arith.addf %55, %54 : vector<8x128xf32>
    %57 = arith.divf %55, %56 : vector<8x128xf32>
    %58 = vector.extract_strided_slice %41 {offsets = [0, 256], sizes = [8, 128], strides = [1, 1]} : vector<8x384xf32> to vector<8x128xf32>
    %59 = vector.extract_strided_slice %33 {offsets = [0, 256], sizes = [8, 128], strides = [1, 1]} : vector<8x384xf32> to vector<8x128xf32>
    %60 = arith.addf %59, %29 : vector<8x128xf32>
    %61 = arith.mulf %49, %60 : vector<8x128xf32>
    %62 = arith.addf %58, %61 : vector<8x128xf32>
    %63 = math.tanh %62 : vector<8x128xf32>
    %cst_24 = arith.constant 1.000000e+00 : f32
    %64 = vector.broadcast %cst_24 : f32 to vector<8x128xf32>
    %65 = arith.subf %64, %57 : vector<8x128xf32>
    %66 = arith.mulf %65, %63 : vector<8x128xf32>
    %67 = arith.mulf %57, %30 : vector<8x128xf32>
    %68 = arith.addf %66, %67 : vector<8x128xf32>
    %69 = arith.truncf %68 : vector<8x128xf32> to vector<8x128xbf16>
    %70 = arith.index_cast %c0_i32_14 : i32 to index
    %c0_25 = arith.constant 0 : index
    %c0_26 = arith.constant 0 : index
    %71 = vector.load %arg8[%70, %c0_25, %c0_26] : memref<8x8x128xbf16, #tpu.memory_space<vmem>>, vector<1x8x128xbf16>
    %72 = vector.shape_cast %71 : vector<1x8x128xbf16> to vector<8x128xbf16>
    %73 = vector.shape_cast %69 : vector<8x128xbf16> to vector<1x8x128xbf16>
    tpu.vector_store %arg8[%70, %c0_25, %c0_26], %73 {strides = array<i32>} : memref<8x8x128xbf16, #tpu.memory_space<vmem>>, vector<1x8x128xbf16>,
    %74 = arith.truncf %68 : vector<8x128xf32> to vector<8x128xbf16>
    %c7_i32_27 = arith.constant 7 : i32
    %75 = arith.subi %c7_i32_27, %c0_i32_14 : i32
    %76 = arith.index_cast %75 : i32 to index
    %c0_28 = arith.constant 0 : index
    %c0_29 = arith.constant 0 : index
    %77 = vector.load %arg9[%76, %c0_28, %c0_29] : memref<8x8x128xbf16, #tpu.memory_space<vmem>>, vector<1x8x128xbf16>
    %78 = vector.shape_cast %77 : vector<1x8x128xbf16> to vector<8x128xbf16>
    %79 = vector.shape_cast %74 : vector<8x128xbf16> to vector<1x8x128xbf16>
    tpu.vector_store %arg9[%76, %c0_28, %c0_29], %79 {strides = array<i32>} : memref<8x8x128xbf16, #tpu.memory_space<vmem>>, vector<1x8x128xbf16>,
    %c1_i32_30 = arith.constant 1 : i32
    %80 = arith.truncf %68 : vector<8x128xf32> to vector<8x128xbf16>
    %c0_31 = arith.constant 0 : index
    %c0_32 = arith.constant 0 : index
    %81 = vector.load %arg3[%c0_31, %c0_32] : memref<128x384xbf16, #tpu.memory_space<vmem>>, vector<128x384xbf16>
    %cst_33 = arith.constant dense<0.000000e+00> : vector<8x384xf32>
    %82 = tpu.matmul %80, %81, %cst_33 {dimension_numbers = #tpu.dot_dimension_numbers<[1], [0], [0], [1], [0, 0, 1, 1], [], []>} : vector<8x128xbf16>, vector<128x384xbf16>, vector<8x384xf32> -> vector<8x384xf32>
    %83 = arith.index_cast %c1_i32_30 : i32 to index
    %c0_34 = arith.constant 0 : index
    %c0_35 = arith.constant 0 : index
    %84 = vector.load %arg11[%83, %c0_34, %c0_35] : memref<8x8x384xf32, #tpu.memory_space<vmem>>, vector<1x8x384xf32>
    %85 = vector.shape_cast %84 : vector<1x8x384xf32> to vector<8x384xf32>
    %c7_i32_36 = arith.constant 7 : i32
    %86 = arith.subi %c7_i32_36, %c1_i32_30 : i32
    %87 = arith.index_cast %86 : i32 to index
    %c0_37 = arith.constant 0 : index
    %c0_38 = arith.constant 0 : index
    %88 = vector.load %arg11[%87, %c0_37, %c0_38] : memref<8x8x384xf32, #tpu.memory_space<vmem>>, vector<1x8x384xf32>
    %89 = vector.shape_cast %88 : vector<1x8x384xf32> to vector<8x384xf32>
    %90 = arith.select %26, %85, %89 : vector<8x384xi1>, vector<8x384xf32>
    %91 = vector.extract_strided_slice %90 {offsets = [0, 0], sizes = [8, 128], strides = [1, 1]} : vector<8x384xf32> to vector<8x128xf32>
    %92 = vector.extract_strided_slice %82 {offsets = [0, 0], sizes = [8, 128], strides = [1, 1]} : vector<8x384xf32> to vector<8x128xf32>
    %93 = arith.addf %91, %92 : vector<8x128xf32>
    %94 = arith.negf %93 : vector<8x128xf32>
    %95 = math.exp %94 : vector<8x128xf32>
    %cst_39 = arith.constant 1.000000e+00 : f32
    %96 = vector.broadcast %cst_39 : f32 to vector<8x128xf32>
    %97 = arith.addf %96, %95 : vector<8x128xf32>
    %98 = arith.divf %96, %97 : vector<8x128xf32>
    %99 = vector.extract_strided_slice %90 {offsets = [0, 128], sizes = [8, 128], strides = [1, 1]} : vector<8x384xf32> to vector<8x128xf32>
    %100 = vector.extract_strided_slice %82 {offsets = [0, 128], sizes = [8, 128], strides = [1, 1]} : vector<8x384xf32> to vector<8x128xf32>
    %101 = arith.addf %99, %100 : vector<8x128xf32>
    %102 = arith.negf %101 : vector<8x128xf32>
    %103 = math.exp %102 : vector<8x128xf32>
    %cst_40 = arith.constant 1.000000e+00 : f32
    %104 = vector.broadcast %cst_40 : f32 to vector<8x128xf32>
    %105 = arith.addf %104, %103 : vector<8x128xf32>
    %106 = arith.divf %104, %105 : vector<8x128xf32>
    %107 = vector.extract_strided_slice %90 {offsets = [0, 256], sizes = [8, 128], strides = [1, 1]} : vector<8x384xf32> to vector<8x128xf32>
    %108 = vector.extract_strided_slice %82 {offsets = [0, 256], sizes = [8, 128], strides = [1, 1]} : vector<8x384xf32> to vector<8x128xf32>
    %109 = arith.addf %108, %29 : vector<8x128xf32>
    %110 = arith.mulf %98, %109 : vector<8x128xf32>
    %111 = arith.addf %107, %110 : vector<8x128xf32>
    %112 = math.tanh %111 : vector<8x128xf32>
    %cst_41 = arith.constant 1.000000e+00 : f32
    %113 = vector.broadcast %cst_41 : f32 to vector<8x128xf32>
    %114 = arith.subf %113, %106 : vector<8x128xf32>
    %115 = arith.mulf %114, %112 : vector<8x128xf32>
    %116 = arith.mulf %106, %68 : vector<8x128xf32>
    %117 = arith.addf %115, %116 : vector<8x128xf32>
    %118 = arith.truncf %117 : vector<8x128xf32> to vector<8x128xbf16>
    %119 = arith.index_cast %c1_i32_30 : i32 to index
    %c0_42 = arith.constant 0 : index
    %c0_43 = arith.constant 0 : index
    %120 = vector.load %arg8[%119, %c0_42, %c0_43] : memref<8x8x128xbf16, #tpu.memory_space<vmem>>, vector<1x8x128xbf16>
    %121 = vector.shape_cast %120 : vector<1x8x128xbf16> to vector<8x128xbf16>
    %122 = vector.shape_cast %118 : vector<8x128xbf16> to vector<1x8x128xbf16>
    tpu.vector_store %arg8[%119, %c0_42, %c0_43], %122 {strides = array<i32>} : memref<8x8x128xbf16, #tpu.memory_space<vmem>>, vector<1x8x128xbf16>,
    %123 = arith.truncf %117 : vector<8x128xf32> to vector<8x128xbf16>
    %c7_i32_44 = arith.constant 7 : i32
    %124 = arith.subi %c7_i32_44, %c1_i32_30 : i32
    %125 = arith.index_cast %124 : i32 to index
    %c0_45 = arith.constant 0 : index
    %c0_46 = arith.constant 0 : index
    %126 = vector.load %arg9[%125, %c0_45, %c0_46] : memref<8x8x128xbf16, #tpu.memory_space<vmem>>, vector<1x8x128xbf16>
    %127 = vector.shape_cast %126 : vector<1x8x128xbf16> to vector<8x128xbf16>
    %128 = vector.shape_cast %123 : vector<8x128xbf16> to vector<1x8x128xbf16>
    tpu.vector_store %arg9[%125, %c0_45, %c0_46], %128 {strides = array<i32>} : memref<8x8x128xbf16, #tpu.memory_space<vmem>>, vector<1x8x128xbf16>,
    %c2_i32 = arith.constant 2 : i32
    %129 = arith.truncf %117 : vector<8x128xf32> to vector<8x128xbf16>
    %c0_47 = arith.constant 0 : index
    %c0_48 = arith.constant 0 : index
    %130 = vector.load %arg3[%c0_47, %c0_48] : memref<128x384xbf16, #tpu.memory_space<vmem>>, vector<128x384xbf16>
    %cst_49 = arith.constant dense<0.000000e+00> : vector<8x384xf32>
    %131 = tpu.matmul %129, %130, %cst_49 {dimension_numbers = #tpu.dot_dimension_numbers<[1], [0], [0], [1], [0, 0, 1, 1], [], []>} : vector<8x128xbf16>, vector<128x384xbf16>, vector<8x384xf32> -> vector<8x384xf32>
    %132 = arith.index_cast %c2_i32 : i32 to index
    %c0_50 = arith.constant 0 : index
    %c0_51 = arith.constant 0 : index
    %133 = vector.load %arg11[%132, %c0_50, %c0_51] : memref<8x8x384xf32, #tpu.memory_space<vmem>>, vector<1x8x384xf32>
    %134 = vector.shape_cast %133 : vector<1x8x384xf32> to vector<8x384xf32>
    %c7_i32_52 = arith.constant 7 : i32
    %135 = arith.subi %c7_i32_52, %c2_i32 : i32
    %136 = arith.index_cast %135 : i32 to index
    %c0_53 = arith.constant 0 : index
    %c0_54 = arith.constant 0 : index
    %137 = vector.load %arg11[%136, %c0_53, %c0_54] : memref<8x8x384xf32, #tpu.memory_space<vmem>>, vector<1x8x384xf32>
    %138 = vector.shape_cast %137 : vector<1x8x384xf32> to vector<8x384xf32>
    %139 = arith.select %26, %134, %138 : vector<8x384xi1>, vector<8x384xf32>
    %140 = vector.extract_strided_slice %139 {offsets = [0, 0], sizes = [8, 128], strides = [1, 1]} : vector<8x384xf32> to vector<8x128xf32>
    %141 = vector.extract_strided_slice %131 {offsets = [0, 0], sizes = [8, 128], strides = [1, 1]} : vector<8x384xf32> to vector<8x128xf32>
    %142 = arith.addf %140, %141 : vector<8x128xf32>
    %143 = arith.negf %142 : vector<8x128xf32>
    %144 = math.exp %143 : vector<8x128xf32>
    %cst_55 = arith.constant 1.000000e+00 : f32
    %145 = vector.broadcast %cst_55 : f32 to vector<8x128xf32>
    %146 = arith.addf %145, %144 : vector<8x128xf32>
    %147 = arith.divf %145, %146 : vector<8x128xf32>
    %148 = vector.extract_strided_slice %139 {offsets = [0, 128], sizes = [8, 128], strides = [1, 1]} : vector<8x384xf32> to vector<8x128xf32>
    %149 = vector.extract_strided_slice %131 {offsets = [0, 128], sizes = [8, 128], strides = [1, 1]} : vector<8x384xf32> to vector<8x128xf32>
    %150 = arith.addf %148, %149 : vector<8x128xf32>
    %151 = arith.negf %150 : vector<8x128xf32>
    %152 = math.exp %151 : vector<8x128xf32>
    %cst_56 = arith.constant 1.000000e+00 : f32
    %153 = vector.broadcast %cst_56 : f32 to vector<8x128xf32>
    %154 = arith.addf %153, %152 : vector<8x128xf32>
    %155 = arith.divf %153, %154 : vector<8x128xf32>
    %156 = vector.extract_strided_slice %139 {offsets = [0, 256], sizes = [8, 128], strides = [1, 1]} : vector<8x384xf32> to vector<8x128xf32>
    %157 = vector.extract_strided_slice %131 {offsets = [0, 256], sizes = [8, 128], strides = [1, 1]} : vector<8x384xf32> to vector<8x128xf32>
    %158 = arith.addf %157, %29 : vector<8x128xf32>
    %159 = arith.mulf %147, %158 : vector<8x128xf32>
    %160 = arith.addf %156, %159 : vector<8x128xf32>
    %161 = math.tanh %160 : vector<8x128xf32>
    %cst_57 = arith.constant 1.000000e+00 : f32
    %162 = vector.broadcast %cst_57 : f32 to vector<8x128xf32>
    %163 = arith.subf %162, %155 : vector<8x128xf32>
    %164 = arith.mulf %163, %161 : vector<8x128xf32>
    %165 = arith.mulf %155, %117 : vector<8x128xf32>
    %166 = arith.addf %164, %165 : vector<8x128xf32>
    %167 = arith.truncf %166 : vector<8x128xf32> to vector<8x128xbf16>
    %168 = arith.index_cast %c2_i32 : i32 to index
    %c0_58 = arith.constant 0 : index
    %c0_59 = arith.constant 0 : index
    %169 = vector.load %arg8[%168, %c0_58, %c0_59] : memref<8x8x128xbf16, #tpu.memory_space<vmem>>, vector<1x8x128xbf16>
    %170 = vector.shape_cast %169 : vector<1x8x128xbf16> to vector<8x128xbf16>
    %171 = vector.shape_cast %167 : vector<8x128xbf16> to vector<1x8x128xbf16>
    tpu.vector_store %arg8[%168, %c0_58, %c0_59], %171 {strides = array<i32>} : memref<8x8x128xbf16, #tpu.memory_space<vmem>>, vector<1x8x128xbf16>,
    %172 = arith.truncf %166 : vector<8x128xf32> to vector<8x128xbf16>
    %c7_i32_60 = arith.constant 7 : i32
    %173 = arith.subi %c7_i32_60, %c2_i32 : i32
    %174 = arith.index_cast %173 : i32 to index
    %c0_61 = arith.constant 0 : index
    %c0_62 = arith.constant 0 : index
    %175 = vector.load %arg9[%174, %c0_61, %c0_62] : memref<8x8x128xbf16, #tpu.memory_space<vmem>>, vector<1x8x128xbf16>
    %176 = vector.shape_cast %175 : vector<1x8x128xbf16> to vector<8x128xbf16>
    %177 = vector.shape_cast %172 : vector<8x128xbf16> to vector<1x8x128xbf16>
    tpu.vector_store %arg9[%174, %c0_61, %c0_62], %177 {strides = array<i32>} : memref<8x8x128xbf16, #tpu.memory_space<vmem>>, vector<1x8x128xbf16>,
    %c3_i32 = arith.constant 3 : i32
    %178 = arith.truncf %166 : vector<8x128xf32> to vector<8x128xbf16>
    %c0_63 = arith.constant 0 : index
    %c0_64 = arith.constant 0 : index
    %179 = vector.load %arg3[%c0_63, %c0_64] : memref<128x384xbf16, #tpu.memory_space<vmem>>, vector<128x384xbf16>
    %cst_65 = arith.constant dense<0.000000e+00> : vector<8x384xf32>
    %180 = tpu.matmul %178, %179, %cst_65 {dimension_numbers = #tpu.dot_dimension_numbers<[1], [0], [0], [1], [0, 0, 1, 1], [], []>} : vector<8x128xbf16>, vector<128x384xbf16>, vector<8x384xf32> -> vector<8x384xf32>
    %181 = arith.index_cast %c3_i32 : i32 to index
    %c0_66 = arith.constant 0 : index
    %c0_67 = arith.constant 0 : index
    %182 = vector.load %arg11[%181, %c0_66, %c0_67] : memref<8x8x384xf32, #tpu.memory_space<vmem>>, vector<1x8x384xf32>
    %183 = vector.shape_cast %182 : vector<1x8x384xf32> to vector<8x384xf32>
    %c7_i32_68 = arith.constant 7 : i32
    %184 = arith.subi %c7_i32_68, %c3_i32 : i32
    %185 = arith.index_cast %184 : i32 to index
    %c0_69 = arith.constant 0 : index
    %c0_70 = arith.constant 0 : index
    %186 = vector.load %arg11[%185, %c0_69, %c0_70] : memref<8x8x384xf32, #tpu.memory_space<vmem>>, vector<1x8x384xf32>
    %187 = vector.shape_cast %186 : vector<1x8x384xf32> to vector<8x384xf32>
    %188 = arith.select %26, %183, %187 : vector<8x384xi1>, vector<8x384xf32>
    %189 = vector.extract_strided_slice %188 {offsets = [0, 0], sizes = [8, 128], strides = [1, 1]} : vector<8x384xf32> to vector<8x128xf32>
    %190 = vector.extract_strided_slice %180 {offsets = [0, 0], sizes = [8, 128], strides = [1, 1]} : vector<8x384xf32> to vector<8x128xf32>
    %191 = arith.addf %189, %190 : vector<8x128xf32>
    %192 = arith.negf %191 : vector<8x128xf32>
    %193 = math.exp %192 : vector<8x128xf32>
    %cst_71 = arith.constant 1.000000e+00 : f32
    %194 = vector.broadcast %cst_71 : f32 to vector<8x128xf32>
    %195 = arith.addf %194, %193 : vector<8x128xf32>
    %196 = arith.divf %194, %195 : vector<8x128xf32>
    %197 = vector.extract_strided_slice %188 {offsets = [0, 128], sizes = [8, 128], strides = [1, 1]} : vector<8x384xf32> to vector<8x128xf32>
    %198 = vector.extract_strided_slice %180 {offsets = [0, 128], sizes = [8, 128], strides = [1, 1]} : vector<8x384xf32> to vector<8x128xf32>
    %199 = arith.addf %197, %198 : vector<8x128xf32>
    %200 = arith.negf %199 : vector<8x128xf32>
    %201 = math.exp %200 : vector<8x128xf32>
    %cst_72 = arith.constant 1.000000e+00 : f32
    %202 = vector.broadcast %cst_72 : f32 to vector<8x128xf32>
    %203 = arith.addf %202, %201 : vector<8x128xf32>
    %204 = arith.divf %202, %203 : vector<8x128xf32>
    %205 = vector.extract_strided_slice %188 {offsets = [0, 256], sizes = [8, 128], strides = [1, 1]} : vector<8x384xf32> to vector<8x128xf32>
    %206 = vector.extract_strided_slice %180 {offsets = [0, 256], sizes = [8, 128], strides = [1, 1]} : vector<8x384xf32> to vector<8x128xf32>
    %207 = arith.addf %206, %29 : vector<8x128xf32>
    %208 = arith.mulf %196, %207 : vector<8x128xf32>
    %209 = arith.addf %205, %208 : vector<8x128xf32>
    %210 = math.tanh %209 : vector<8x128xf32>
    %cst_73 = arith.constant 1.000000e+00 : f32
    %211 = vector.broadcast %cst_73 : f32 to vector<8x128xf32>
    %212 = arith.subf %211, %204 : vector<8x128xf32>
    %213 = arith.mulf %212, %210 : vector<8x128xf32>
    %214 = arith.mulf %204, %166 : vector<8x128xf32>
    %215 = arith.addf %213, %214 : vector<8x128xf32>
    %216 = arith.truncf %215 : vector<8x128xf32> to vector<8x128xbf16>
    %217 = arith.index_cast %c3_i32 : i32 to index
    %c0_74 = arith.constant 0 : index
    %c0_75 = arith.constant 0 : index
    %218 = vector.load %arg8[%217, %c0_74, %c0_75] : memref<8x8x128xbf16, #tpu.memory_space<vmem>>, vector<1x8x128xbf16>
    %219 = vector.shape_cast %218 : vector<1x8x128xbf16> to vector<8x128xbf16>
    %220 = vector.shape_cast %216 : vector<8x128xbf16> to vector<1x8x128xbf16>
    tpu.vector_store %arg8[%217, %c0_74, %c0_75], %220 {strides = array<i32>} : memref<8x8x128xbf16, #tpu.memory_space<vmem>>, vector<1x8x128xbf16>,
    %221 = arith.truncf %215 : vector<8x128xf32> to vector<8x128xbf16>
    %c7_i32_76 = arith.constant 7 : i32
    %222 = arith.subi %c7_i32_76, %c3_i32 : i32
    %223 = arith.index_cast %222 : i32 to index
    %c0_77 = arith.constant 0 : index
    %c0_78 = arith.constant 0 : index
    %224 = vector.load %arg9[%223, %c0_77, %c0_78] : memref<8x8x128xbf16, #tpu.memory_space<vmem>>, vector<1x8x128xbf16>
    %225 = vector.shape_cast %224 : vector<1x8x128xbf16> to vector<8x128xbf16>
    %226 = vector.shape_cast %221 : vector<8x128xbf16> to vector<1x8x128xbf16>
    tpu.vector_store %arg9[%223, %c0_77, %c0_78], %226 {strides = array<i32>} : memref<8x8x128xbf16, #tpu.memory_space<vmem>>, vector<1x8x128xbf16>,
    %c4_i32 = arith.constant 4 : i32
    %227 = arith.truncf %215 : vector<8x128xf32> to vector<8x128xbf16>
    %c0_79 = arith.constant 0 : index
    %c0_80 = arith.constant 0 : index
    %228 = vector.load %arg3[%c0_79, %c0_80] : memref<128x384xbf16, #tpu.memory_space<vmem>>, vector<128x384xbf16>
    %cst_81 = arith.constant dense<0.000000e+00> : vector<8x384xf32>
    %229 = tpu.matmul %227, %228, %cst_81 {dimension_numbers = #tpu.dot_dimension_numbers<[1], [0], [0], [1], [0, 0, 1, 1], [], []>} : vector<8x128xbf16>, vector<128x384xbf16>, vector<8x384xf32> -> vector<8x384xf32>
    %230 = arith.index_cast %c4_i32 : i32 to index
    %c0_82 = arith.constant 0 : index
    %c0_83 = arith.constant 0 : index
    %231 = vector.load %arg11[%230, %c0_82, %c0_83] : memref<8x8x384xf32, #tpu.memory_space<vmem>>, vector<1x8x384xf32>
    %232 = vector.shape_cast %231 : vector<1x8x384xf32> to vector<8x384xf32>
    %c7_i32_84 = arith.constant 7 : i32
    %233 = arith.subi %c7_i32_84, %c4_i32 : i32
    %234 = arith.index_cast %233 : i32 to index
    %c0_85 = arith.constant 0 : index
    %c0_86 = arith.constant 0 : index
    %235 = vector.load %arg11[%234, %c0_85, %c0_86] : memref<8x8x384xf32, #tpu.memory_space<vmem>>, vector<1x8x384xf32>
    %236 = vector.shape_cast %235 : vector<1x8x384xf32> to vector<8x384xf32>
    %237 = arith.select %26, %232, %236 : vector<8x384xi1>, vector<8x384xf32>
    %238 = vector.extract_strided_slice %237 {offsets = [0, 0], sizes = [8, 128], strides = [1, 1]} : vector<8x384xf32> to vector<8x128xf32>
    %239 = vector.extract_strided_slice %229 {offsets = [0, 0], sizes = [8, 128], strides = [1, 1]} : vector<8x384xf32> to vector<8x128xf32>
    %240 = arith.addf %238, %239 : vector<8x128xf32>
    %241 = arith.negf %240 : vector<8x128xf32>
    %242 = math.exp %241 : vector<8x128xf32>
    %cst_87 = arith.constant 1.000000e+00 : f32
    %243 = vector.broadcast %cst_87 : f32 to vector<8x128xf32>
    %244 = arith.addf %243, %242 : vector<8x128xf32>
    %245 = arith.divf %243, %244 : vector<8x128xf32>
    %246 = vector.extract_strided_slice %237 {offsets = [0, 128], sizes = [8, 128], strides = [1, 1]} : vector<8x384xf32> to vector<8x128xf32>
    %247 = vector.extract_strided_slice %229 {offsets = [0, 128], sizes = [8, 128], strides = [1, 1]} : vector<8x384xf32> to vector<8x128xf32>
    %248 = arith.addf %246, %247 : vector<8x128xf32>
    %249 = arith.negf %248 : vector<8x128xf32>
    %250 = math.exp %249 : vector<8x128xf32>
    %cst_88 = arith.constant 1.000000e+00 : f32
    %251 = vector.broadcast %cst_88 : f32 to vector<8x128xf32>
    %252 = arith.addf %251, %250 : vector<8x128xf32>
    %253 = arith.divf %251, %252 : vector<8x128xf32>
    %254 = vector.extract_strided_slice %237 {offsets = [0, 256], sizes = [8, 128], strides = [1, 1]} : vector<8x384xf32> to vector<8x128xf32>
    %255 = vector.extract_strided_slice %229 {offsets = [0, 256], sizes = [8, 128], strides = [1, 1]} : vector<8x384xf32> to vector<8x128xf32>
    %256 = arith.addf %255, %29 : vector<8x128xf32>
    %257 = arith.mulf %245, %256 : vector<8x128xf32>
    %258 = arith.addf %254, %257 : vector<8x128xf32>
    %259 = math.tanh %258 : vector<8x128xf32>
    %cst_89 = arith.constant 1.000000e+00 : f32
    %260 = vector.broadcast %cst_89 : f32 to vector<8x128xf32>
    %261 = arith.subf %260, %253 : vector<8x128xf32>
    %262 = arith.mulf %261, %259 : vector<8x128xf32>
    %263 = arith.mulf %253, %215 : vector<8x128xf32>
    %264 = arith.addf %262, %263 : vector<8x128xf32>
    %265 = arith.truncf %264 : vector<8x128xf32> to vector<8x128xbf16>
    %266 = arith.index_cast %c4_i32 : i32 to index
    %c0_90 = arith.constant 0 : index
    %c0_91 = arith.constant 0 : index
    %267 = vector.load %arg8[%266, %c0_90, %c0_91] : memref<8x8x128xbf16, #tpu.memory_space<vmem>>, vector<1x8x128xbf16>
    %268 = vector.shape_cast %267 : vector<1x8x128xbf16> to vector<8x128xbf16>
    %269 = vector.shape_cast %265 : vector<8x128xbf16> to vector<1x8x128xbf16>
    tpu.vector_store %arg8[%266, %c0_90, %c0_91], %269 {strides = array<i32>} : memref<8x8x128xbf16, #tpu.memory_space<vmem>>, vector<1x8x128xbf16>,
    %270 = arith.truncf %264 : vector<8x128xf32> to vector<8x128xbf16>
    %c7_i32_92 = arith.constant 7 : i32
    %271 = arith.subi %c7_i32_92, %c4_i32 : i32
    %272 = arith.index_cast %271 : i32 to index
    %c0_93 = arith.constant 0 : index
    %c0_94 = arith.constant 0 : index
    %273 = vector.load %arg9[%272, %c0_93, %c0_94] : memref<8x8x128xbf16, #tpu.memory_space<vmem>>, vector<1x8x128xbf16>
    %274 = vector.shape_cast %273 : vector<1x8x128xbf16> to vector<8x128xbf16>
    %275 = vector.shape_cast %270 : vector<8x128xbf16> to vector<1x8x128xbf16>
    tpu.vector_store %arg9[%272, %c0_93, %c0_94], %275 {strides = array<i32>} : memref<8x8x128xbf16, #tpu.memory_space<vmem>>, vector<1x8x128xbf16>,
    %c5_i32 = arith.constant 5 : i32
    %276 = arith.truncf %264 : vector<8x128xf32> to vector<8x128xbf16>
    %c0_95 = arith.constant 0 : index
    %c0_96 = arith.constant 0 : index
    %277 = vector.load %arg3[%c0_95, %c0_96] : memref<128x384xbf16, #tpu.memory_space<vmem>>, vector<128x384xbf16>
    %cst_97 = arith.constant dense<0.000000e+00> : vector<8x384xf32>
    %278 = tpu.matmul %276, %277, %cst_97 {dimension_numbers = #tpu.dot_dimension_numbers<[1], [0], [0], [1], [0, 0, 1, 1], [], []>} : vector<8x128xbf16>, vector<128x384xbf16>, vector<8x384xf32> -> vector<8x384xf32>
    %279 = arith.index_cast %c5_i32 : i32 to index
    %c0_98 = arith.constant 0 : index
    %c0_99 = arith.constant 0 : index
    %280 = vector.load %arg11[%279, %c0_98, %c0_99] : memref<8x8x384xf32, #tpu.memory_space<vmem>>, vector<1x8x384xf32>
    %281 = vector.shape_cast %280 : vector<1x8x384xf32> to vector<8x384xf32>
    %c7_i32_100 = arith.constant 7 : i32
    %282 = arith.subi %c7_i32_100, %c5_i32 : i32
    %283 = arith.index_cast %282 : i32 to index
    %c0_101 = arith.constant 0 : index
    %c0_102 = arith.constant 0 : index
    %284 = vector.load %arg11[%283, %c0_101, %c0_102] : memref<8x8x384xf32, #tpu.memory_space<vmem>>, vector<1x8x384xf32>
    %285 = vector.shape_cast %284 : vector<1x8x384xf32> to vector<8x384xf32>
    %286 = arith.select %26, %281, %285 : vector<8x384xi1>, vector<8x384xf32>
    %287 = vector.extract_strided_slice %286 {offsets = [0, 0], sizes = [8, 128], strides = [1, 1]} : vector<8x384xf32> to vector<8x128xf32>
    %288 = vector.extract_strided_slice %278 {offsets = [0, 0], sizes = [8, 128], strides = [1, 1]} : vector<8x384xf32> to vector<8x128xf32>
    %289 = arith.addf %287, %288 : vector<8x128xf32>
    %290 = arith.negf %289 : vector<8x128xf32>
    %291 = math.exp %290 : vector<8x128xf32>
    %cst_103 = arith.constant 1.000000e+00 : f32
    %292 = vector.broadcast %cst_103 : f32 to vector<8x128xf32>
    %293 = arith.addf %292, %291 : vector<8x128xf32>
    %294 = arith.divf %292, %293 : vector<8x128xf32>
    %295 = vector.extract_strided_slice %286 {offsets = [0, 128], sizes = [8, 128], strides = [1, 1]} : vector<8x384xf32> to vector<8x128xf32>
    %296 = vector.extract_strided_slice %278 {offsets = [0, 128], sizes = [8, 128], strides = [1, 1]} : vector<8x384xf32> to vector<8x128xf32>
    %297 = arith.addf %295, %296 : vector<8x128xf32>
    %298 = arith.negf %297 : vector<8x128xf32>
    %299 = math.exp %298 : vector<8x128xf32>
    %cst_104 = arith.constant 1.000000e+00 : f32
    %300 = vector.broadcast %cst_104 : f32 to vector<8x128xf32>
    %301 = arith.addf %300, %299 : vector<8x128xf32>
    %302 = arith.divf %300, %301 : vector<8x128xf32>
    %303 = vector.extract_strided_slice %286 {offsets = [0, 256], sizes = [8, 128], strides = [1, 1]} : vector<8x384xf32> to vector<8x128xf32>
    %304 = vector.extract_strided_slice %278 {offsets = [0, 256], sizes = [8, 128], strides = [1, 1]} : vector<8x384xf32> to vector<8x128xf32>
    %305 = arith.addf %304, %29 : vector<8x128xf32>
    %306 = arith.mulf %294, %305 : vector<8x128xf32>
    %307 = arith.addf %303, %306 : vector<8x128xf32>
    %308 = math.tanh %307 : vector<8x128xf32>
    %cst_105 = arith.constant 1.000000e+00 : f32
    %309 = vector.broadcast %cst_105 : f32 to vector<8x128xf32>
    %310 = arith.subf %309, %302 : vector<8x128xf32>
    %311 = arith.mulf %310, %308 : vector<8x128xf32>
    %312 = arith.mulf %302, %264 : vector<8x128xf32>
    %313 = arith.addf %311, %312 : vector<8x128xf32>
    %314 = arith.truncf %313 : vector<8x128xf32> to vector<8x128xbf16>
    %315 = arith.index_cast %c5_i32 : i32 to index
    %c0_106 = arith.constant 0 : index
    %c0_107 = arith.constant 0 : index
    %316 = vector.load %arg8[%315, %c0_106, %c0_107] : memref<8x8x128xbf16, #tpu.memory_space<vmem>>, vector<1x8x128xbf16>
    %317 = vector.shape_cast %316 : vector<1x8x128xbf16> to vector<8x128xbf16>
    %318 = vector.shape_cast %314 : vector<8x128xbf16> to vector<1x8x128xbf16>
    tpu.vector_store %arg8[%315, %c0_106, %c0_107], %318 {strides = array<i32>} : memref<8x8x128xbf16, #tpu.memory_space<vmem>>, vector<1x8x128xbf16>,
    %319 = arith.truncf %313 : vector<8x128xf32> to vector<8x128xbf16>
    %c7_i32_108 = arith.constant 7 : i32
    %320 = arith.subi %c7_i32_108, %c5_i32 : i32
    %321 = arith.index_cast %320 : i32 to index
    %c0_109 = arith.constant 0 : index
    %c0_110 = arith.constant 0 : index
    %322 = vector.load %arg9[%321, %c0_109, %c0_110] : memref<8x8x128xbf16, #tpu.memory_space<vmem>>, vector<1x8x128xbf16>
    %323 = vector.shape_cast %322 : vector<1x8x128xbf16> to vector<8x128xbf16>
    %324 = vector.shape_cast %319 : vector<8x128xbf16> to vector<1x8x128xbf16>
    tpu.vector_store %arg9[%321, %c0_109, %c0_110], %324 {strides = array<i32>} : memref<8x8x128xbf16, #tpu.memory_space<vmem>>, vector<1x8x128xbf16>,
    %c6_i32 = arith.constant 6 : i32
    %325 = arith.truncf %313 : vector<8x128xf32> to vector<8x128xbf16>
    %c0_111 = arith.constant 0 : index
    %c0_112 = arith.constant 0 : index
    %326 = vector.load %arg3[%c0_111, %c0_112] : memref<128x384xbf16, #tpu.memory_space<vmem>>, vector<128x384xbf16>
    %cst_113 = arith.constant dense<0.000000e+00> : vector<8x384xf32>
    %327 = tpu.matmul %325, %326, %cst_113 {dimension_numbers = #tpu.dot_dimension_numbers<[1], [0], [0], [1], [0, 0, 1, 1], [], []>} : vector<8x128xbf16>, vector<128x384xbf16>, vector<8x384xf32> -> vector<8x384xf32>
    %328 = arith.index_cast %c6_i32 : i32 to index
    %c0_114 = arith.constant 0 : index
    %c0_115 = arith.constant 0 : index
    %329 = vector.load %arg11[%328, %c0_114, %c0_115] : memref<8x8x384xf32, #tpu.memory_space<vmem>>, vector<1x8x384xf32>
    %330 = vector.shape_cast %329 : vector<1x8x384xf32> to vector<8x384xf32>
    %c7_i32_116 = arith.constant 7 : i32
    %331 = arith.subi %c7_i32_116, %c6_i32 : i32
    %332 = arith.index_cast %331 : i32 to index
    %c0_117 = arith.constant 0 : index
    %c0_118 = arith.constant 0 : index
    %333 = vector.load %arg11[%332, %c0_117, %c0_118] : memref<8x8x384xf32, #tpu.memory_space<vmem>>, vector<1x8x384xf32>
    %334 = vector.shape_cast %333 : vector<1x8x384xf32> to vector<8x384xf32>
    %335 = arith.select %26, %330, %334 : vector<8x384xi1>, vector<8x384xf32>
    %336 = vector.extract_strided_slice %335 {offsets = [0, 0], sizes = [8, 128], strides = [1, 1]} : vector<8x384xf32> to vector<8x128xf32>
    %337 = vector.extract_strided_slice %327 {offsets = [0, 0], sizes = [8, 128], strides = [1, 1]} : vector<8x384xf32> to vector<8x128xf32>
    %338 = arith.addf %336, %337 : vector<8x128xf32>
    %339 = arith.negf %338 : vector<8x128xf32>
    %340 = math.exp %339 : vector<8x128xf32>
    %cst_119 = arith.constant 1.000000e+00 : f32
    %341 = vector.broadcast %cst_119 : f32 to vector<8x128xf32>
    %342 = arith.addf %341, %340 : vector<8x128xf32>
    %343 = arith.divf %341, %342 : vector<8x128xf32>
    %344 = vector.extract_strided_slice %335 {offsets = [0, 128], sizes = [8, 128], strides = [1, 1]} : vector<8x384xf32> to vector<8x128xf32>
    %345 = vector.extract_strided_slice %327 {offsets = [0, 128], sizes = [8, 128], strides = [1, 1]} : vector<8x384xf32> to vector<8x128xf32>
    %346 = arith.addf %344, %345 : vector<8x128xf32>
    %347 = arith.negf %346 : vector<8x128xf32>
    %348 = math.exp %347 : vector<8x128xf32>
    %cst_120 = arith.constant 1.000000e+00 : f32
    %349 = vector.broadcast %cst_120 : f32 to vector<8x128xf32>
    %350 = arith.addf %349, %348 : vector<8x128xf32>
    %351 = arith.divf %349, %350 : vector<8x128xf32>
    %352 = vector.extract_strided_slice %335 {offsets = [0, 256], sizes = [8, 128], strides = [1, 1]} : vector<8x384xf32> to vector<8x128xf32>
    %353 = vector.extract_strided_slice %327 {offsets = [0, 256], sizes = [8, 128], strides = [1, 1]} : vector<8x384xf32> to vector<8x128xf32>
    %354 = arith.addf %353, %29 : vector<8x128xf32>
    %355 = arith.mulf %343, %354 : vector<8x128xf32>
    %356 = arith.addf %352, %355 : vector<8x128xf32>
    %357 = math.tanh %356 : vector<8x128xf32>
    %cst_121 = arith.constant 1.000000e+00 : f32
    %358 = vector.broadcast %cst_121 : f32 to vector<8x128xf32>
    %359 = arith.subf %358, %351 : vector<8x128xf32>
    %360 = arith.mulf %359, %357 : vector<8x128xf32>
    %361 = arith.mulf %351, %313 : vector<8x128xf32>
    %362 = arith.addf %360, %361 : vector<8x128xf32>
    %363 = arith.truncf %362 : vector<8x128xf32> to vector<8x128xbf16>
    %364 = arith.index_cast %c6_i32 : i32 to index
    %c0_122 = arith.constant 0 : index
    %c0_123 = arith.constant 0 : index
    %365 = vector.load %arg8[%364, %c0_122, %c0_123] : memref<8x8x128xbf16, #tpu.memory_space<vmem>>, vector<1x8x128xbf16>
    %366 = vector.shape_cast %365 : vector<1x8x128xbf16> to vector<8x128xbf16>
    %367 = vector.shape_cast %363 : vector<8x128xbf16> to vector<1x8x128xbf16>
    tpu.vector_store %arg8[%364, %c0_122, %c0_123], %367 {strides = array<i32>} : memref<8x8x128xbf16, #tpu.memory_space<vmem>>, vector<1x8x128xbf16>,
    %368 = arith.truncf %362 : vector<8x128xf32> to vector<8x128xbf16>
    %c7_i32_124 = arith.constant 7 : i32
    %369 = arith.subi %c7_i32_124, %c6_i32 : i32
    %370 = arith.index_cast %369 : i32 to index
    %c0_125 = arith.constant 0 : index
    %c0_126 = arith.constant 0 : index
    %371 = vector.load %arg9[%370, %c0_125, %c0_126] : memref<8x8x128xbf16, #tpu.memory_space<vmem>>, vector<1x8x128xbf16>
    %372 = vector.shape_cast %371 : vector<1x8x128xbf16> to vector<8x128xbf16>
    %373 = vector.shape_cast %368 : vector<8x128xbf16> to vector<1x8x128xbf16>
    tpu.vector_store %arg9[%370, %c0_125, %c0_126], %373 {strides = array<i32>} : memref<8x8x128xbf16, #tpu.memory_space<vmem>>, vector<1x8x128xbf16>,
    %c7_i32_127 = arith.constant 7 : i32
    %374 = arith.truncf %362 : vector<8x128xf32> to vector<8x128xbf16>
    %c0_128 = arith.constant 0 : index
    %c0_129 = arith.constant 0 : index
    %375 = vector.load %arg3[%c0_128, %c0_129] : memref<128x384xbf16, #tpu.memory_space<vmem>>, vector<128x384xbf16>
    %cst_130 = arith.constant dense<0.000000e+00> : vector<8x384xf32>
    %376 = tpu.matmul %374, %375, %cst_130 {dimension_numbers = #tpu.dot_dimension_numbers<[1], [0], [0], [1], [0, 0, 1, 1], [], []>} : vector<8x128xbf16>, vector<128x384xbf16>, vector<8x384xf32> -> vector<8x384xf32>
    %377 = arith.index_cast %c7_i32_127 : i32 to index
    %c0_131 = arith.constant 0 : index
    %c0_132 = arith.constant 0 : index
    %378 = vector.load %arg11[%377, %c0_131, %c0_132] : memref<8x8x384xf32, #tpu.memory_space<vmem>>, vector<1x8x384xf32>
    %379 = vector.shape_cast %378 : vector<1x8x384xf32> to vector<8x384xf32>
    %c7_i32_133 = arith.constant 7 : i32
    %380 = arith.subi %c7_i32_133, %c7_i32_127 : i32
    %381 = arith.index_cast %380 : i32 to index
    %c0_134 = arith.constant 0 : index
    %c0_135 = arith.constant 0 : index
    %382 = vector.load %arg11[%381, %c0_134, %c0_135] : memref<8x8x384xf32, #tpu.memory_space<vmem>>, vector<1x8x384xf32>
    %383 = vector.shape_cast %382 : vector<1x8x384xf32> to vector<8x384xf32>
    %384 = arith.select %26, %379, %383 : vector<8x384xi1>, vector<8x384xf32>
    %385 = vector.extract_strided_slice %384 {offsets = [0, 0], sizes = [8, 128], strides = [1, 1]} : vector<8x384xf32> to vector<8x128xf32>
    %386 = vector.extract_strided_slice %376 {offsets = [0, 0], sizes = [8, 128], strides = [1, 1]} : vector<8x384xf32> to vector<8x128xf32>
    %387 = arith.addf %385, %386 : vector<8x128xf32>
    %388 = arith.negf %387 : vector<8x128xf32>
    %389 = math.exp %388 : vector<8x128xf32>
    %cst_136 = arith.constant 1.000000e+00 : f32
    %390 = vector.broadcast %cst_136 : f32 to vector<8x128xf32>
    %391 = arith.addf %390, %389 : vector<8x128xf32>
    %392 = arith.divf %390, %391 : vector<8x128xf32>
    %393 = vector.extract_strided_slice %384 {offsets = [0, 128], sizes = [8, 128], strides = [1, 1]} : vector<8x384xf32> to vector<8x128xf32>
    %394 = vector.extract_strided_slice %376 {offsets = [0, 128], sizes = [8, 128], strides = [1, 1]} : vector<8x384xf32> to vector<8x128xf32>
    %395 = arith.addf %393, %394 : vector<8x128xf32>
    %396 = arith.negf %395 : vector<8x128xf32>
    %397 = math.exp %396 : vector<8x128xf32>
    %cst_137 = arith.constant 1.000000e+00 : f32
    %398 = vector.broadcast %cst_137 : f32 to vector<8x128xf32>
    %399 = arith.addf %398, %397 : vector<8x128xf32>
    %400 = arith.divf %398, %399 : vector<8x128xf32>
    %401 = vector.extract_strided_slice %384 {offsets = [0, 256], sizes = [8, 128], strides = [1, 1]} : vector<8x384xf32> to vector<8x128xf32>
    %402 = vector.extract_strided_slice %376 {offsets = [0, 256], sizes = [8, 128], strides = [1, 1]} : vector<8x384xf32> to vector<8x128xf32>
    %403 = arith.addf %402, %29 : vector<8x128xf32>
    %404 = arith.mulf %392, %403 : vector<8x128xf32>
    %405 = arith.addf %401, %404 : vector<8x128xf32>
    %406 = math.tanh %405 : vector<8x128xf32>
    %cst_138 = arith.constant 1.000000e+00 : f32
    %407 = vector.broadcast %cst_138 : f32 to vector<8x128xf32>
    %408 = arith.subf %407, %400 : vector<8x128xf32>
    %409 = arith.mulf %408, %406 : vector<8x128xf32>
    %410 = arith.mulf %400, %362 : vector<8x128xf32>
    %411 = arith.addf %409, %410 : vector<8x128xf32>
    %412 = arith.truncf %411 : vector<8x128xf32> to vector<8x128xbf16>
    %413 = arith.index_cast %c7_i32_127 : i32 to index
    %c0_139 = arith.constant 0 : index
    %c0_140 = arith.constant 0 : index
    %414 = vector.load %arg8[%413, %c0_139, %c0_140] : memref<8x8x128xbf16, #tpu.memory_space<vmem>>, vector<1x8x128xbf16>
    %415 = vector.shape_cast %414 : vector<1x8x128xbf16> to vector<8x128xbf16>
    %416 = vector.shape_cast %412 : vector<8x128xbf16> to vector<1x8x128xbf16>
    tpu.vector_store %arg8[%413, %c0_139, %c0_140], %416 {strides = array<i32>} : memref<8x8x128xbf16, #tpu.memory_space<vmem>>, vector<1x8x128xbf16>,
    %417 = arith.truncf %411 : vector<8x128xf32> to vector<8x128xbf16>
    %c7_i32_141 = arith.constant 7 : i32
    %418 = arith.subi %c7_i32_141, %c7_i32_127 : i32
    %419 = arith.index_cast %418 : i32 to index
    %c0_142 = arith.constant 0 : index
    %c0_143 = arith.constant 0 : index
    %420 = vector.load %arg9[%419, %c0_142, %c0_143] : memref<8x8x128xbf16, #tpu.memory_space<vmem>>, vector<1x8x128xbf16>
    %421 = vector.shape_cast %420 : vector<1x8x128xbf16> to vector<8x128xbf16>
    %422 = vector.shape_cast %417 : vector<8x128xbf16> to vector<1x8x128xbf16>
    tpu.vector_store %arg9[%419, %c0_142, %c0_143], %422 {strides = array<i32>} : memref<8x8x128xbf16, #tpu.memory_space<vmem>>, vector<1x8x128xbf16>,
    %c8_i32 = arith.constant 8 : i32
    %c0_144 = arith.constant 0 : index
    %c0_145 = arith.constant 0 : index
    %c0_146 = arith.constant 0 : index
    %423 = vector.load %arg8[%c0_144, %c0_145, %c0_146] : memref<8x8x128xbf16, #tpu.memory_space<vmem>>, vector<8x8x128xbf16>
    %424 = vector.shape_cast %423 : vector<8x8x128xbf16> to vector<64x128xbf16>
    %c0_147 = arith.constant 0 : index
    %c0_148 = arith.constant 0 : index
    %c0_149 = arith.constant 0 : index
    %425 = vector.load %arg9[%c0_147, %c0_148, %c0_149] : memref<8x8x128xbf16, #tpu.memory_space<vmem>>, vector<8x8x128xbf16>
    %426 = vector.shape_cast %425 : vector<8x8x128xbf16> to vector<64x128xbf16>
    %c0_150 = arith.constant 0 : index
    %c0_151 = arith.constant 0 : index
    %427 = vector.load %arg5[%c0_150, %c0_151] : memref<128x128xbf16, #tpu.memory_space<vmem>>, vector<128x128xbf16>
    %cst_152 = arith.constant dense<0.000000e+00> : vector<64x128xf32>
    %428 = tpu.matmul %424, %427, %cst_152 {dimension_numbers = #tpu.dot_dimension_numbers<[1], [0], [0], [1], [0, 0, 1, 1], [], []>} : vector<64x128xbf16>, vector<128x128xbf16>, vector<64x128xf32> -> vector<64x128xf32>
    %c0_153 = arith.constant 0 : index
    %c0_154 = arith.constant 0 : index
    %429 = vector.load %arg6[%c0_153, %c0_154] : memref<128x128xbf16, #tpu.memory_space<vmem>>, vector<128x128xbf16>
    %cst_155 = arith.constant dense<0.000000e+00> : vector<64x128xf32>
    %430 = tpu.matmul %426, %429, %cst_155 {dimension_numbers = #tpu.dot_dimension_numbers<[1], [0], [0], [1], [0, 0, 1, 1], [], []>} : vector<64x128xbf16>, vector<128x128xbf16>, vector<64x128xf32> -> vector<64x128xf32>
    %431 = arith.addf %428, %430 : vector<64x128xf32>
    %c0_156 = arith.constant 0 : index
    %c0_157 = arith.constant 0 : index
    %432 = vector.load %arg7[%c0_156, %c0_157] : memref<1x128xf32, #tpu.memory_space<vmem>>, vector<1x128xf32>
    %433 = vector.broadcast %432 : vector<1x128xf32> to vector<64x128xf32>
    %434 = arith.addf %431, %433 : vector<64x128xf32>
    %435 = vector.shape_cast %434 : vector<64x128xf32> to vector<8x8x128xf32>
    %c0_158 = arith.constant 0 : index
    %c0_159 = arith.constant 0 : index
    %c0_160 = arith.constant 0 : index
    %436 = vector.load %arg10[%c0_158, %c0_159, %c0_160] : memref<8x8x128xf32, #tpu.memory_space<vmem>>, vector<8x8x128xf32>
    tpu.vector_store %arg10[%c0_158, %c0_159, %c0_160], %435 {strides = array<i32>} : memref<8x8x128xf32, #tpu.memory_space<vmem>>, vector<8x8x128xf32>,
    return
  }
}

</mosaic_0001>

<llo_original>
// kernel: _encode_device.1
$region0: #{_encode_device.1}
  #allocation0 [shape = 'u32[]', space=smem, size = 0x4, offset = 0x4, fixed_abs, tag = 'smem constant byte address 0x4 - core index']
  #allocation1 [shape = 'u32[144,128]{1,0:T(1,128)}', space=vmem, size = 0x12000, scoped, tag = 'internal scratch']
  #allocation2 [shape = 'f32[8,8,384]{2,1,0:T(8,128)}', space=vmem, size = 0x18000, scoped, tag = 'scratch operand']
  %s0 = inlined_call_operand.vmem [shape: bf16[64,256], index: 0, kind: input, shape index: {}]
  %s1 = inlined_call_operand.vmem [shape: bf16[256,384], index: 1, kind: input, shape index: {}]
  %s2 = inlined_call_operand.hbm [shape: f32[1,384], index: 2, kind: input, shape index: {}]
  %s3 = inlined_call_operand.vmem [shape: bf16[128,384], index: 3, kind: input, shape index: {}]
  %s4 = inlined_call_operand.vmem [shape: f32[1,128], index: 4, kind: input, shape index: {}]
  %s5 = inlined_call_operand.vmem [shape: bf16[128,128], index: 5, kind: input, shape index: {}]
  %s6 = inlined_call_operand.hbm [shape: bf16[128,128], index: 6, kind: input, shape index: {}]
  %s7 = inlined_call_operand.vmem [shape: f32[1,128], index: 7, kind: input, shape index: {}]
  %s8 = inlined_call_operand.vmem [shape: bf16[8,8,128], index: 8, kind: output, shape index: {0}]
  %s9 = inlined_call_operand.vmem [shape: bf16[8,8,128], index: 9, kind: output, shape index: {1}]
  %s10 = inlined_call_operand.vmem [shape: f32[8,8,128], index: 10, kind: output, shape index: {2}]
  %11 = xla_tuple %s8, %s9, %s10
  %s12 = sld [smem:[#allocation0]]
  $region66: #{_encode_device.1} parent=0
    _
  %s14 = ssub.s32 1, %s12
  %s15 = scalar_select 0, %s14, %s12
  $region1: #{_encode_device.1} parent=0
    #allocation3 [shape = 'u8[1536]{0}', space=vmem, size = 0x800, scoped, tag = 'input window, operand 2, single buffered']
    #allocation4 [shape = 's32[1]{0}', space=sflag, size = 0x4, scoped, tag = 'scoped memory for _encode_device.1']
    #allocation5 [shape = 'u8[32768]{0}', space=vmem, size = 0x8000, scoped, tag = 'input window, operand 6, single buffered']
    #allocation6 [shape = 's32[1]{0}', space=sflag, size = 0x4, scoped, tag = 'scoped memory for _encode_device.1']
    %16 = vsyncpa [#allocation4], 0
    %17 = vsyncpa [#allocation6], 0
    // Predicated region
    $region2: #{_encode_device.1} parent=1 // pred_check
      _
    $region3: #{_encode_device.1} parent=1 // pred_check_branch
      %19 = sbr.rel (0) target = $region5
    $region4: #{_encode_device.1} parent=1 // pred_region
      _
    $region5: #{_encode_device.1} parent=1 // pred_fallthru
      _
    // Predicated region
    $region6: #{_encode_device.1} parent=1 // pred_check
      _
    $region7: #{_encode_device.1} parent=1 // pred_check_branch
      %21 = sbr.rel (0) target = $region9
    $region8: #{_encode_device.1} parent=1 // pred_region
      _
    $region9: #{_encode_device.1} parent=1 // pred_fallthru
      _
    // Predicated region
    $region10: #{_encode_device.1} parent=1 // pred_check
      _
    $region11: #{_encode_device.1} parent=1 // pred_check_branch
      %23 = sbr.rel (0) target = $region13
    $region12: #{_encode_device.1} parent=1 // pred_region
      %s25 = ssub.s32 48, 48
      %26 = vsyncadd [#allocation4], %s25
      %s28 = sshll.u32 [#allocation3], 4
      %s29 = int_to_ptr.vmem [resolvable:$true] %s28
      %31 = dma.hbm_to_vmem [thread:$0]  %s2, 48, %s29, [#allocation4]
    $region13: #{_encode_device.1} parent=1 // pred_fallthru
      _
    // Predicated region
    $region14: #{_encode_device.1} parent=1 // pred_check
      _
    $region15: #{_encode_device.1} parent=1 // pred_check_branch
      %33 = sbr.rel (0) target = $region17
    $region16: #{_encode_device.1} parent=1 // pred_region
      _
    $region17: #{_encode_device.1} parent=1 // pred_fallthru
      _
    // Predicated region
    $region18: #{_encode_device.1} parent=1 // pred_check
      _
    $region19: #{_encode_device.1} parent=1 // pred_check_branch
      %35 = sbr.rel (0) target = $region21
    $region20: #{_encode_device.1} parent=1 // pred_region
      _
    $region21: #{_encode_device.1} parent=1 // pred_fallthru
      _
    // Predicated region
    $region22: #{_encode_device.1} parent=1 // pred_check
      _
    $region23: #{_encode_device.1} parent=1 // pred_check_branch
      %37 = sbr.rel (0) target = $region25
    $region24: #{_encode_device.1} parent=1 // pred_region
      _
    $region25: #{_encode_device.1} parent=1 // pred_fallthru
      _
    // Predicated region
    $region26: #{_encode_device.1} parent=1 // pred_check
      _
    $region27: #{_encode_device.1} parent=1 // pred_check_branch
      %39 = sbr.rel (0) target = $region29
    $region28: #{_encode_device.1} parent=1 // pred_region
      %s41 = ssub.s32 1024, 1024
      %42 = vsyncadd [#allocation6], %s41
      %s43 = sshll.u32 [#allocation5], 4
      %s44 = int_to_ptr.vmem [resolvable:$true] %s43
      %49 = dma.hbm_to_vmem [thread:$0]  %s6, 1024, %s44, [#allocation6], 64, 64, 4
    $region29: #{_encode_device.1} parent=1 // pred_fallthru
      _
    // Predicated region
    $region30: #{_encode_device.1} parent=1 // pred_check
      _
    $region31: #{_encode_device.1} parent=1 // pred_check_branch
      %51 = sbr.rel (0) target = $region33
    $region32: #{_encode_device.1} parent=1 // pred_region
      _
    $region33: #{_encode_device.1} parent=1 // pred_fallthru
      _
    // Predicated region
    $region34: #{_encode_device.1} parent=1 // pred_check
      _
    $region35: #{_encode_device.1} parent=1 // pred_check_branch
      %53 = sbr.rel (0) target = $region37
    $region36: #{_encode_device.1} parent=1 // pred_region
      %54 = dma.done [#allocation4], 48
    $region37: #{_encode_device.1} parent=1 // pred_fallthru
      _
    // Predicated region
    $region38: #{_encode_device.1} parent=1 // pred_check
      _
    $region39: #{_encode_device.1} parent=1 // pred_check_branch
      %56 = sbr.rel (0) target = $region41
    $region40: #{_encode_device.1} parent=1 // pred_region
      %57 = dma.done [#allocation6], 1024
    $region41: #{_encode_device.1} parent=1 // pred_fallthru
      _
    %v59 = vld [vmem:[%s0] sm:$0xff]
    %v60 = vld [vmem:[%s0 + $0x8] sm:$0xff]
    %v61 = vld [vmem:[%s0 + $0x10] sm:$0xff]
    %v62 = vld [vmem:[%s0 + $0x18] sm:$0xff]
    %v63 = vld [vmem:[%s0 + $0x20] sm:$0xff]
    %v64 = vld [vmem:[%s0 + $0x28] sm:$0xff]
    %v65 = vld [vmem:[%s0 + $0x30] sm:$0xff]
    %v66 = vld [vmem:[%s0 + $0x38] sm:$0xff]
    %v67 = vld [vmem:[%s1] sm:$0xff]
    %v68 = vld [vmem:[%s1 + $0x8] sm:$0xf]
    %v69 = vld [vmem:[%s1 + $0xc] sm:$0xff]
    %v70 = vld [vmem:[%s1 + $0x14] sm:$0xf]
    %v71 = vld [vmem:[%s1 + $0x18] sm:$0xff]
    %v72 = vld [vmem:[%s1 + $0x20] sm:$0xf]
    %v73 = vld [vmem:[%s1 + $0x24] sm:$0xff]
    %v74 = vld [vmem:[%s1 + $0x2c] sm:$0xf]
    %v75 = vld [vmem:[%s1 + $0x30] sm:$0xff]
    %v76 = vld [vmem:[%s1 + $0x38] sm:$0xf]
    %v77 = vld [vmem:[%s1 + $0x3c] sm:$0xff]
    %v78 = vld [vmem:[%s1 + $0x44] sm:$0xf]
    %v79 = vld [vmem:[%s1 + $0x48] sm:$0xff]
    %v80 = vld [vmem:[%s1 + $0x50] sm:$0xf]
    %v81 = vld [vmem:[%s1 + $0x54] sm:$0xff]
    %v82 = vld [vmem:[%s1 + $0x5c] sm:$0xf]
    %v83 = vld [vmem:[%s1 + $0x60] sm:$0xff]
    %v84 = vld [vmem:[%s1 + $0x68] sm:$0xf]
    %v85 = vld [vmem:[%s1 + $0x6c] sm:$0xff]
    %v86 = vld [vmem:[%s1 + $0x74] sm:$0xf]
    %v87 = vld [vmem:[%s1 + $0x78] sm:$0xff]
    %v88 = vld [vmem:[%s1 + $0x80] sm:$0xf]
    %v89 = vld [vmem:[%s1 + $0x84] sm:$0xff]
    %v90 = vld [vmem:[%s1 + $0x8c] sm:$0xf]
    %v91 = vld [vmem:[%s1 + $0x90] sm:$0xff]
    %v92 = vld [vmem:[%s1 + $0x98] sm:$0xf]
    %v93 = vld [vmem:[%s1 + $0x9c] sm:$0xff]
    %v94 = vld [vmem:[%s1 + $0xa4] sm:$0xf]
    %v95 = vld [vmem:[%s1 + $0xa8] sm:$0xff]
    %v96 = vld [vmem:[%s1 + $0xb0] sm:$0xf]
    %v97 = vld [vmem:[%s1 + $0xb4] sm:$0xff]
    %v98 = vld [vmem:[%s1 + $0xbc] sm:$0xf]
    %v99 = vld [vmem:[%s1 + $0xc0] sm:$0xff]
    %v100 = vld [vmem:[%s1 + $0xc8] sm:$0xf]
    %v101 = vld [vmem:[%s1 + $0xcc] sm:$0xff]
    %v102 = vld [vmem:[%s1 + $0xd4] sm:$0xf]
    %v103 = vld [vmem:[%s1 + $0xd8] sm:$0xff]
    %v104 = vld [vmem:[%s1 + $0xe0] sm:$0xf]
    %v105 = vld [vmem:[%s1 + $0xe4] sm:$0xff]
    %v106 = vld [vmem:[%s1 + $0xec] sm:$0xf]
    %v107 = vld [vmem:[%s1 + $0xf0] sm:$0xff]
    %v108 = vld [vmem:[%s1 + $0xf8] sm:$0xf]
    %v109 = vld [vmem:[%s1 + $0xfc] sm:$0xff]
    %v110 = vld [vmem:[%s1 + $0x104] sm:$0xf]
    %v111 = vld [vmem:[%s1 + $0x108] sm:$0xff]
    %v112 = vld [vmem:[%s1 + $0x110] sm:$0xf]
    %v113 = vld [vmem:[%s1 + $0x114] sm:$0xff]
    %v114 = vld [vmem:[%s1 + $0x11c] sm:$0xf]
    %v115 = vld [vmem:[%s1 + $0x120] sm:$0xff]
    %v116 = vld [vmem:[%s1 + $0x128] sm:$0xf]
    %v117 = vld [vmem:[%s1 + $0x12c] sm:$0xff]
    %v118 = vld [vmem:[%s1 + $0x134] sm:$0xf]
    %v119 = vld [vmem:[%s1 + $0x138] sm:$0xff]
    %v120 = vld [vmem:[%s1 + $0x140] sm:$0xf]
    %v121 = vld [vmem:[%s1 + $0x144] sm:$0xff]
    %v122 = vld [vmem:[%s1 + $0x14c] sm:$0xf]
    %v123 = vld [vmem:[%s1 + $0x150] sm:$0xff]
    %v124 = vld [vmem:[%s1 + $0x158] sm:$0xf]
    %v125 = vld [vmem:[%s1 + $0x15c] sm:$0xff]
    %v126 = vld [vmem:[%s1 + $0x164] sm:$0xf]
    %v127 = vld [vmem:[%s1 + $0x168] sm:$0xff]
    %v128 = vld [vmem:[%s1 + $0x170] sm:$0xf]
    %v129 = vld [vmem:[%s1 + $0x174] sm:$0xff]
    %v130 = vld [vmem:[%s1 + $0x17c] sm:$0xf]
    %v131 = vld [vmem:[#allocation3] sm:$0x7]
    %v133 = vlaneseq
    %v134 = vshrl.u32 %v133, 7
    %v135 = vsub.s32 0, %v134
    %v136 = vrot.slane %v131, %v135
    %v137 = vlaneseq
    %v138 = vshrl.u32 %v137, 7
    %v139 = vsub.s32 1, %v138
    %v140 = vrot.slane %v131, %v139
    %v141 = vlaneseq
    %v142 = vshrl.u32 %v141, 7
    %v143 = vsub.s32 2, %v142
    %v144 = vrot.slane %v131, %v143
    %v156 = vunpack.c.l.b16 %v59
    %v157 = vunpack.c.h.b16 %v59
    %v158 = vunpack.c.l.b16 %v60
    %v159 = vunpack.c.h.b16 %v60
    %v160 = vunpack.c.l.b16 %v61
    %v161 = vunpack.c.h.b16 %v61
    %v162 = vunpack.c.l.b16 %v62
    %v163 = vunpack.c.h.b16 %v62
    %v164 = vunpack.c.l.b16 %v63
    %v165 = vunpack.c.h.b16 %v63
    %v166 = vunpack.c.l.b16 %v64
    %v167 = vunpack.c.h.b16 %v64
    %v168 = vunpack.c.l.b16 %v65
    %v169 = vunpack.c.h.b16 %v65
    %v170 = vunpack.c.l.b16 %v66
    %v171 = vunpack.c.h.b16 %v66
    %v172 = vpack.c.b16 %v158, %v156
    %v173 = vpack.c.b16 %v159, %v157
    %v174 = vpack.c.b16 %v162, %v160
    %v175 = vpack.c.b16 %v163, %v161
    %v176 = vpack.c.b16 %v166, %v164
    %v177 = vpack.c.b16 %v167, %v165
    %v178 = vpack.c.b16 %v170, %v168
    %v179 = vpack.c.b16 %v171, %v169
    %v252 = vunpack.c.l.b16 %v67
    %v253 = vunpack.c.h.b16 %v67
    %v254 = vunpack.c.l.b16 %v68
    %v255 = vunpack.c.l.b16 %v69
    %v256 = vunpack.c.h.b16 %v69
    %v257 = vunpack.c.l.b16 %v70
    %v258 = vunpack.c.l.b16 %v71
    %v259 = vunpack.c.h.b16 %v71
    %v260 = vunpack.c.l.b16 %v72
    %v261 = vunpack.c.l.b16 %v73
    %v262 = vunpack.c.h.b16 %v73
    %v263 = vunpack.c.l.b16 %v74
    %v264 = vunpack.c.l.b16 %v75
    %v265 = vunpack.c.h.b16 %v75
    %v266 = vunpack.c.l.b16 %v76
    %v267 = vunpack.c.l.b16 %v77
    %v268 = vunpack.c.h.b16 %v77
    %v269 = vunpack.c.l.b16 %v78
    %v270 = vunpack.c.l.b16 %v79
    %v271 = vunpack.c.h.b16 %v79
    %v272 = vunpack.c.l.b16 %v80
    %v273 = vunpack.c.l.b16 %v81
    %v274 = vunpack.c.h.b16 %v81
    %v275 = vunpack.c.l.b16 %v82
    %v276 = vunpack.c.l.b16 %v83
    %v277 = vunpack.c.h.b16 %v83
    %v278 = vunpack.c.l.b16 %v84
    %v279 = vunpack.c.l.b16 %v85
    %v280 = vunpack.c.h.b16 %v85
    %v281 = vunpack.c.l.b16 %v86
    %v282 = vunpack.c.l.b16 %v87
    %v283 = vunpack.c.h.b16 %v87
    %v284 = vunpack.c.l.b16 %v88
    %v285 = vunpack.c.l.b16 %v89
    %v286 = vunpack.c.h.b16 %v89
    %v287 = vunpack.c.l.b16 %v90
    %v288 = vunpack.c.l.b16 %v91
    %v289 = vunpack.c.h.b16 %v91
    %v290 = vunpack.c.l.b16 %v92
    %v291 = vunpack.c.l.b16 %v93
    %v292 = vunpack.c.h.b16 %v93
    %v293 = vunpack.c.l.b16 %v94
    %v294 = vunpack.c.l.b16 %v95
    %v295 = vunpack.c.h.b16 %v95
    %v296 = vunpack.c.l.b16 %v96
    %v297 = vunpack.c.l.b16 %v97
    %v298 = vunpack.c.h.b16 %v97
    %v299 = vunpack.c.l.b16 %v98
    %v300 = vunpack.c.l.b16 %v99
    %v301 = vunpack.c.h.b16 %v99
    %v302 = vunpack.c.l.b16 %v100
    %v303 = vunpack.c.l.b16 %v101
    %v304 = vunpack.c.h.b16 %v101
    %v305 = vunpack.c.l.b16 %v102
    %v306 = vunpack.c.l.b16 %v103
    %v307 = vunpack.c.h.b16 %v103
    %v308 = vunpack.c.l.b16 %v104
    %v309 = vunpack.c.l.b16 %v105
    %v310 = vunpack.c.h.b16 %v105
    %v311 = vunpack.c.l.b16 %v106
    %v312 = vunpack.c.l.b16 %v107
    %v313 = vunpack.c.h.b16 %v107
    %v314 = vunpack.c.l.b16 %v108
    %v315 = vunpack.c.l.b16 %v109
    %v316 = vunpack.c.h.b16 %v109
    %v317 = vunpack.c.l.b16 %v110
    %v318 = vunpack.c.l.b16 %v111
    %v319 = vunpack.c.h.b16 %v111
    %v320 = vunpack.c.l.b16 %v112
    %v321 = vunpack.c.l.b16 %v113
    %v322 = vunpack.c.h.b16 %v113
    %v323 = vunpack.c.l.b16 %v114
    %v324 = vunpack.c.l.b16 %v115
    %v325 = vunpack.c.h.b16 %v115
    %v326 = vunpack.c.l.b16 %v116
    %v327 = vunpack.c.l.b16 %v117
    %v328 = vunpack.c.h.b16 %v117
    %v329 = vunpack.c.l.b16 %v118
    %v330 = vunpack.c.l.b16 %v119
    %v331 = vunpack.c.h.b16 %v119
    %v332 = vunpack.c.l.b16 %v120
    %v333 = vunpack.c.l.b16 %v121
    %v334 = vunpack.c.h.b16 %v121
    %v335 = vunpack.c.l.b16 %v122
    %v336 = vunpack.c.l.b16 %v123
    %v337 = vunpack.c.h.b16 %v123
    %v338 = vunpack.c.l.b16 %v124
    %v339 = vunpack.c.l.b16 %v125
    %v340 = vunpack.c.h.b16 %v125
    %v341 = vunpack.c.l.b16 %v126
    %v342 = vunpack.c.l.b16 %v127
    %v343 = vunpack.c.h.b16 %v127
    %v344 = vunpack.c.l.b16 %v128
    %v345 = vunpack.c.l.b16 %v129
    %v346 = vunpack.c.h.b16 %v129
    %v347 = vunpack.c.l.b16 %v130
    %v348 = vpack.c.b16 %v255, %v252
    %v349 = vpack.c.b16 %v256, %v253
    %v350 = vpack.c.b16 %v257, %v254
    %v351 = vpack.c.b16 %v261, %v258
    %v352 = vpack.c.b16 %v262, %v259
    %v353 = vpack.c.b16 %v263, %v260
    %v354 = vpack.c.b16 %v267, %v264
    %v355 = vpack.c.b16 %v268, %v265
    %v356 = vpack.c.b16 %v269, %v266
    %v357 = vpack.c.b16 %v273, %v270
    %v358 = vpack.c.b16 %v274, %v271
    %v359 = vpack.c.b16 %v275, %v272
    %v360 = vpack.c.b16 %v279, %v276
    %v361 = vpack.c.b16 %v280, %v277
    %v362 = vpack.c.b16 %v281, %v278
    %v363 = vpack.c.b16 %v285, %v282
    %v364 = vpack.c.b16 %v286, %v283
    %v365 = vpack.c.b16 %v287, %v284
    %v366 = vpack.c.b16 %v291, %v288
    %v367 = vpack.c.b16 %v292, %v289
    %v368 = vpack.c.b16 %v293, %v290
    %v369 = vpack.c.b16 %v297, %v294
    %v370 = vpack.c.b16 %v298, %v295
    %v371 = vpack.c.b16 %v299, %v296
    %v372 = vpack.c.b16 %v303, %v300
    %v373 = vpack.c.b16 %v304, %v301
    %v374 = vpack.c.b16 %v305, %v302
    %v375 = vpack.c.b16 %v309, %v306
    %v376 = vpack.c.b16 %v310, %v307
    %v377 = vpack.c.b16 %v311, %v308
    %v378 = vpack.c.b16 %v315, %v312
    %v379 = vpack.c.b16 %v316, %v313
    %v380 = vpack.c.b16 %v317, %v314
    %v381 = vpack.c.b16 %v321, %v318
    %v382 = vpack.c.b16 %v322, %v319
    %v383 = vpack.c.b16 %v323, %v320
    %v384 = vpack.c.b16 %v327, %v324
    %v385 = vpack.c.b16 %v328, %v325
    %v386 = vpack.c.b16 %v329, %v326
    %v387 = vpack.c.b16 %v333, %v330
    %v388 = vpack.c.b16 %v334, %v331
    %v389 = vpack.c.b16 %v335, %v332
    %v390 = vpack.c.b16 %v339, %v336
    %v391 = vpack.c.b16 %v340, %v337
    %v392 = vpack.c.b16 %v341, %v338
    %v393 = vpack.c.b16 %v345, %v342
    %v394 = vpack.c.b16 %v346, %v343
    %v395 = vpack.c.b16 %v347, %v344
    %444 = vmatprep.subr.bf16.mxu0 %v370
    %445 = vmatpush1.bf16.msra.mxu0 %v369
    %446 = vmatprep.subr.bf16.mxu0 %v367
    %447 = vmatpush1.bf16.msra.mxu0 %v366
    %448 = vmatprep.subr.bf16.mxu0 %v364
    %449 = vmatpush1.bf16.msra.mxu0 %v363
    %450 = vmatprep.subr.bf16.mxu0 %v361
    %451 = vmatpush1.bf16.msra.mxu0 %v360
    %452 = vmatprep.subr.bf16.mxu0 %v358
    %453 = vmatpush1.bf16.msra.mxu0 %v357
    %454 = vmatprep.subr.bf16.mxu0 %v355
    %455 = vmatpush1.bf16.msra.mxu0 %v354
    %456 = vmatprep.subr.bf16.mxu0 %v352
    %457 = vmatpush1.bf16.msra.mxu0 %v351
    %458 = vmatprep.subr.bf16.mxu0 %v349
    %459 = vmatpush1.bf16.msra.mxu0 %v348
    %460 = vmatprep.subr.bf16.mxu0 %v394
    %461 = vmatpush2.bf16.msra.mxu0 %v393
    %462 = vmatprep.subr.bf16.mxu0 %v391
    %463 = vmatpush2.bf16.msra.mxu0 %v390
    %464 = vmatprep.subr.bf16.mxu0 %v388
    %465 = vmatpush2.bf16.msra.mxu0 %v387
    %466 = vmatprep.subr.bf16.mxu0 %v385
    %467 = vmatpush2.bf16.msra.mxu0 %v384
    %468 = vmatprep.subr.bf16.mxu0 %v382
    %469 = vmatpush2.bf16.msra.mxu0 %v381
    %470 = vmatprep.subr.bf16.mxu0 %v379
    %471 = vmatpush2.bf16.msra.mxu0 %v378
    %472 = vmatprep.subr.bf16.mxu0 %v376
    %473 = vmatpush2.bf16.msra.mxu0 %v375
    %474 = vmatprep.subr.bf16.mxu0 %v373
    %475 = vmatpush2.bf16.msra.mxu0 %v372
    %476 = vmatprep.mubr.bf16.mxu0 %v173
    %477 = vmatmul.mubr.bf16.gmra.mxu0 %v172
    %v478 = vpop.f32.mrf.mxu0
    %v479 = vadd.f32 %v136, %v478
    %v480 = vpop.f32.mrf.mxu0
    %v481 = vadd.f32 %v140, %v480
    %v482 = vpop.f32.mrf.mxu0
    %v483 = vadd.f32 %v136, %v482
    %v484 = vpop.f32.mrf.mxu0
    %v485 = vadd.f32 %v140, %v484
    %486 = vmatprep.mubr.bf16.mxu0 %v175
    %487 = vmatmul.mubr.bf16.gmra.mxu0 %v174
    %v488 = vpop.f32.mrf.mxu0
    %v489 = vadd.f32 %v136, %v488
    %v490 = vpop.f32.mrf.mxu0
    %v491 = vadd.f32 %v140, %v490
    %v492 = vpop.f32.mrf.mxu0
    %v493 = vadd.f32 %v136, %v492
    %v494 = vpop.f32.mrf.mxu0
    %v495 = vadd.f32 %v140, %v494
    %496 = vmatprep.mubr.bf16.mxu0 %v177
    %497 = vmatmul.mubr.bf16.gmra.mxu0 %v176
    %v498 = vpop.f32.mrf.mxu0
    %v499 = vadd.f32 %v136, %v498
    %v500 = vpop.f32.mrf.mxu0
    %v501 = vadd.f32 %v140, %v500
    %v502 = vpop.f32.mrf.mxu0
    %v503 = vadd.f32 %v136, %v502
    %v504 = vpop.f32.mrf.mxu0
    %v505 = vadd.f32 %v140, %v504
    %506 = vmatprep.mubr.bf16.mxu0 %v179
    %507 = vmatmul.mubr.bf16.gmra.mxu0 %v178
    %v508 = vpop.f32.mrf.mxu0
    %v509 = vadd.f32 %v136, %v508
    %v510 = vpop.f32.mrf.mxu0
    %v511 = vadd.f32 %v140, %v510
    %v512 = vpop.f32.mrf.mxu0
    %v513 = vadd.f32 %v136, %v512
    %v514 = vpop.f32.mrf.mxu0
    %v515 = vadd.f32 %v140, %v514
    %516 = vdwg.mxu0
    %517 = vmatprep.subr.bf16.mxu0 0
    %518 = vmatpush1.bf16.msra.mxu0 %v371
    %519 = vmatprep.subr.bf16.mxu0 0
    %520 = vmatpush1.bf16.msra.mxu0 %v368
    %521 = vmatprep.subr.bf16.mxu0 0
    %522 = vmatpush1.bf16.msra.mxu0 %v365
    %523 = vmatprep.subr.bf16.mxu0 0
    %524 = vmatpush1.bf16.msra.mxu0 %v362
    %525 = vmatprep.subr.bf16.mxu0 0
    %526 = vmatpush1.bf16.msra.mxu0 %v359
    %527 = vmatprep.subr.bf16.mxu0 0
    %528 = vmatpush1.bf16.msra.mxu0 %v356
    %529 = vmatprep.subr.bf16.mxu0 0
    %530 = vmatpush1.bf16.msra.mxu0 %v353
    %531 = vmatprep.subr.bf16.mxu0 0
    %532 = vmatpush1.bf16.msra.mxu0 %v350
    %533 = vmatprep.subr.bf16.mxu0 0
    %534 = vmatpush2.bf16.msra.mxu0 %v395
    %535 = vmatprep.subr.bf16.mxu0 0
    %536 = vmatpush2.bf16.msra.mxu0 %v392
    %537 = vmatprep.subr.bf16.mxu0 0
    %538 = vmatpush2.bf16.msra.mxu0 %v389
    %539 = vmatprep.subr.bf16.mxu0 0
    %540 = vmatpush2.bf16.msra.mxu0 %v386
    %541 = vmatprep.subr.bf16.mxu0 0
    %542 = vmatpush2.bf16.msra.mxu0 %v383
    %543 = vmatprep.subr.bf16.mxu0 0
    %544 = vmatpush2.bf16.msra.mxu0 %v380
    %545 = vmatprep.subr.bf16.mxu0 0
    %546 = vmatpush2.bf16.msra.mxu0 %v377
    %547 = vmatprep.subr.bf16.mxu0 0
    %548 = vmatpush2.bf16.msra.mxu0 %v374
    %549 = vmatprep.mubr.bf16.mxu0 %v173
    %550 = vmatmul.mubr.bf16.gmra.mxu0 %v172
    %v551 = vpop.f32.mrf.mxu0
    %v552 = vadd.f32 %v144, %v551
    %v553 = vpop.f32.mrf.mxu0
    %v554 = vpop.f32.mrf.mxu0
    %v555 = vadd.f32 %v144, %v554
    %v556 = vpop.f32.mrf.mxu0
    %557 = vmatprep.mubr.bf16.mxu0 %v175
    %558 = vmatmul.mubr.bf16.gmra.mxu0 %v174
    %v559 = vpop.f32.mrf.mxu0
    %v560 = vadd.f32 %v144, %v559
    %v561 = vpop.f32.mrf.mxu0
    %v562 = vpop.f32.mrf.mxu0
    %v563 = vadd.f32 %v144, %v562
    %v564 = vpop.f32.mrf.mxu0
    %565 = vmatprep.mubr.bf16.mxu0 %v177
    %566 = vmatmul.mubr.bf16.gmra.mxu0 %v176
    %v567 = vpop.f32.mrf.mxu0
    %v568 = vadd.f32 %v144, %v567
    %v569 = vpop.f32.mrf.mxu0
    %v570 = vpop.f32.mrf.mxu0
    %v571 = vadd.f32 %v144, %v570
    %v572 = vpop.f32.mrf.mxu0
    %573 = vmatprep.mubr.bf16.mxu0 %v179
    %574 = vmatmul.mubr.bf16.gmra.mxu0 %v178
    %v575 = vpop.f32.mrf.mxu0
    %v576 = vadd.f32 %v144, %v575
    %v577 = vpop.f32.mrf.mxu0
    %v578 = vpop.f32.mrf.mxu0
    %v579 = vadd.f32 %v144, %v578
    %v580 = vpop.f32.mrf.mxu0
    %581 = vdwg.mxu0
    %582 = vst [vmem:[#allocation2] sm:$0xff] %v479
    %583 = vst [vmem:[#allocation2 + $0x8] sm:$0xff] %v481
    %584 = vst [vmem:[#allocation2 + $0x10] sm:$0xff] %v552
    %585 = vst [vmem:[#allocation2 + $0x18] sm:$0xff] %v483
    %586 = vst [vmem:[#allocation2 + $0x20] sm:$0xff] %v485
    %587 = vst [vmem:[#allocation2 + $0x28] sm:$0xff] %v555
    %588 = vst [vmem:[#allocation2 + $0x30] sm:$0xff] %v489
    %589 = vst [vmem:[#allocation2 + $0x38] sm:$0xff] %v491
    %590 = vst [vmem:[#allocation2 + $0x40] sm:$0xff] %v560
    %591 = vst [vmem:[#allocation2 + $0x48] sm:$0xff] %v493
    %592 = vst [vmem:[#allocation2 + $0x50] sm:$0xff] %v495
    %593 = vst [vmem:[#allocation2 + $0x58] sm:$0xff] %v563
    %594 = vst [vmem:[#allocation2 + $0x60] sm:$0xff] %v499
    %595 = vst [vmem:[#allocation2 + $0x68] sm:$0xff] %v501
    %596 = vst [vmem:[#allocation2 + $0x70] sm:$0xff] %v568
    %597 = vst [vmem:[#allocation2 + $0x78] sm:$0xff] %v503
    %598 = vst [vmem:[#allocation2 + $0x80] sm:$0xff] %v505
    %599 = vst [vmem:[#allocation2 + $0x88] sm:$0xff] %v571
    %600 = vst [vmem:[#allocation2 + $0x90] sm:$0xff] %v509
    %601 = vst [vmem:[#allocation2 + $0x98] sm:$0xff] %v511
    %602 = vst [vmem:[#allocation2 + $0xa0] sm:$0xff] %v576
    %603 = vst [vmem:[#allocation2 + $0xa8] sm:$0xff] %v513
    %604 = vst [vmem:[#allocation2 + $0xb0] sm:$0xff] %v515
    %605 = vst [vmem:[#allocation2 + $0xb8] sm:$0xff] %v579
    %v606 = vlaneseq
    %v607 = vand.u32 %v606, 127
    %v608 = vadd.s32 %v607, 128
    %v609 = vadd.s32 %v607, 256
    %vm610 = vcmp.lt.s32.totalorder %v607, 0
    %v611 = vsub.s32 0, %v607
    %v612 = vsel %vm610, %v611, %v607
    %v613 = vshrl.u32 %v612, 7
    %v614 = vand.u32 %v612, 127
    %v615 = vsub.s32 0, %v614
    %v616 = vsel %vm610, %v615, %v614
    %vm617 = vcmp.lt.s32.totalorder %v608, 0
    %v618 = vsub.s32 0, %v608
    %v619 = vsel %vm617, %v618, %v608
    %v620 = vshrl.u32 %v619, 7
    %v621 = vand.u32 %v619, 127
    %v622 = vsub.s32 0, %v621
    %v623 = vsel %vm617, %v622, %v621
    %vm624 = vcmp.lt.s32.totalorder %v609, 0
    %v625 = vsub.s32 0, %v609
    %v626 = vsel %vm624, %v625, %v609
    %v627 = vshrl.u32 %v626, 7
    %v628 = vand.u32 %v626, 127
    %v629 = vsub.s32 0, %v628
    %v630 = vsel %vm624, %v629, %v628
    %vm631 = vcmp.ne.s32.totalorder %v616, 0
    %vm632 = vcmp.ne.s32.totalorder %v623, 0
    %vm633 = vcmp.ne.s32.totalorder %v630, 0
    %vm634 = vcmp.lt.s32.totalorder %v616, 0
    %vm635 = vcmp.lt.s32.totalorder %v623, 0
    %vm636 = vcmp.lt.s32.totalorder %v630, 0
    %vm637 = vmand %vm634, %vm631
    %vm638 = vmand %vm635, %vm632
    %vm639 = vmand %vm636, %vm633
    %v640 = vadd.s32 %v616, 128
    %v641 = vadd.s32 %v623, 128
    %v642 = vadd.s32 %v630, 128
    %v643 = vsel %vm637, %v640, %v616
    %v644 = vsel %vm638, %v641, %v623
    %v645 = vsel %vm639, %v642, %v630
    %vm646 = vcmp.lt.s32.totalorder %v643, 32
    %vm647 = vcmp.lt.s32.totalorder %v644, 32
    %vm648 = vcmp.lt.s32.totalorder %v645, 32
    %v649 = vld [vmem:[%s4] sm:$0x1]
    %v651 = vlaneseq
    %v652 = vshrl.u32 %v651, 7
    %v653 = vsub.s32 0, %v652
    %v654 = vrot.slane %v649, %v653
    %v656 = vld [vmem:[%s3] sm:$0xff]
    %v657 = vld [vmem:[%s3 + $0x8] sm:$0xf]
    %v658 = vld [vmem:[%s3 + $0xc] sm:$0xff]
    %v659 = vld [vmem:[%s3 + $0x14] sm:$0xf]
    %v660 = vld [vmem:[%s3 + $0x18] sm:$0xff]
    %v661 = vld [vmem:[%s3 + $0x20] sm:$0xf]
    %v662 = vld [vmem:[%s3 + $0x24] sm:$0xff]
    %v663 = vld [vmem:[%s3 + $0x2c] sm:$0xf]
    %v664 = vld [vmem:[%s3 + $0x30] sm:$0xff]
    %v665 = vld [vmem:[%s3 + $0x38] sm:$0xf]
    %v666 = vld [vmem:[%s3 + $0x3c] sm:$0xff]
    %v667 = vld [vmem:[%s3 + $0x44] sm:$0xf]
    %v668 = vld [vmem:[%s3 + $0x48] sm:$0xff]
    %v669 = vld [vmem:[%s3 + $0x50] sm:$0xf]
    %v670 = vld [vmem:[%s3 + $0x54] sm:$0xff]
    %v671 = vld [vmem:[%s3 + $0x5c] sm:$0xf]
    %v672 = vld [vmem:[%s3 + $0x60] sm:$0xff]
    %v673 = vld [vmem:[%s3 + $0x68] sm:$0xf]
    %v674 = vld [vmem:[%s3 + $0x6c] sm:$0xff]
    %v675 = vld [vmem:[%s3 + $0x74] sm:$0xf]
    %v676 = vld [vmem:[%s3 + $0x78] sm:$0xff]
    %v677 = vld [vmem:[%s3 + $0x80] sm:$0xf]
    %v678 = vld [vmem:[%s3 + $0x84] sm:$0xff]
    %v679 = vld [vmem:[%s3 + $0x8c] sm:$0xf]
    %v680 = vld [vmem:[%s3 + $0x90] sm:$0xff]
    %v681 = vld [vmem:[%s3 + $0x98] sm:$0xf]
    %v682 = vld [vmem:[%s3 + $0x9c] sm:$0xff]
    %v683 = vld [vmem:[%s3 + $0xa4] sm:$0xf]
    %v684 = vld [vmem:[%s3 + $0xa8] sm:$0xff]
    %v685 = vld [vmem:[%s3 + $0xb0] sm:$0xf]
    %v686 = vld [vmem:[%s3 + $0xb4] sm:$0xff]
    %v687 = vld [vmem:[%s3 + $0xbc] sm:$0xf]
    %v720 = vunpack.c.l.b16 %v656
    %v721 = vunpack.c.h.b16 %v656
    %v722 = vunpack.c.l.b16 %v657
    %v723 = vunpack.c.l.b16 %v658
    %v724 = vunpack.c.h.b16 %v658
    %v725 = vunpack.c.l.b16 %v659
    %v726 = vunpack.c.l.b16 %v660
    %v727 = vunpack.c.h.b16 %v660
    %v728 = vunpack.c.l.b16 %v661
    %v729 = vunpack.c.l.b16 %v662
    %v730 = vunpack.c.h.b16 %v662
    %v731 = vunpack.c.l.b16 %v663
    %v732 = vunpack.c.l.b16 %v664
    %v733 = vunpack.c.h.b16 %v664
    %v734 = vunpack.c.l.b16 %v665
    %v735 = vunpack.c.l.b16 %v666
    %v736 = vunpack.c.h.b16 %v666
    %v737 = vunpack.c.l.b16 %v667
    %v738 = vunpack.c.l.b16 %v668
    %v739 = vunpack.c.h.b16 %v668
    %v740 = vunpack.c.l.b16 %v669
    %v741 = vunpack.c.l.b16 %v670
    %v742 = vunpack.c.h.b16 %v670
    %v743 = vunpack.c.l.b16 %v671
    %v744 = vunpack.c.l.b16 %v672
    %v745 = vunpack.c.h.b16 %v672
    %v746 = vunpack.c.l.b16 %v673
    %v747 = vunpack.c.l.b16 %v674
    %v748 = vunpack.c.h.b16 %v674
    %v749 = vunpack.c.l.b16 %v675
    %v750 = vunpack.c.l.b16 %v676
    %v751 = vunpack.c.h.b16 %v676
    %v752 = vunpack.c.l.b16 %v677
    %v753 = vunpack.c.l.b16 %v678
    %v754 = vunpack.c.h.b16 %v678
    %v755 = vunpack.c.l.b16 %v679
    %v756 = vunpack.c.l.b16 %v680
    %v757 = vunpack.c.h.b16 %v680
    %v758 = vunpack.c.l.b16 %v681
    %v759 = vunpack.c.l.b16 %v682
    %v760 = vunpack.c.h.b16 %v682
    %v761 = vunpack.c.l.b16 %v683
    %v762 = vunpack.c.l.b16 %v684
    %v763 = vunpack.c.h.b16 %v684
    %v764 = vunpack.c.l.b16 %v685
    %v765 = vunpack.c.l.b16 %v686
    %v766 = vunpack.c.h.b16 %v686
    %v767 = vunpack.c.l.b16 %v687
    %v768 = vpack.c.b16 %v723, %v720
    %v769 = vpack.c.b16 %v724, %v721
    %v770 = vpack.c.b16 %v725, %v722
    %v771 = vpack.c.b16 %v729, %v726
    %v772 = vpack.c.b16 %v730, %v727
    %v773 = vpack.c.b16 %v731, %v728
    %v774 = vpack.c.b16 %v735, %v732
    %v775 = vpack.c.b16 %v736, %v733
    %v776 = vpack.c.b16 %v737, %v734
    %v777 = vpack.c.b16 %v741, %v738
    %v778 = vpack.c.b16 %v742, %v739
    %v779 = vpack.c.b16 %v743, %v740
    %v780 = vpack.c.b16 %v747, %v744
    %v781 = vpack.c.b16 %v748, %v745
    %v782 = vpack.c.b16 %v749, %v746
    %v783 = vpack.c.b16 %v753, %v750
    %v784 = vpack.c.b16 %v754, %v751
    %v785 = vpack.c.b16 %v755, %v752
    %v786 = vpack.c.b16 %v759, %v756
    %v787 = vpack.c.b16 %v760, %v757
    %v788 = vpack.c.b16 %v761, %v758
    %v789 = vpack.c.b16 %v765, %v762
    %v790 = vpack.c.b16 %v766, %v763
    %v791 = vpack.c.b16 %v767, %v764
    %816 = vmatprep.subr.bf16.mxu0 %v790
    %817 = vmatpush1.bf16.msra.mxu0 %v789
    %818 = vmatprep.subr.bf16.mxu0 %v787
    %819 = vmatpush1.bf16.msra.mxu0 %v786
    %820 = vmatprep.subr.bf16.mxu0 %v784
    %821 = vmatpush1.bf16.msra.mxu0 %v783
    %822 = vmatprep.subr.bf16.mxu0 %v781
    %823 = vmatpush1.bf16.msra.mxu0 %v780
    %824 = vmatprep.subr.bf16.mxu0 %v778
    %825 = vmatpush1.bf16.msra.mxu0 %v777
    %826 = vmatprep.subr.bf16.mxu0 %v775
    %827 = vmatpush1.bf16.msra.mxu0 %v774
    %828 = vmatprep.subr.bf16.mxu0 %v772
    %829 = vmatpush1.bf16.msra.mxu0 %v771
    %830 = vmatprep.subr.bf16.mxu0 %v769
    %831 = vmatpush1.bf16.msra.mxu0 %v768
    %832 = vmatprep.subr.bf16.mxu0 0
    %833 = vmatpush2.bf16.msra.mxu0 0
    %834 = vmatprep.subr.bf16.mxu0 0
    %835 = vmatpush2.bf16.msra.mxu0 0
    %836 = vmatprep.subr.bf16.mxu0 0
    %837 = vmatpush2.bf16.msra.mxu0 0
    %838 = vmatprep.subr.bf16.mxu0 0
    %839 = vmatpush2.bf16.msra.mxu0 0
    %840 = vmatprep.subr.bf16.mxu0 0
    %841 = vmatpush2.bf16.msra.mxu0 0
    %842 = vmatprep.subr.bf16.mxu0 0
    %843 = vmatpush2.bf16.msra.mxu0 0
    %844 = vmatprep.subr.bf16.mxu0 0
    %845 = vmatpush2.bf16.msra.mxu0 0
    %846 = vmatprep.subr.bf16.mxu0 0
    %847 = vmatpush2.bf16.msra.mxu0 0
    %848 = vmatprep.mubr.bf16.mxu0 0
    %849 = vmatmul.mubr.bf16.gmra.mxu0 0
    %v850 = vpop.f32.mrf.mxu0
    %v851 = vadd.f32 0.0, %v850
    %v852 = vpop.f32.mrf.mxu0
    %v853 = vadd.f32 0.0, %v852
    %v854 = vpop.f32.mrf.mxu0
    %v855 = vpop.f32.mrf.mxu0
    %856 = vdwg.mxu0
    %857 = vmatprep.subr.bf16.mxu0 0
    %858 = vmatpush1.bf16.msra.mxu0 %v791
    %859 = vmatprep.subr.bf16.mxu0 0
    %860 = vmatpush1.bf16.msra.mxu0 %v788
    %861 = vmatprep.subr.bf16.mxu0 0
    %862 = vmatpush1.bf16.msra.mxu0 %v785
    %863 = vmatprep.subr.bf16.mxu0 0
    %864 = vmatpush1.bf16.msra.mxu0 %v782
    %865 = vmatprep.subr.bf16.mxu0 0
    %866 = vmatpush1.bf16.msra.mxu0 %v779
    %867 = vmatprep.subr.bf16.mxu0 0
    %868 = vmatpush1.bf16.msra.mxu0 %v776
    %869 = vmatprep.subr.bf16.mxu0 0
    %870 = vmatpush1.bf16.msra.mxu0 %v773
    %871 = vmatprep.subr.bf16.mxu0 0
    %872 = vmatpush1.bf16.msra.mxu0 %v770
    %873 = vmatprep.subr.bf16.mxu0 0
    %874 = vmatpush2.bf16.msra.mxu0 0
    %875 = vmatprep.subr.bf16.mxu0 0
    %876 = vmatpush2.bf16.msra.mxu0 0
    %877 = vmatprep.subr.bf16.mxu0 0
    %878 = vmatpush2.bf16.msra.mxu0 0
    %879 = vmatprep.subr.bf16.mxu0 0
    %880 = vmatpush2.bf16.msra.mxu0 0
    %881 = vmatprep.subr.bf16.mxu0 0
    %882 = vmatpush2.bf16.msra.mxu0 0
    %883 = vmatprep.subr.bf16.mxu0 0
    %884 = vmatpush2.bf16.msra.mxu0 0
    %885 = vmatprep.subr.bf16.mxu0 0
    %886 = vmatpush2.bf16.msra.mxu0 0
    %887 = vmatprep.subr.bf16.mxu0 0
    %888 = vmatpush2.bf16.msra.mxu0 0
    %889 = vmatprep.mubr.bf16.mxu0 0
    %890 = vmatmul.mubr.bf16.gmra.mxu0 0
    %v891 = vpop.f32.mrf.mxu0
    %v892 = vadd.f32 0.0, %v891
    %v893 = vpop.f32.mrf.mxu0
    %v894 = vpop.f32.mrf.mxu0
    %v895 = vpop.f32.mrf.mxu0
    %896 = vdwg.mxu0
    %v897 = vld [vmem:[#allocation2] sm:$0xff]
    %v898 = vld [vmem:[#allocation2 + $0x8] sm:$0xff]
    %v899 = vld [vmem:[#allocation2 + $0x10] sm:$0xff]
    %s900 = scalar_lea.vmem [#allocation2], 168
    %v901 = vld [vmem:[%s900] sm:$0xff]
    %v902 = vld [vmem:[%s900 + $0x8] sm:$0xff]
    %v903 = vld [vmem:[%s900 + $0x10] sm:$0xff]
    %v904 = vsel %vm646, %v897, %v901
    %v905 = vsel %vm647, %v898, %v902
    %v906 = vsel %vm648, %v899, %v903
    %v907 = vadd.f32 %v904, %v851
    %v908 = vxor.u32 %v907, 2147483648
    %v909 = vmul.f32 %v908, 1.442695
    %v910 = vpow.pop %v909
    %v911 = vadd.f32 %v910, 1.0
    %v912 = vrcp.pop %v911
    %v913 = vmul.f32 1.0, %v912
    %v914 = vadd.f32 %v905, %v853
    %v915 = vxor.u32 %v914, 2147483648
    %v916 = vmul.f32 %v915, 1.442695
    %v917 = vpow.pop %v916
    %v918 = vadd.f32 %v917, 1.0
    %v919 = vrcp.pop %v918
    %v920 = vmul.f32 1.0, %v919
    %v921 = vadd.f32 %v892, %v654
    %v922 = vmul.f32 %v913, %v921
    %v923 = vadd.f32 %v906, %v922
    %v924 = vtanh.pop %v923
    %v925 = vsub.f32 1.0, %v920
    %v926 = vmul.f32 %v925, %v924
    %v927 = vmul.f32 %v920, 0.0
    %v928 = vadd.f32 %v926, %v927
    %v929 = vpack.c.bf16 %v928, %v928
    %930 = vst [vmem:[%s8] sm:$0xf] %v929
    %s931 = scalar_lea.vmem %s9, 28
    %932 = vst [vmem:[%s931] sm:$0xf] %v929
    %v933 = vld [vmem:[%s3] sm:$0xff]
    %v934 = vld [vmem:[%s3 + $0x8] sm:$0xf]
    %v935 = vld [vmem:[%s3 + $0xc] sm:$0xff]
    %v936 = vld [vmem:[%s3 + $0x14] sm:$0xf]
    %v937 = vld [vmem:[%s3 + $0x18] sm:$0xff]
    %v938 = vld [vmem:[%s3 + $0x20] sm:$0xf]
    %v939 = vld [vmem:[%s3 + $0x24] sm:$0xff]
    %v940 = vld [vmem:[%s3 + $0x2c] sm:$0xf]
    %v941 = vld [vmem:[%s3 + $0x30] sm:$0xff]
    %v942 = vld [vmem:[%s3 + $0x38] sm:$0xf]
    %v943 = vld [vmem:[%s3 + $0x3c] sm:$0xff]
    %v944 = vld [vmem:[%s3 + $0x44] sm:$0xf]
    %v945 = vld [vmem:[%s3 + $0x48] sm:$0xff]
    %v946 = vld [vmem:[%s3 + $0x50] sm:$0xf]
    %v947 = vld [vmem:[%s3 + $0x54] sm:$0xff]
    %v948 = vld [vmem:[%s3 + $0x5c] sm:$0xf]
    %v949 = vld [vmem:[%s3 + $0x60] sm:$0xff]
    %v950 = vld [vmem:[%s3 + $0x68] sm:$0xf]
    %v951 = vld [vmem:[%s3 + $0x6c] sm:$0xff]
    %v952 = vld [vmem:[%s3 + $0x74] sm:$0xf]
    %v953 = vld [vmem:[%s3 + $0x78] sm:$0xff]
    %v954 = vld [vmem:[%s3 + $0x80] sm:$0xf]
    %v955 = vld [vmem:[%s3 + $0x84] sm:$0xff]
    %v956 = vld [vmem:[%s3 + $0x8c] sm:$0xf]
    %v957 = vld [vmem:[%s3 + $0x90] sm:$0xff]
    %v958 = vld [vmem:[%s3 + $0x98] sm:$0xf]
    %v959 = vld [vmem:[%s3 + $0x9c] sm:$0xff]
    %v960 = vld [vmem:[%s3 + $0xa4] sm:$0xf]
    %v961 = vld [vmem:[%s3 + $0xa8] sm:$0xff]
    %v962 = vld [vmem:[%s3 + $0xb0] sm:$0xf]
    %v963 = vld [vmem:[%s3 + $0xb4] sm:$0xff]
    %v964 = vld [vmem:[%s3 + $0xbc] sm:$0xf]
    %v997 = vunpack.c.l.b16 %v933
    %v998 = vunpack.c.h.b16 %v933
    %v999 = vunpack.c.l.b16 %v934
    %v1000 = vunpack.c.l.b16 %v935
    %v1001 = vunpack.c.h.b16 %v935
    %v1002 = vunpack.c.l.b16 %v936
    %v1003 = vunpack.c.l.b16 %v937
    %v1004 = vunpack.c.h.b16 %v937
    %v1005 = vunpack.c.l.b16 %v938
    %v1006 = vunpack.c.l.b16 %v939
    %v1007 = vunpack.c.h.b16 %v939
    %v1008 = vunpack.c.l.b16 %v940
    %v1009 = vunpack.c.l.b16 %v941
    %v1010 = vunpack.c.h.b16 %v941
    %v1011 = vunpack.c.l.b16 %v942
    %v1012 = vunpack.c.l.b16 %v943
    %v1013 = vunpack.c.h.b16 %v943
    %v1014 = vunpack.c.l.b16 %v944
    %v1015 = vunpack.c.l.b16 %v945
    %v1016 = vunpack.c.h.b16 %v945
    %v1017 = vunpack.c.l.b16 %v946
    %v1018 = vunpack.c.l.b16 %v947
    %v1019 = vunpack.c.h.b16 %v947
    %v1020 = vunpack.c.l.b16 %v948
    %v1021 = vunpack.c.l.b16 %v949
    %v1022 = vunpack.c.h.b16 %v949
    %v1023 = vunpack.c.l.b16 %v950
    %v1024 = vunpack.c.l.b16 %v951
    %v1025 = vunpack.c.h.b16 %v951
    %v1026 = vunpack.c.l.b16 %v952
    %v1027 = vunpack.c.l.b16 %v953
    %v1028 = vunpack.c.h.b16 %v953
    %v1029 = vunpack.c.l.b16 %v954
    %v1030 = vunpack.c.l.b16 %v955
    %v1031 = vunpack.c.h.b16 %v955
    %v1032 = vunpack.c.l.b16 %v956
    %v1033 = vunpack.c.l.b16 %v957
    %v1034 = vunpack.c.h.b16 %v957
    %v1035 = vunpack.c.l.b16 %v958
    %v1036 = vunpack.c.l.b16 %v959
    %v1037 = vunpack.c.h.b16 %v959
    %v1038 = vunpack.c.l.b16 %v960
    %v1039 = vunpack.c.l.b16 %v961
    %v1040 = vunpack.c.h.b16 %v961
    %v1041 = vunpack.c.l.b16 %v962
    %v1042 = vunpack.c.l.b16 %v963
    %v1043 = vunpack.c.h.b16 %v963
    %v1044 = vunpack.c.l.b16 %v964
    %v1045 = vpack.c.b16 %v1000, %v997
    %v1046 = vpack.c.b16 %v1001, %v998
    %v1047 = vpack.c.b16 %v1002, %v999
    %v1048 = vpack.c.b16 %v1006, %v1003
    %v1049 = vpack.c.b16 %v1007, %v1004
    %v1050 = vpack.c.b16 %v1008, %v1005
    %v1051 = vpack.c.b16 %v1012, %v1009
    %v1052 = vpack.c.b16 %v1013, %v1010
    %v1053 = vpack.c.b16 %v1014, %v1011
    %v1054 = vpack.c.b16 %v1018, %v1015
    %v1055 = vpack.c.b16 %v1019, %v1016
    %v1056 = vpack.c.b16 %v1020, %v1017
    %v1057 = vpack.c.b16 %v1024, %v1021
    %v1058 = vpack.c.b16 %v1025, %v1022
    %v1059 = vpack.c.b16 %v1026, %v1023
    %v1060 = vpack.c.b16 %v1030, %v1027
    %v1061 = vpack.c.b16 %v1031, %v1028
    %v1062 = vpack.c.b16 %v1032, %v1029
    %v1063 = vpack.c.b16 %v1036, %v1033
    %v1064 = vpack.c.b16 %v1037, %v1034
    %v1065 = vpack.c.b16 %v1038, %v1035
    %v1066 = vpack.c.b16 %v1042, %v1039
    %v1067 = vpack.c.b16 %v1043, %v1040
    %v1068 = vpack.c.b16 %v1044, %v1041
    %1093 = vmatprep.subr.bf16.mxu0 %v1067
    %1094 = vmatpush1.bf16.msra.mxu0 %v1066
    %1095 = vmatprep.subr.bf16.mxu0 %v1064
    %1096 = vmatpush1.bf16.msra.mxu0 %v1063
    %1097 = vmatprep.subr.bf16.mxu0 %v1061
    %1098 = vmatpush1.bf16.msra.mxu0 %v1060
    %1099 = vmatprep.subr.bf16.mxu0 %v1058
    %1100 = vmatpush1.bf16.msra.mxu0 %v1057
    %1101 = vmatprep.subr.bf16.mxu0 %v1055
    %1102 = vmatpush1.bf16.msra.mxu0 %v1054
    %1103 = vmatprep.subr.bf16.mxu0 %v1052
    %1104 = vmatpush1.bf16.msra.mxu0 %v1051
    %1105 = vmatprep.subr.bf16.mxu0 %v1049
    %1106 = vmatpush1.bf16.msra.mxu0 %v1048
    %1107 = vmatprep.subr.bf16.mxu0 %v1046
    %1108 = vmatpush1.bf16.msra.mxu0 %v1045
    %1109 = vmatprep.subr.bf16.mxu0 0
    %1110 = vmatpush2.bf16.msra.mxu0 0
    %1111 = vmatprep.subr.bf16.mxu0 0
    %1112 = vmatpush2.bf16.msra.mxu0 0
    %1113 = vmatprep.subr.bf16.mxu0 0
    %1114 = vmatpush2.bf16.msra.mxu0 0
    %1115 = vmatprep.subr.bf16.mxu0 0
    %1116 = vmatpush2.bf16.msra.mxu0 0
    %1117 = vmatprep.subr.bf16.mxu0 0
    %1118 = vmatpush2.bf16.msra.mxu0 0
    %1119 = vmatprep.subr.bf16.mxu0 0
    %1120 = vmatpush2.bf16.msra.mxu0 0
    %1121 = vmatprep.subr.bf16.mxu0 0
    %1122 = vmatpush2.bf16.msra.mxu0 0
    %1123 = vmatprep.subr.bf16.mxu0 0
    %1124 = vmatpush2.bf16.msra.mxu0 0
    %1125 = vmatprep.mubr.bf16.mxu0 0
    %1126 = vmatmul.mubr.bf16.gmra.mxu0 %v929
    %v1127 = vpop.f32.mrf.mxu0
    %v1128 = vadd.f32 0.0, %v1127
    %v1129 = vpop.f32.mrf.mxu0
    %v1130 = vadd.f32 0.0, %v1129
    %v1131 = vpop.f32.mrf.mxu0
    %v1132 = vpop.f32.mrf.mxu0
    %1133 = vdwg.mxu0
    %1134 = vmatprep.subr.bf16.mxu0 0
    %1135 = vmatpush1.bf16.msra.mxu0 %v1068
    %1136 = vmatprep.subr.bf16.mxu0 0
    %1137 = vmatpush1.bf16.msra.mxu0 %v1065
    %1138 = vmatprep.subr.bf16.mxu0 0
    %1139 = vmatpush1.bf16.msra.mxu0 %v1062
    %1140 = vmatprep.subr.bf16.mxu0 0
    %1141 = vmatpush1.bf16.msra.mxu0 %v1059
    %1142 = vmatprep.subr.bf16.mxu0 0
    %1143 = vmatpush1.bf16.msra.mxu0 %v1056
    %1144 = vmatprep.subr.bf16.mxu0 0
    %1145 = vmatpush1.bf16.msra.mxu0 %v1053
    %1146 = vmatprep.subr.bf16.mxu0 0
    %1147 = vmatpush1.bf16.msra.mxu0 %v1050
    %1148 = vmatprep.subr.bf16.mxu0 0
    %1149 = vmatpush1.bf16.msra.mxu0 %v1047
    %1150 = vmatprep.subr.bf16.mxu0 0
    %1151 = vmatpush2.bf16.msra.mxu0 0
    %1152 = vmatprep.subr.bf16.mxu0 0
    %1153 = vmatpush2.bf16.msra.mxu0 0
    %1154 = vmatprep.subr.bf16.mxu0 0
    %1155 = vmatpush2.bf16.msra.mxu0 0
    %1156 = vmatprep.subr.bf16.mxu0 0
    %1157 = vmatpush2.bf16.msra.mxu0 0
    %1158 = vmatprep.subr.bf16.mxu0 0
    %1159 = vmatpush2.bf16.msra.mxu0 0
    %1160 = vmatprep.subr.bf16.mxu0 0
    %1161 = vmatpush2.bf16.msra.mxu0 0
    %1162 = vmatprep.subr.bf16.mxu0 0
    %1163 = vmatpush2.bf16.msra.mxu0 0
    %1164 = vmatprep.subr.bf16.mxu0 0
    %1165 = vmatpush2.bf16.msra.mxu0 0
    %1166 = vmatprep.mubr.bf16.mxu0 0
    %1167 = vmatmul.mubr.bf16.gmra.mxu0 %v929
    %v1168 = vpop.f32.mrf.mxu0
    %v1169 = vadd.f32 0.0, %v1168
    %v1170 = vpop.f32.mrf.mxu0
    %v1171 = vpop.f32.mrf.mxu0
    %v1172 = vpop.f32.mrf.mxu0
    %1173 = vdwg.mxu0
    %s1174 = scalar_lea.vmem [#allocation2], 24
    %v1175 = vld [vmem:[%s1174] sm:$0xff]
    %v1176 = vld [vmem:[%s1174 + $0x8] sm:$0xff]
    %v1177 = vld [vmem:[%s1174 + $0x10] sm:$0xff]
    %s1178 = scalar_lea.vmem [#allocation2], 144
    %v1179 = vld [vmem:[%s1178] sm:$0xff]
    %v1180 = vld [vmem:[%s1178 + $0x8] sm:$0xff]
    %v1181 = vld [vmem:[%s1178 + $0x10] sm:$0xff]
    %v1182 = vsel %vm646, %v1175, %v1179
    %v1183 = vsel %vm647, %v1176, %v1180
    %v1184 = vsel %vm648, %v1177, %v1181
    %v1185 = vadd.f32 %v1182, %v1128
    %v1186 = vxor.u32 %v1185, 2147483648
    %v1187 = vmul.f32 %v1186, 1.442695
    %v1188 = vpow.pop %v1187
    %v1189 = vadd.f32 %v1188, 1.0
    %v1190 = vrcp.pop %v1189
    %v1191 = vmul.f32 1.0, %v1190
    %v1192 = vadd.f32 %v1183, %v1130
    %v1193 = vxor.u32 %v1192, 2147483648
    %v1194 = vmul.f32 %v1193, 1.442695
    %v1195 = vpow.pop %v1194
    %v1196 = vadd.f32 %v1195, 1.0
    %v1197 = vrcp.pop %v1196
    %v1198 = vmul.f32 1.0, %v1197
    %v1199 = vadd.f32 %v1169, %v654
    %v1200 = vmul.f32 %v1191, %v1199
    %v1201 = vadd.f32 %v1184, %v1200
    %v1202 = vtanh.pop %v1201
    %v1203 = vsub.f32 1.0, %v1198
    %v1204 = vmul.f32 %v1203, %v1202
    %v1205 = vmul.f32 %v1198, %v928
    %v1206 = vadd.f32 %v1204, %v1205
    %v1207 = vpack.c.bf16 %v1206, %v1206
    %s1208 = scalar_lea.vmem %s8, 4
    %1209 = vst [vmem:[%s1208] sm:$0xf] %v1207
    %s1210 = scalar_lea.vmem %s9, 24
    %1211 = vst [vmem:[%s1210] sm:$0xf] %v1207
    %v1212 = vld [vmem:[%s3] sm:$0xff]
    %v1213 = vld [vmem:[%s3 + $0x8] sm:$0xf]
    %v1214 = vld [vmem:[%s3 + $0xc] sm:$0xff]
    %v1215 = vld [vmem:[%s3 + $0x14] sm:$0xf]
    %v1216 = vld [vmem:[%s3 + $0x18] sm:$0xff]
    %v1217 = vld [vmem:[%s3 + $0x20] sm:$0xf]
    %v1218 = vld [vmem:[%s3 + $0x24] sm:$0xff]
    %v1219 = vld [vmem:[%s3 + $0x2c] sm:$0xf]
    %v1220 = vld [vmem:[%s3 + $0x30] sm:$0xff]
    %v1221 = vld [vmem:[%s3 + $0x38] sm:$0xf]
    %v1222 = vld [vmem:[%s3 + $0x3c] sm:$0xff]
    %v1223 = vld [vmem:[%s3 + $0x44] sm:$0xf]
    %v1224 = vld [vmem:[%s3 + $0x48] sm:$0xff]
    %v1225 = vld [vmem:[%s3 + $0x50] sm:$0xf]
    %v1226 = vld [vmem:[%s3 + $0x54] sm:$0xff]
    %v1227 = vld [vmem:[%s3 + $0x5c] sm:$0xf]
    %v1228 = vld [vmem:[%s3 + $0x60] sm:$0xff]
    %v1229 = vld [vmem:[%s3 + $0x68] sm:$0xf]
    %v1230 = vld [vmem:[%s3 + $0x6c] sm:$0xff]
    %v1231 = vld [vmem:[%s3 + $0x74] sm:$0xf]
    %v1232 = vld [vmem:[%s3 + $0x78] sm:$0xff]
    %v1233 = vld [vmem:[%s3 + $0x80] sm:$0xf]
    %v1234 = vld [vmem:[%s3 + $0x84] sm:$0xff]
    %v1235 = vld [vmem:[%s3 + $0x8c] sm:$0xf]
    %v1236 = vld [vmem:[%s3 + $0x90] sm:$0xff]
    %v1237 = vld [vmem:[%s3 + $0x98] sm:$0xf]
    %v1238 = vld [vmem:[%s3 + $0x9c] sm:$0xff]
    %v1239 = vld [vmem:[%s3 + $0xa4] sm:$0xf]
    %v1240 = vld [vmem:[%s3 + $0xa8] sm:$0xff]
    %v1241 = vld [vmem:[%s3 + $0xb0] sm:$0xf]
    %v1242 = vld [vmem:[%s3 + $0xb4] sm:$0xff]
    %v1243 = vld [vmem:[%s3 + $0xbc] sm:$0xf]
    %v1276 = vunpack.c.l.b16 %v1212
    %v1277 = vunpack.c.h.b16 %v1212
    %v1278 = vunpack.c.l.b16 %v1213
    %v1279 = vunpack.c.l.b16 %v1214
    %v1280 = vunpack.c.h.b16 %v1214
    %v1281 = vunpack.c.l.b16 %v1215
    %v1282 = vunpack.c.l.b16 %v1216
    %v1283 = vunpack.c.h.b16 %v1216
    %v1284 = vunpack.c.l.b16 %v1217
    %v1285 = vunpack.c.l.b16 %v1218
    %v1286 = vunpack.c.h.b16 %v1218
    %v1287 = vunpack.c.l.b16 %v1219
    %v1288 = vunpack.c.l.b16 %v1220
    %v1289 = vunpack.c.h.b16 %v1220
    %v1290 = vunpack.c.l.b16 %v1221
    %v1291 = vunpack.c.l.b16 %v1222
    %v1292 = vunpack.c.h.b16 %v1222
    %v1293 = vunpack.c.l.b16 %v1223
    %v1294 = vunpack.c.l.b16 %v1224
    %v1295 = vunpack.c.h.b16 %v1224
    %v1296 = vunpack.c.l.b16 %v1225
    %v1297 = vunpack.c.l.b16 %v1226
    %v1298 = vunpack.c.h.b16 %v1226
    %v1299 = vunpack.c.l.b16 %v1227
    %v1300 = vunpack.c.l.b16 %v1228
    %v1301 = vunpack.c.h.b16 %v1228
    %v1302 = vunpack.c.l.b16 %v1229
    %v1303 = vunpack.c.l.b16 %v1230
    %v1304 = vunpack.c.h.b16 %v1230
    %v1305 = vunpack.c.l.b16 %v1231
    %v1306 = vunpack.c.l.b16 %v1232
    %v1307 = vunpack.c.h.b16 %v1232
    %v1308 = vunpack.c.l.b16 %v1233
    %v1309 = vunpack.c.l.b16 %v1234
    %v1310 = vunpack.c.h.b16 %v1234
    %v1311 = vunpack.c.l.b16 %v1235
    %v1312 = vunpack.c.l.b16 %v1236
    %v1313 = vunpack.c.h.b16 %v1236
    %v1314 = vunpack.c.l.b16 %v1237
    %v1315 = vunpack.c.l.b16 %v1238
    %v1316 = vunpack.c.h.b16 %v1238
    %v1317 = vunpack.c.l.b16 %v1239
    %v1318 = vunpack.c.l.b16 %v1240
    %v1319 = vunpack.c.h.b16 %v1240
    %v1320 = vunpack.c.l.b16 %v1241
    %v1321 = vunpack.c.l.b16 %v1242
    %v1322 = vunpack.c.h.b16 %v1242
    %v1323 = vunpack.c.l.b16 %v1243
    %v1324 = vpack.c.b16 %v1279, %v1276
    %v1325 = vpack.c.b16 %v1280, %v1277
    %v1326 = vpack.c.b16 %v1281, %v1278
    %v1327 = vpack.c.b16 %v1285, %v1282
    %v1328 = vpack.c.b16 %v1286, %v1283
    %v1329 = vpack.c.b16 %v1287, %v1284
    %v1330 = vpack.c.b16 %v1291, %v1288
    %v1331 = vpack.c.b16 %v1292, %v1289
    %v1332 = vpack.c.b16 %v1293, %v1290
    %v1333 = vpack.c.b16 %v1297, %v1294
    %v1334 = vpack.c.b16 %v1298, %v1295
    %v1335 = vpack.c.b16 %v1299, %v1296
    %v1336 = vpack.c.b16 %v1303, %v1300
    %v1337 = vpack.c.b16 %v1304, %v1301
    %v1338 = vpack.c.b16 %v1305, %v1302
    %v1339 = vpack.c.b16 %v1309, %v1306
    %v1340 = vpack.c.b16 %v1310, %v1307
    %v1341 = vpack.c.b16 %v1311, %v1308
    %v1342 = vpack.c.b16 %v1315, %v1312
    %v1343 = vpack.c.b16 %v1316, %v1313
    %v1344 = vpack.c.b16 %v1317, %v1314
    %v1345 = vpack.c.b16 %v1321, %v1318
    %v1346 = vpack.c.b16 %v1322, %v1319
    %v1347 = vpack.c.b16 %v1323, %v1320
    %1372 = vmatprep.subr.bf16.mxu0 %v1346
    %1373 = vmatpush1.bf16.msra.mxu0 %v1345
    %1374 = vmatprep.subr.bf16.mxu0 %v1343
    %1375 = vmatpush1.bf16.msra.mxu0 %v1342
    %1376 = vmatprep.subr.bf16.mxu0 %v1340
    %1377 = vmatpush1.bf16.msra.mxu0 %v1339
    %1378 = vmatprep.subr.bf16.mxu0 %v1337
    %1379 = vmatpush1.bf16.msra.mxu0 %v1336
    %1380 = vmatprep.subr.bf16.mxu0 %v1334
    %1381 = vmatpush1.bf16.msra.mxu0 %v1333
    %1382 = vmatprep.subr.bf16.mxu0 %v1331
    %1383 = vmatpush1.bf16.msra.mxu0 %v1330
    %1384 = vmatprep.subr.bf16.mxu0 %v1328
    %1385 = vmatpush1.bf16.msra.mxu0 %v1327
    %1386 = vmatprep.subr.bf16.mxu0 %v1325
    %1387 = vmatpush1.bf16.msra.mxu0 %v1324
    %1388 = vmatprep.subr.bf16.mxu0 0
    %1389 = vmatpush2.bf16.msra.mxu0 0
    %1390 = vmatprep.subr.bf16.mxu0 0
    %1391 = vmatpush2.bf16.msra.mxu0 0
    %1392 = vmatprep.subr.bf16.mxu0 0
    %1393 = vmatpush2.bf16.msra.mxu0 0
    %1394 = vmatprep.subr.bf16.mxu0 0
    %1395 = vmatpush2.bf16.msra.mxu0 0
    %1396 = vmatprep.subr.bf16.mxu0 0
    %1397 = vmatpush2.bf16.msra.mxu0 0
    %1398 = vmatprep.subr.bf16.mxu0 0
    %1399 = vmatpush2.bf16.msra.mxu0 0
    %1400 = vmatprep.subr.bf16.mxu0 0
    %1401 = vmatpush2.bf16.msra.mxu0 0
    %1402 = vmatprep.subr.bf16.mxu0 0
    %1403 = vmatpush2.bf16.msra.mxu0 0
    %1404 = vmatprep.mubr.bf16.mxu0 0
    %1405 = vmatmul.mubr.bf16.gmra.mxu0 %v1207
    %v1406 = vpop.f32.mrf.mxu0
    %v1407 = vadd.f32 0.0, %v1406
    %v1408 = vpop.f32.mrf.mxu0
    %v1409 = vadd.f32 0.0, %v1408
    %v1410 = vpop.f32.mrf.mxu0
    %v1411 = vpop.f32.mrf.mxu0
    %1412 = vdwg.mxu0
    %1413 = vmatprep.subr.bf16.mxu0 0
    %1414 = vmatpush1.bf16.msra.mxu0 %v1347
    %1415 = vmatprep.subr.bf16.mxu0 0
    %1416 = vmatpush1.bf16.msra.mxu0 %v1344
    %1417 = vmatprep.subr.bf16.mxu0 0
    %1418 = vmatpush1.bf16.msra.mxu0 %v1341
    %1419 = vmatprep.subr.bf16.mxu0 0
    %1420 = vmatpush1.bf16.msra.mxu0 %v1338
    %1421 = vmatprep.subr.bf16.mxu0 0
    %1422 = vmatpush1.bf16.msra.mxu0 %v1335
    %1423 = vmatprep.subr.bf16.mxu0 0
    %1424 = vmatpush1.bf16.msra.mxu0 %v1332
    %1425 = vmatprep.subr.bf16.mxu0 0
    %1426 = vmatpush1.bf16.msra.mxu0 %v1329
    %1427 = vmatprep.subr.bf16.mxu0 0
    %1428 = vmatpush1.bf16.msra.mxu0 %v1326
    %1429 = vmatprep.subr.bf16.mxu0 0
    %1430 = vmatpush2.bf16.msra.mxu0 0
    %1431 = vmatprep.subr.bf16.mxu0 0
    %1432 = vmatpush2.bf16.msra.mxu0 0
    %1433 = vmatprep.subr.bf16.mxu0 0
    %1434 = vmatpush2.bf16.msra.mxu0 0
    %1435 = vmatprep.subr.bf16.mxu0 0
    %1436 = vmatpush2.bf16.msra.mxu0 0
    %1437 = vmatprep.subr.bf16.mxu0 0
    %1438 = vmatpush2.bf16.msra.mxu0 0
    %1439 = vmatprep.subr.bf16.mxu0 0
    %1440 = vmatpush2.bf16.msra.mxu0 0
    %1441 = vmatprep.subr.bf16.mxu0 0
    %1442 = vmatpush2.bf16.msra.mxu0 0
    %1443 = vmatprep.subr.bf16.mxu0 0
    %1444 = vmatpush2.bf16.msra.mxu0 0
    %1445 = vmatprep.mubr.bf16.mxu0 0
    %1446 = vmatmul.mubr.bf16.gmra.mxu0 %v1207
    %v1447 = vpop.f32.mrf.mxu0
    %v1448 = vadd.f32 0.0, %v1447
    %v1449 = vpop.f32.mrf.mxu0
    %v1450 = vpop.f32.mrf.mxu0
    %v1451 = vpop.f32.mrf.mxu0
    %1452 = vdwg.mxu0
    %s1453 = scalar_lea.vmem [#allocation2], 48
    %v1454 = vld [vmem:[%s1453] sm:$0xff]
    %v1455 = vld [vmem:[%s1453 + $0x8] sm:$0xff]
    %v1456 = vld [vmem:[%s1453 + $0x10] sm:$0xff]
    %s1457 = scalar_lea.vmem [#allocation2], 120
    %v1458 = vld [vmem:[%s1457] sm:$0xff]
    %v1459 = vld [vmem:[%s1457 + $0x8] sm:$0xff]
    %v1460 = vld [vmem:[%s1457 + $0x10] sm:$0xff]
    %v1461 = vsel %vm646, %v1454, %v1458
    %v1462 = vsel %vm647, %v1455, %v1459
    %v1463 = vsel %vm648, %v1456, %v1460
    %v1464 = vadd.f32 %v1461, %v1407
    %v1465 = vxor.u32 %v1464, 2147483648
    %v1466 = vmul.f32 %v1465, 1.442695
    %v1467 = vpow.pop %v1466
    %v1468 = vadd.f32 %v1467, 1.0
    %v1469 = vrcp.pop %v1468
    %v1470 = vmul.f32 1.0, %v1469
    %v1471 = vadd.f32 %v1462, %v1409
    %v1472 = vxor.u32 %v1471, 2147483648
    %v1473 = vmul.f32 %v1472, 1.442695
    %v1474 = vpow.pop %v1473
    %v1475 = vadd.f32 %v1474, 1.0
    %v1476 = vrcp.pop %v1475
    %v1477 = vmul.f32 1.0, %v1476
    %v1478 = vadd.f32 %v1448, %v654
    %v1479 = vmul.f32 %v1470, %v1478
    %v1480 = vadd.f32 %v1463, %v1479
    %v1481 = vtanh.pop %v1480
    %v1482 = vsub.f32 1.0, %v1477
    %v1483 = vmul.f32 %v1482, %v1481
    %v1484 = vmul.f32 %v1477, %v1206
    %v1485 = vadd.f32 %v1483, %v1484
    %v1486 = vpack.c.bf16 %v1485, %v1485
    %s1487 = scalar_lea.vmem %s8, 8
    %1488 = vst [vmem:[%s1487] sm:$0xf] %v1486
    %s1489 = scalar_lea.vmem %s9, 20
    %1490 = vst [vmem:[%s1489] sm:$0xf] %v1486
    %v1491 = vld [vmem:[%s3] sm:$0xff]
    %v1492 = vld [vmem:[%s3 + $0x8] sm:$0xf]
    %v1493 = vld [vmem:[%s3 + $0xc] sm:$0xff]
    %v1494 = vld [vmem:[%s3 + $0x14] sm:$0xf]
    %v1495 = vld [vmem:[%s3 + $0x18] sm:$0xff]
    %v1496 = vld [vmem:[%s3 + $0x20] sm:$0xf]
    %v1497 = vld [vmem:[%s3 + $0x24] sm:$0xff]
    %v1498 = vld [vmem:[%s3 + $0x2c] sm:$0xf]
    %v1499 = vld [vmem:[%s3 + $0x30] sm:$0xff]
    %v1500 = vld [vmem:[%s3 + $0x38] sm:$0xf]
    %v1501 = vld [vmem:[%s3 + $0x3c] sm:$0xff]
    %v1502 = vld [vmem:[%s3 + $0x44] sm:$0xf]
    %v1503 = vld [vmem:[%s3 + $0x48] sm:$0xff]
    %v1504 = vld [vmem:[%s3 + $0x50] sm:$0xf]
    %v1505 = vld [vmem:[%s3 + $0x54] sm:$0xff]
    %v1506 = vld [vmem:[%s3 + $0x5c] sm:$0xf]
    %v1507 = vld [vmem:[%s3 + $0x60] sm:$0xff]
    %v1508 = vld [vmem:[%s3 + $0x68] sm:$0xf]
    %v1509 = vld [vmem:[%s3 + $0x6c] sm:$0xff]
    %v1510 = vld [vmem:[%s3 + $0x74] sm:$0xf]
    %v1511 = vld [vmem:[%s3 + $0x78] sm:$0xff]
    %v1512 = vld [vmem:[%s3 + $0x80] sm:$0xf]
    %v1513 = vld [vmem:[%s3 + $0x84] sm:$0xff]
    %v1514 = vld [vmem:[%s3 + $0x8c] sm:$0xf]
    %v1515 = vld [vmem:[%s3 + $0x90] sm:$0xff]
    %v1516 = vld [vmem:[%s3 + $0x98] sm:$0xf]
    %v1517 = vld [vmem:[%s3 + $0x9c] sm:$0xff]
    %v1518 = vld [vmem:[%s3 + $0xa4] sm:$0xf]
    %v1519 = vld [vmem:[%s3 + $0xa8] sm:$0xff]
    %v1520 = vld [vmem:[%s3 + $0xb0] sm:$0xf]
    %v1521 = vld [vmem:[%s3 + $0xb4] sm:$0xff]
    %v1522 = vld [vmem:[%s3 + $0xbc] sm:$0xf]
    %v1555 = vunpack.c.l.b16 %v1491
    %v1556 = vunpack.c.h.b16 %v1491
    %v1557 = vunpack.c.l.b16 %v1492
    %v1558 = vunpack.c.l.b16 %v1493
    %v1559 = vunpack.c.h.b16 %v1493
    %v1560 = vunpack.c.l.b16 %v1494
    %v1561 = vunpack.c.l.b16 %v1495
    %v1562 = vunpack.c.h.b16 %v1495
    %v1563 = vunpack.c.l.b16 %v1496
    %v1564 = vunpack.c.l.b16 %v1497
    %v1565 = vunpack.c.h.b16 %v1497
    %v1566 = vunpack.c.l.b16 %v1498
    %v1567 = vunpack.c.l.b16 %v1499
    %v1568 = vunpack.c.h.b16 %v1499
    %v1569 = vunpack.c.l.b16 %v1500
    %v1570 = vunpack.c.l.b16 %v1501
    %v1571 = vunpack.c.h.b16 %v1501
    %v1572 = vunpack.c.l.b16 %v1502
    %v1573 = vunpack.c.l.b16 %v1503
    %v1574 = vunpack.c.h.b16 %v1503
    %v1575 = vunpack.c.l.b16 %v1504
    %v1576 = vunpack.c.l.b16 %v1505
    %v1577 = vunpack.c.h.b16 %v1505
    %v1578 = vunpack.c.l.b16 %v1506
    %v1579 = vunpack.c.l.b16 %v1507
    %v1580 = vunpack.c.h.b16 %v1507
    %v1581 = vunpack.c.l.b16 %v1508
    %v1582 = vunpack.c.l.b16 %v1509
    %v1583 = vunpack.c.h.b16 %v1509
    %v1584 = vunpack.c.l.b16 %v1510
    %v1585 = vunpack.c.l.b16 %v1511
    %v1586 = vunpack.c.h.b16 %v1511
    %v1587 = vunpack.c.l.b16 %v1512
    %v1588 = vunpack.c.l.b16 %v1513
    %v1589 = vunpack.c.h.b16 %v1513
    %v1590 = vunpack.c.l.b16 %v1514
    %v1591 = vunpack.c.l.b16 %v1515
    %v1592 = vunpack.c.h.b16 %v1515
    %v1593 = vunpack.c.l.b16 %v1516
    %v1594 = vunpack.c.l.b16 %v1517
    %v1595 = vunpack.c.h.b16 %v1517
    %v1596 = vunpack.c.l.b16 %v1518
    %v1597 = vunpack.c.l.b16 %v1519
    %v1598 = vunpack.c.h.b16 %v1519
    %v1599 = vunpack.c.l.b16 %v1520
    %v1600 = vunpack.c.l.b16 %v1521
    %v1601 = vunpack.c.h.b16 %v1521
    %v1602 = vunpack.c.l.b16 %v1522
    %v1603 = vpack.c.b16 %v1558, %v1555
    %v1604 = vpack.c.b16 %v1559, %v1556
    %v1605 = vpack.c.b16 %v1560, %v1557
    %v1606 = vpack.c.b16 %v1564, %v1561
    %v1607 = vpack.c.b16 %v1565, %v1562
    %v1608 = vpack.c.b16 %v1566, %v1563
    %v1609 = vpack.c.b16 %v1570, %v1567
    %v1610 = vpack.c.b16 %v1571, %v1568
    %v1611 = vpack.c.b16 %v1572, %v1569
    %v1612 = vpack.c.b16 %v1576, %v1573
    %v1613 = vpack.c.b16 %v1577, %v1574
    %v1614 = vpack.c.b16 %v1578, %v1575
    %v1615 = vpack.c.b16 %v1582, %v1579
    %v1616 = vpack.c.b16 %v1583, %v1580
    %v1617 = vpack.c.b16 %v1584, %v1581
    %v1618 = vpack.c.b16 %v1588, %v1585
    %v1619 = vpack.c.b16 %v1589, %v1586
    %v1620 = vpack.c.b16 %v1590, %v1587
    %v1621 = vpack.c.b16 %v1594, %v1591
    %v1622 = vpack.c.b16 %v1595, %v1592
    %v1623 = vpack.c.b16 %v1596, %v1593
    %v1624 = vpack.c.b16 %v1600, %v1597
    %v1625 = vpack.c.b16 %v1601, %v1598
    %v1626 = vpack.c.b16 %v1602, %v1599
    %1651 = vmatprep.subr.bf16.mxu0 %v1625
    %1652 = vmatpush1.bf16.msra.mxu0 %v1624
    %1653 = vmatprep.subr.bf16.mxu0 %v1622
    %1654 = vmatpush1.bf16.msra.mxu0 %v1621
    %1655 = vmatprep.subr.bf16.mxu0 %v1619
    %1656 = vmatpush1.bf16.msra.mxu0 %v1618
    %1657 = vmatprep.subr.bf16.mxu0 %v1616
    %1658 = vmatpush1.bf16.msra.mxu0 %v1615
    %1659 = vmatprep.subr.bf16.mxu0 %v1613
    %1660 = vmatpush1.bf16.msra.mxu0 %v1612
    %1661 = vmatprep.subr.bf16.mxu0 %v1610
    %1662 = vmatpush1.bf16.msra.mxu0 %v1609
    %1663 = vmatprep.subr.bf16.mxu0 %v1607
    %1664 = vmatpush1.bf16.msra.mxu0 %v1606
    %1665 = vmatprep.subr.bf16.mxu0 %v1604
    %1666 = vmatpush1.bf16.msra.mxu0 %v1603
    %1667 = vmatprep.subr.bf16.mxu0 0
    %1668 = vmatpush2.bf16.msra.mxu0 0
    %1669 = vmatprep.subr.bf16.mxu0 0
    %1670 = vmatpush2.bf16.msra.mxu0 0
    %1671 = vmatprep.subr.bf16.mxu0 0
    %1672 = vmatpush2.bf16.msra.mxu0 0
    %1673 = vmatprep.subr.bf16.mxu0 0
    %1674 = vmatpush2.bf16.msra.mxu0 0
    %1675 = vmatprep.subr.bf16.mxu0 0
    %1676 = vmatpush2.bf16.msra.mxu0 0
    %1677 = vmatprep.subr.bf16.mxu0 0
    %1678 = vmatpush2.bf16.msra.mxu0 0
    %1679 = vmatprep.subr.bf16.mxu0 0
    %1680 = vmatpush2.bf16.msra.mxu0 0
    %1681 = vmatprep.subr.bf16.mxu0 0
    %1682 = vmatpush2.bf16.msra.mxu0 0
    %1683 = vmatprep.mubr.bf16.mxu0 0
    %1684 = vmatmul.mubr.bf16.gmra.mxu0 %v1486
    %v1685 = vpop.f32.mrf.mxu0
    %v1686 = vadd.f32 0.0, %v1685
    %v1687 = vpop.f32.mrf.mxu0
    %v1688 = vadd.f32 0.0, %v1687
    %v1689 = vpop.f32.mrf.mxu0
    %v1690 = vpop.f32.mrf.mxu0
    %1691 = vdwg.mxu0
    %1692 = vmatprep.subr.bf16.mxu0 0
    %1693 = vmatpush1.bf16.msra.mxu0 %v1626
    %1694 = vmatprep.subr.bf16.mxu0 0
    %1695 = vmatpush1.bf16.msra.mxu0 %v1623
    %1696 = vmatprep.subr.bf16.mxu0 0
    %1697 = vmatpush1.bf16.msra.mxu0 %v1620
    %1698 = vmatprep.subr.bf16.mxu0 0
    %1699 = vmatpush1.bf16.msra.mxu0 %v1617
    %1700 = vmatprep.subr.bf16.mxu0 0
    %1701 = vmatpush1.bf16.msra.mxu0 %v1614
    %1702 = vmatprep.subr.bf16.mxu0 0
    %1703 = vmatpush1.bf16.msra.mxu0 %v1611
    %1704 = vmatprep.subr.bf16.mxu0 0
    %1705 = vmatpush1.bf16.msra.mxu0 %v1608
    %1706 = vmatprep.subr.bf16.mxu0 0
    %1707 = vmatpush1.bf16.msra.mxu0 %v1605
    %1708 = vmatprep.subr.bf16.mxu0 0
    %1709 = vmatpush2.bf16.msra.mxu0 0
    %1710 = vmatprep.subr.bf16.mxu0 0
    %1711 = vmatpush2.bf16.msra.mxu0 0
    %1712 = vmatprep.subr.bf16.mxu0 0
    %1713 = vmatpush2.bf16.msra.mxu0 0
    %1714 = vmatprep.subr.bf16.mxu0 0
    %1715 = vmatpush2.bf16.msra.mxu0 0
    %1716 = vmatprep.subr.bf16.mxu0 0
    %1717 = vmatpush2.bf16.msra.mxu0 0
    %1718 = vmatprep.subr.bf16.mxu0 0
    %1719 = vmatpush2.bf16.msra.mxu0 0
    %1720 = vmatprep.subr.bf16.mxu0 0
    %1721 = vmatpush2.bf16.msra.mxu0 0
    %1722 = vmatprep.subr.bf16.mxu0 0
    %1723 = vmatpush2.bf16.msra.mxu0 0
    %1724 = vmatprep.mubr.bf16.mxu0 0
    %1725 = vmatmul.mubr.bf16.gmra.mxu0 %v1486
    %v1726 = vpop.f32.mrf.mxu0
    %v1727 = vadd.f32 0.0, %v1726
    %v1728 = vpop.f32.mrf.mxu0
    %v1729 = vpop.f32.mrf.mxu0
    %v1730 = vpop.f32.mrf.mxu0
    %1731 = vdwg.mxu0
    %s1732 = scalar_lea.vmem [#allocation2], 72
    %v1733 = vld [vmem:[%s1732] sm:$0xff]
    %v1734 = vld [vmem:[%s1732 + $0x8] sm:$0xff]
    %v1735 = vld [vmem:[%s1732 + $0x10] sm:$0xff]
    %s1736 = scalar_lea.vmem [#allocation2], 96
    %v1737 = vld [vmem:[%s1736] sm:$0xff]
    %v1738 = vld [vmem:[%s1736 + $0x8] sm:$0xff]
    %v1739 = vld [vmem:[%s1736 + $0x10] sm:$0xff]
    %v1740 = vsel %vm646, %v1733, %v1737
    %v1741 = vsel %vm647, %v1734, %v1738
    %v1742 = vsel %vm648, %v1735, %v1739
    %v1743 = vadd.f32 %v1740, %v1686
    %v1744 = vxor.u32 %v1743, 2147483648
    %v1745 = vmul.f32 %v1744, 1.442695
    %v1746 = vpow.pop %v1745
    %v1747 = vadd.f32 %v1746, 1.0
    %v1748 = vrcp.pop %v1747
    %v1749 = vmul.f32 1.0, %v1748
    %v1750 = vadd.f32 %v1741, %v1688
    %v1751 = vxor.u32 %v1750, 2147483648
    %v1752 = vmul.f32 %v1751, 1.442695
    %v1753 = vpow.pop %v1752
    %v1754 = vadd.f32 %v1753, 1.0
    %v1755 = vrcp.pop %v1754
    %v1756 = vmul.f32 1.0, %v1755
    %v1757 = vadd.f32 %v1727, %v654
    %v1758 = vmul.f32 %v1749, %v1757
    %v1759 = vadd.f32 %v1742, %v1758
    %v1760 = vtanh.pop %v1759
    %v1761 = vsub.f32 1.0, %v1756
    %v1762 = vmul.f32 %v1761, %v1760
    %v1763 = vmul.f32 %v1756, %v1485
    %v1764 = vadd.f32 %v1762, %v1763
    %v1765 = vpack.c.bf16 %v1764, %v1764
    %s1766 = scalar_lea.vmem %s8, 12
    %1767 = vst [vmem:[%s1766] sm:$0xf] %v1765
    %s1768 = scalar_lea.vmem %s9, 16
    %1769 = vst [vmem:[%s1768] sm:$0xf] %v1765
    %v1770 = vld [vmem:[%s3] sm:$0xff]
    %v1771 = vld [vmem:[%s3 + $0x8] sm:$0xf]
    %v1772 = vld [vmem:[%s3 + $0xc] sm:$0xff]
    %v1773 = vld [vmem:[%s3 + $0x14] sm:$0xf]
    %v1774 = vld [vmem:[%s3 + $0x18] sm:$0xff]
    %v1775 = vld [vmem:[%s3 + $0x20] sm:$0xf]
    %v1776 = vld [vmem:[%s3 + $0x24] sm:$0xff]
    %v1777 = vld [vmem:[%s3 + $0x2c] sm:$0xf]
    %v1778 = vld [vmem:[%s3 + $0x30] sm:$0xff]
    %v1779 = vld [vmem:[%s3 + $0x38] sm:$0xf]
    %v1780 = vld [vmem:[%s3 + $0x3c] sm:$0xff]
    %v1781 = vld [vmem:[%s3 + $0x44] sm:$0xf]
    %v1782 = vld [vmem:[%s3 + $0x48] sm:$0xff]
    %v1783 = vld [vmem:[%s3 + $0x50] sm:$0xf]
    %v1784 = vld [vmem:[%s3 + $0x54] sm:$0xff]
    %v1785 = vld [vmem:[%s3 + $0x5c] sm:$0xf]
    %v1786 = vld [vmem:[%s3 + $0x60] sm:$0xff]
    %v1787 = vld [vmem:[%s3 + $0x68] sm:$0xf]
    %v1788 = vld [vmem:[%s3 + $0x6c] sm:$0xff]
    %v1789 = vld [vmem:[%s3 + $0x74] sm:$0xf]
    %v1790 = vld [vmem:[%s3 + $0x78] sm:$0xff]
    %v1791 = vld [vmem:[%s3 + $0x80] sm:$0xf]
    %v1792 = vld [vmem:[%s3 + $0x84] sm:$0xff]
    %v1793 = vld [vmem:[%s3 + $0x8c] sm:$0xf]
    %v1794 = vld [vmem:[%s3 + $0x90] sm:$0xff]
    %v1795 = vld [vmem:[%s3 + $0x98] sm:$0xf]
    %v1796 = vld [vmem:[%s3 + $0x9c] sm:$0xff]
    %v1797 = vld [vmem:[%s3 + $0xa4] sm:$0xf]
    %v1798 = vld [vmem:[%s3 + $0xa8] sm:$0xff]
    %v1799 = vld [vmem:[%s3 + $0xb0] sm:$0xf]
    %v1800 = vld [vmem:[%s3 + $0xb4] sm:$0xff]
    %v1801 = vld [vmem:[%s3 + $0xbc] sm:$0xf]
    %v1834 = vunpack.c.l.b16 %v1770
    %v1835 = vunpack.c.h.b16 %v1770
    %v1836 = vunpack.c.l.b16 %v1771
    %v1837 = vunpack.c.l.b16 %v1772
    %v1838 = vunpack.c.h.b16 %v1772
    %v1839 = vunpack.c.l.b16 %v1773
    %v1840 = vunpack.c.l.b16 %v1774
    %v1841 = vunpack.c.h.b16 %v1774
    %v1842 = vunpack.c.l.b16 %v1775
    %v1843 = vunpack.c.l.b16 %v1776
    %v1844 = vunpack.c.h.b16 %v1776
    %v1845 = vunpack.c.l.b16 %v1777
    %v1846 = vunpack.c.l.b16 %v1778
    %v1847 = vunpack.c.h.b16 %v1778
    %v1848 = vunpack.c.l.b16 %v1779
    %v1849 = vunpack.c.l.b16 %v1780
    %v1850 = vunpack.c.h.b16 %v1780
    %v1851 = vunpack.c.l.b16 %v1781
    %v1852 = vunpack.c.l.b16 %v1782
    %v1853 = vunpack.c.h.b16 %v1782
    %v1854 = vunpack.c.l.b16 %v1783
    %v1855 = vunpack.c.l.b16 %v1784
    %v1856 = vunpack.c.h.b16 %v1784
    %v1857 = vunpack.c.l.b16 %v1785
    %v1858 = vunpack.c.l.b16 %v1786
    %v1859 = vunpack.c.h.b16 %v1786
    %v1860 = vunpack.c.l.b16 %v1787
    %v1861 = vunpack.c.l.b16 %v1788
    %v1862 = vunpack.c.h.b16 %v1788
    %v1863 = vunpack.c.l.b16 %v1789
    %v1864 = vunpack.c.l.b16 %v1790
    %v1865 = vunpack.c.h.b16 %v1790
    %v1866 = vunpack.c.l.b16 %v1791
    %v1867 = vunpack.c.l.b16 %v1792
    %v1868 = vunpack.c.h.b16 %v1792
    %v1869 = vunpack.c.l.b16 %v1793
    %v1870 = vunpack.c.l.b16 %v1794
    %v1871 = vunpack.c.h.b16 %v1794
    %v1872 = vunpack.c.l.b16 %v1795
    %v1873 = vunpack.c.l.b16 %v1796
    %v1874 = vunpack.c.h.b16 %v1796
    %v1875 = vunpack.c.l.b16 %v1797
    %v1876 = vunpack.c.l.b16 %v1798
    %v1877 = vunpack.c.h.b16 %v1798
    %v1878 = vunpack.c.l.b16 %v1799
    %v1879 = vunpack.c.l.b16 %v1800
    %v1880 = vunpack.c.h.b16 %v1800
    %v1881 = vunpack.c.l.b16 %v1801
    %v1882 = vpack.c.b16 %v1837, %v1834
    %v1883 = vpack.c.b16 %v1838, %v1835
    %v1884 = vpack.c.b16 %v1839, %v1836
    %v1885 = vpack.c.b16 %v1843, %v1840
    %v1886 = vpack.c.b16 %v1844, %v1841
    %v1887 = vpack.c.b16 %v1845, %v1842
    %v1888 = vpack.c.b16 %v1849, %v1846
    %v1889 = vpack.c.b16 %v1850, %v1847
    %v1890 = vpack.c.b16 %v1851, %v1848
    %v1891 = vpack.c.b16 %v1855, %v1852
    %v1892 = vpack.c.b16 %v1856, %v1853
    %v1893 = vpack.c.b16 %v1857, %v1854
    %v1894 = vpack.c.b16 %v1861, %v1858
    %v1895 = vpack.c.b16 %v1862, %v1859
    %v1896 = vpack.c.b16 %v1863, %v1860
    %v1897 = vpack.c.b16 %v1867, %v1864
    %v1898 = vpack.c.b16 %v1868, %v1865
    %v1899 = vpack.c.b16 %v1869, %v1866
    %v1900 = vpack.c.b16 %v1873, %v1870
    %v1901 = vpack.c.b16 %v1874, %v1871
    %v1902 = vpack.c.b16 %v1875, %v1872
    %v1903 = vpack.c.b16 %v1879, %v1876
    %v1904 = vpack.c.b16 %v1880, %v1877
    %v1905 = vpack.c.b16 %v1881, %v1878
    %1930 = vmatprep.subr.bf16.mxu0 %v1904
    %1931 = vmatpush1.bf16.msra.mxu0 %v1903
    %1932 = vmatprep.subr.bf16.mxu0 %v1901
    %1933 = vmatpush1.bf16.msra.mxu0 %v1900
    %1934 = vmatprep.subr.bf16.mxu0 %v1898
    %1935 = vmatpush1.bf16.msra.mxu0 %v1897
    %1936 = vmatprep.subr.bf16.mxu0 %v1895
    %1937 = vmatpush1.bf16.msra.mxu0 %v1894
    %1938 = vmatprep.subr.bf16.mxu0 %v1892
    %1939 = vmatpush1.bf16.msra.mxu0 %v1891
    %1940 = vmatprep.subr.bf16.mxu0 %v1889
    %1941 = vmatpush1.bf16.msra.mxu0 %v1888
    %1942 = vmatprep.subr.bf16.mxu0 %v1886
    %1943 = vmatpush1.bf16.msra.mxu0 %v1885
    %1944 = vmatprep.subr.bf16.mxu0 %v1883
    %1945 = vmatpush1.bf16.msra.mxu0 %v1882
    %1946 = vmatprep.subr.bf16.mxu0 0
    %1947 = vmatpush2.bf16.msra.mxu0 0
    %1948 = vmatprep.subr.bf16.mxu0 0
    %1949 = vmatpush2.bf16.msra.mxu0 0
    %1950 = vmatprep.subr.bf16.mxu0 0
    %1951 = vmatpush2.bf16.msra.mxu0 0
    %1952 = vmatprep.subr.bf16.mxu0 0
    %1953 = vmatpush2.bf16.msra.mxu0 0
    %1954 = vmatprep.subr.bf16.mxu0 0
    %1955 = vmatpush2.bf16.msra.mxu0 0
    %1956 = vmatprep.subr.bf16.mxu0 0
    %1957 = vmatpush2.bf16.msra.mxu0 0
    %1958 = vmatprep.subr.bf16.mxu0 0
    %1959 = vmatpush2.bf16.msra.mxu0 0
    %1960 = vmatprep.subr.bf16.mxu0 0
    %1961 = vmatpush2.bf16.msra.mxu0 0
    %1962 = vmatprep.mubr.bf16.mxu0 0
    %1963 = vmatmul.mubr.bf16.gmra.mxu0 %v1765
    %v1964 = vpop.f32.mrf.mxu0
    %v1965 = vadd.f32 0.0, %v1964
    %v1966 = vpop.f32.mrf.mxu0
    %v1967 = vadd.f32 0.0, %v1966
    %v1968 = vpop.f32.mrf.mxu0
    %v1969 = vpop.f32.mrf.mxu0
    %1970 = vdwg.mxu0
    %1971 = vmatprep.subr.bf16.mxu0 0
    %1972 = vmatpush1.bf16.msra.mxu0 %v1905
    %1973 = vmatprep.subr.bf16.mxu0 0
    %1974 = vmatpush1.bf16.msra.mxu0 %v1902
    %1975 = vmatprep.subr.bf16.mxu0 0
    %1976 = vmatpush1.bf16.msra.mxu0 %v1899
    %1977 = vmatprep.subr.bf16.mxu0 0
    %1978 = vmatpush1.bf16.msra.mxu0 %v1896
    %1979 = vmatprep.subr.bf16.mxu0 0
    %1980 = vmatpush1.bf16.msra.mxu0 %v1893
    %1981 = vmatprep.subr.bf16.mxu0 0
    %1982 = vmatpush1.bf16.msra.mxu0 %v1890
    %1983 = vmatprep.subr.bf16.mxu0 0
    %1984 = vmatpush1.bf16.msra.mxu0 %v1887
    %1985 = vmatprep.subr.bf16.mxu0 0
    %1986 = vmatpush1.bf16.msra.mxu0 %v1884
    %1987 = vmatprep.subr.bf16.mxu0 0
    %1988 = vmatpush2.bf16.msra.mxu0 0
    %1989 = vmatprep.subr.bf16.mxu0 0
    %1990 = vmatpush2.bf16.msra.mxu0 0
    %1991 = vmatprep.subr.bf16.mxu0 0
    %1992 = vmatpush2.bf16.msra.mxu0 0
    %1993 = vmatprep.subr.bf16.mxu0 0
    %1994 = vmatpush2.bf16.msra.mxu0 0
    %1995 = vmatprep.subr.bf16.mxu0 0
    %1996 = vmatpush2.bf16.msra.mxu0 0
    %1997 = vmatprep.subr.bf16.mxu0 0
    %1998 = vmatpush2.bf16.msra.mxu0 0
    %1999 = vmatprep.subr.bf16.mxu0 0
    %2000 = vmatpush2.bf16.msra.mxu0 0
    %2001 = vmatprep.subr.bf16.mxu0 0
    %2002 = vmatpush2.bf16.msra.mxu0 0
    %2003 = vmatprep.mubr.bf16.mxu0 0
    %2004 = vmatmul.mubr.bf16.gmra.mxu0 %v1765
    %v2005 = vpop.f32.mrf.mxu0
    %v2006 = vadd.f32 0.0, %v2005
    %v2007 = vpop.f32.mrf.mxu0
    %v2008 = vpop.f32.mrf.mxu0
    %v2009 = vpop.f32.mrf.mxu0
    %2010 = vdwg.mxu0
    %v2011 = vld [vmem:[%s1736] sm:$0xff]
    %v2012 = vld [vmem:[%s1736 + $0x8] sm:$0xff]
    %v2013 = vld [vmem:[%s1736 + $0x10] sm:$0xff]
    %v2014 = vld [vmem:[%s1732] sm:$0xff]
    %v2015 = vld [vmem:[%s1732 + $0x8] sm:$0xff]
    %v2016 = vld [vmem:[%s1732 + $0x10] sm:$0xff]
    %v2017 = vsel %vm646, %v2011, %v2014
    %v2018 = vsel %vm647, %v2012, %v2015
    %v2019 = vsel %vm648, %v2013, %v2016
    %v2020 = vadd.f32 %v2017, %v1965
    %v2021 = vxor.u32 %v2020, 2147483648
    %v2022 = vmul.f32 %v2021, 1.442695
    %v2023 = vpow.pop %v2022
    %v2024 = vadd.f32 %v2023, 1.0
    %v2025 = vrcp.pop %v2024
    %v2026 = vmul.f32 1.0, %v2025
    %v2027 = vadd.f32 %v2018, %v1967
    %v2028 = vxor.u32 %v2027, 2147483648
    %v2029 = vmul.f32 %v2028, 1.442695
    %v2030 = vpow.pop %v2029
    %v2031 = vadd.f32 %v2030, 1.0
    %v2032 = vrcp.pop %v2031
    %v2033 = vmul.f32 1.0, %v2032
    %v2034 = vadd.f32 %v2006, %v654
    %v2035 = vmul.f32 %v2026, %v2034
    %v2036 = vadd.f32 %v2019, %v2035
    %v2037 = vtanh.pop %v2036
    %v2038 = vsub.f32 1.0, %v2033
    %v2039 = vmul.f32 %v2038, %v2037
    %v2040 = vmul.f32 %v2033, %v1764
    %v2041 = vadd.f32 %v2039, %v2040
    %v2042 = vpack.c.bf16 %v2041, %v2041
    %s2043 = scalar_lea.vmem %s8, 16
    %2044 = vst [vmem:[%s2043] sm:$0xf] %v2042
    %s2045 = scalar_lea.vmem %s9, 12
    %2046 = vst [vmem:[%s2045] sm:$0xf] %v2042
    %v2047 = vld [vmem:[%s3] sm:$0xff]
    %v2048 = vld [vmem:[%s3 + $0x8] sm:$0xf]
    %v2049 = vld [vmem:[%s3 + $0xc] sm:$0xff]
    %v2050 = vld [vmem:[%s3 + $0x14] sm:$0xf]
    %v2051 = vld [vmem:[%s3 + $0x18] sm:$0xff]
    %v2052 = vld [vmem:[%s3 + $0x20] sm:$0xf]
    %v2053 = vld [vmem:[%s3 + $0x24] sm:$0xff]
    %v2054 = vld [vmem:[%s3 + $0x2c] sm:$0xf]
    %v2055 = vld [vmem:[%s3 + $0x30] sm:$0xff]
    %v2056 = vld [vmem:[%s3 + $0x38] sm:$0xf]
    %v2057 = vld [vmem:[%s3 + $0x3c] sm:$0xff]
    %v2058 = vld [vmem:[%s3 + $0x44] sm:$0xf]
    %v2059 = vld [vmem:[%s3 + $0x48] sm:$0xff]
    %v2060 = vld [vmem:[%s3 + $0x50] sm:$0xf]
    %v2061 = vld [vmem:[%s3 + $0x54] sm:$0xff]
    %v2062 = vld [vmem:[%s3 + $0x5c] sm:$0xf]
    %v2063 = vld [vmem:[%s3 + $0x60] sm:$0xff]
    %v2064 = vld [vmem:[%s3 + $0x68] sm:$0xf]
    %v2065 = vld [vmem:[%s3 + $0x6c] sm:$0xff]
    %v2066 = vld [vmem:[%s3 + $0x74] sm:$0xf]
    %v2067 = vld [vmem:[%s3 + $0x78] sm:$0xff]
    %v2068 = vld [vmem:[%s3 + $0x80] sm:$0xf]
    %v2069 = vld [vmem:[%s3 + $0x84] sm:$0xff]
    %v2070 = vld [vmem:[%s3 + $0x8c] sm:$0xf]
    %v2071 = vld [vmem:[%s3 + $0x90] sm:$0xff]
    %v2072 = vld [vmem:[%s3 + $0x98] sm:$0xf]
    %v2073 = vld [vmem:[%s3 + $0x9c] sm:$0xff]
    %v2074 = vld [vmem:[%s3 + $0xa4] sm:$0xf]
    %v2075 = vld [vmem:[%s3 + $0xa8] sm:$0xff]
    %v2076 = vld [vmem:[%s3 + $0xb0] sm:$0xf]
    %v2077 = vld [vmem:[%s3 + $0xb4] sm:$0xff]
    %v2078 = vld [vmem:[%s3 + $0xbc] sm:$0xf]
    %v2111 = vunpack.c.l.b16 %v2047
    %v2112 = vunpack.c.h.b16 %v2047
    %v2113 = vunpack.c.l.b16 %v2048
    %v2114 = vunpack.c.l.b16 %v2049
    %v2115 = vunpack.c.h.b16 %v2049
    %v2116 = vunpack.c.l.b16 %v2050
    %v2117 = vunpack.c.l.b16 %v2051
    %v2118 = vunpack.c.h.b16 %v2051
    %v2119 = vunpack.c.l.b16 %v2052
    %v2120 = vunpack.c.l.b16 %v2053
    %v2121 = vunpack.c.h.b16 %v2053
    %v2122 = vunpack.c.l.b16 %v2054
    %v2123 = vunpack.c.l.b16 %v2055
    %v2124 = vunpack.c.h.b16 %v2055
    %v2125 = vunpack.c.l.b16 %v2056
    %v2126 = vunpack.c.l.b16 %v2057
    %v2127 = vunpack.c.h.b16 %v2057
    %v2128 = vunpack.c.l.b16 %v2058
    %v2129 = vunpack.c.l.b16 %v2059
    %v2130 = vunpack.c.h.b16 %v2059
    %v2131 = vunpack.c.l.b16 %v2060
    %v2132 = vunpack.c.l.b16 %v2061
    %v2133 = vunpack.c.h.b16 %v2061
    %v2134 = vunpack.c.l.b16 %v2062
    %v2135 = vunpack.c.l.b16 %v2063
    %v2136 = vunpack.c.h.b16 %v2063
    %v2137 = vunpack.c.l.b16 %v2064
    %v2138 = vunpack.c.l.b16 %v2065
    %v2139 = vunpack.c.h.b16 %v2065
    %v2140 = vunpack.c.l.b16 %v2066
    %v2141 = vunpack.c.l.b16 %v2067
    %v2142 = vunpack.c.h.b16 %v2067
    %v2143 = vunpack.c.l.b16 %v2068
    %v2144 = vunpack.c.l.b16 %v2069
    %v2145 = vunpack.c.h.b16 %v2069
    %v2146 = vunpack.c.l.b16 %v2070
    %v2147 = vunpack.c.l.b16 %v2071
    %v2148 = vunpack.c.h.b16 %v2071
    %v2149 = vunpack.c.l.b16 %v2072
    %v2150 = vunpack.c.l.b16 %v2073
    %v2151 = vunpack.c.h.b16 %v2073
    %v2152 = vunpack.c.l.b16 %v2074
    %v2153 = vunpack.c.l.b16 %v2075
    %v2154 = vunpack.c.h.b16 %v2075
    %v2155 = vunpack.c.l.b16 %v2076
    %v2156 = vunpack.c.l.b16 %v2077
    %v2157 = vunpack.c.h.b16 %v2077
    %v2158 = vunpack.c.l.b16 %v2078
    %v2159 = vpack.c.b16 %v2114, %v2111
    %v2160 = vpack.c.b16 %v2115, %v2112
    %v2161 = vpack.c.b16 %v2116, %v2113
    %v2162 = vpack.c.b16 %v2120, %v2117
    %v2163 = vpack.c.b16 %v2121, %v2118
    %v2164 = vpack.c.b16 %v2122, %v2119
    %v2165 = vpack.c.b16 %v2126, %v2123
    %v2166 = vpack.c.b16 %v2127, %v2124
    %v2167 = vpack.c.b16 %v2128, %v2125
    %v2168 = vpack.c.b16 %v2132, %v2129
    %v2169 = vpack.c.b16 %v2133, %v2130
    %v2170 = vpack.c.b16 %v2134, %v2131
    %v2171 = vpack.c.b16 %v2138, %v2135
    %v2172 = vpack.c.b16 %v2139, %v2136
    %v2173 = vpack.c.b16 %v2140, %v2137
    %v2174 = vpack.c.b16 %v2144, %v2141
    %v2175 = vpack.c.b16 %v2145, %v2142
    %v2176 = vpack.c.b16 %v2146, %v2143
    %v2177 = vpack.c.b16 %v2150, %v2147
    %v2178 = vpack.c.b16 %v2151, %v2148
    %v2179 = vpack.c.b16 %v2152, %v2149
    %v2180 = vpack.c.b16 %v2156, %v2153
    %v2181 = vpack.c.b16 %v2157, %v2154
    %v2182 = vpack.c.b16 %v2158, %v2155
    %2207 = vmatprep.subr.bf16.mxu0 %v2181
    %2208 = vmatpush1.bf16.msra.mxu0 %v2180
    %2209 = vmatprep.subr.bf16.mxu0 %v2178
    %2210 = vmatpush1.bf16.msra.mxu0 %v2177
    %2211 = vmatprep.subr.bf16.mxu0 %v2175
    %2212 = vmatpush1.bf16.msra.mxu0 %v2174
    %2213 = vmatprep.subr.bf16.mxu0 %v2172
    %2214 = vmatpush1.bf16.msra.mxu0 %v2171
    %2215 = vmatprep.subr.bf16.mxu0 %v2169
    %2216 = vmatpush1.bf16.msra.mxu0 %v2168
    %2217 = vmatprep.subr.bf16.mxu0 %v2166
    %2218 = vmatpush1.bf16.msra.mxu0 %v2165
    %2219 = vmatprep.subr.bf16.mxu0 %v2163
    %2220 = vmatpush1.bf16.msra.mxu0 %v2162
    %2221 = vmatprep.subr.bf16.mxu0 %v2160
    %2222 = vmatpush1.bf16.msra.mxu0 %v2159
    %2223 = vmatprep.subr.bf16.mxu0 0
    %2224 = vmatpush2.bf16.msra.mxu0 0
    %2225 = vmatprep.subr.bf16.mxu0 0
    %2226 = vmatpush2.bf16.msra.mxu0 0
    %2227 = vmatprep.subr.bf16.mxu0 0
    %2228 = vmatpush2.bf16.msra.mxu0 0
    %2229 = vmatprep.subr.bf16.mxu0 0
    %2230 = vmatpush2.bf16.msra.mxu0 0
    %2231 = vmatprep.subr.bf16.mxu0 0
    %2232 = vmatpush2.bf16.msra.mxu0 0
    %2233 = vmatprep.subr.bf16.mxu0 0
    %2234 = vmatpush2.bf16.msra.mxu0 0
    %2235 = vmatprep.subr.bf16.mxu0 0
    %2236 = vmatpush2.bf16.msra.mxu0 0
    %2237 = vmatprep.subr.bf16.mxu0 0
    %2238 = vmatpush2.bf16.msra.mxu0 0
    %2239 = vmatprep.mubr.bf16.mxu0 0
    %2240 = vmatmul.mubr.bf16.gmra.mxu0 %v2042
    %v2241 = vpop.f32.mrf.mxu0
    %v2242 = vadd.f32 0.0, %v2241
    %v2243 = vpop.f32.mrf.mxu0
    %v2244 = vadd.f32 0.0, %v2243
    %v2245 = vpop.f32.mrf.mxu0
    %v2246 = vpop.f32.mrf.mxu0
    %2247 = vdwg.mxu0
    %2248 = vmatprep.subr.bf16.mxu0 0
    %2249 = vmatpush1.bf16.msra.mxu0 %v2182
    %2250 = vmatprep.subr.bf16.mxu0 0
    %2251 = vmatpush1.bf16.msra.mxu0 %v2179
    %2252 = vmatprep.subr.bf16.mxu0 0
    %2253 = vmatpush1.bf16.msra.mxu0 %v2176
    %2254 = vmatprep.subr.bf16.mxu0 0
    %2255 = vmatpush1.bf16.msra.mxu0 %v2173
    %2256 = vmatprep.subr.bf16.mxu0 0
    %2257 = vmatpush1.bf16.msra.mxu0 %v2170
    %2258 = vmatprep.subr.bf16.mxu0 0
    %2259 = vmatpush1.bf16.msra.mxu0 %v2167
    %2260 = vmatprep.subr.bf16.mxu0 0
    %2261 = vmatpush1.bf16.msra.mxu0 %v2164
    %2262 = vmatprep.subr.bf16.mxu0 0
    %2263 = vmatpush1.bf16.msra.mxu0 %v2161
    %2264 = vmatprep.subr.bf16.mxu0 0
    %2265 = vmatpush2.bf16.msra.mxu0 0
    %2266 = vmatprep.subr.bf16.mxu0 0
    %2267 = vmatpush2.bf16.msra.mxu0 0
    %2268 = vmatprep.subr.bf16.mxu0 0
    %2269 = vmatpush2.bf16.msra.mxu0 0
    %2270 = vmatprep.subr.bf16.mxu0 0
    %2271 = vmatpush2.bf16.msra.mxu0 0
    %2272 = vmatprep.subr.bf16.mxu0 0
    %2273 = vmatpush2.bf16.msra.mxu0 0
    %2274 = vmatprep.subr.bf16.mxu0 0
    %2275 = vmatpush2.bf16.msra.mxu0 0
    %2276 = vmatprep.subr.bf16.mxu0 0
    %2277 = vmatpush2.bf16.msra.mxu0 0
    %2278 = vmatprep.subr.bf16.mxu0 0
    %2279 = vmatpush2.bf16.msra.mxu0 0
    %2280 = vmatprep.mubr.bf16.mxu0 0
    %2281 = vmatmul.mubr.bf16.gmra.mxu0 %v2042
    %v2282 = vpop.f32.mrf.mxu0
    %v2283 = vadd.f32 0.0, %v2282
    %v2284 = vpop.f32.mrf.mxu0
    %v2285 = vpop.f32.mrf.mxu0
    %v2286 = vpop.f32.mrf.mxu0
    %2287 = vdwg.mxu0
    %v2288 = vld [vmem:[%s1457] sm:$0xff]
    %v2289 = vld [vmem:[%s1457 + $0x8] sm:$0xff]
    %v2290 = vld [vmem:[%s1457 + $0x10] sm:$0xff]
    %v2291 = vld [vmem:[%s1453] sm:$0xff]
    %v2292 = vld [vmem:[%s1453 + $0x8] sm:$0xff]
    %v2293 = vld [vmem:[%s1453 + $0x10] sm:$0xff]
    %v2294 = vsel %vm646, %v2288, %v2291
    %v2295 = vsel %vm647, %v2289, %v2292
    %v2296 = vsel %vm648, %v2290, %v2293
    %v2297 = vadd.f32 %v2294, %v2242
    %v2298 = vxor.u32 %v2297, 2147483648
    %v2299 = vmul.f32 %v2298, 1.442695
    %v2300 = vpow.pop %v2299
    %v2301 = vadd.f32 %v2300, 1.0
    %v2302 = vrcp.pop %v2301
    %v2303 = vmul.f32 1.0, %v2302
    %v2304 = vadd.f32 %v2295, %v2244
    %v2305 = vxor.u32 %v2304, 2147483648
    %v2306 = vmul.f32 %v2305, 1.442695
    %v2307 = vpow.pop %v2306
    %v2308 = vadd.f32 %v2307, 1.0
    %v2309 = vrcp.pop %v2308
    %v2310 = vmul.f32 1.0, %v2309
    %v2311 = vadd.f32 %v2283, %v654
    %v2312 = vmul.f32 %v2303, %v2311
    %v2313 = vadd.f32 %v2296, %v2312
    %v2314 = vtanh.pop %v2313
    %v2315 = vsub.f32 1.0, %v2310
    %v2316 = vmul.f32 %v2315, %v2314
    %v2317 = vmul.f32 %v2310, %v2041
    %v2318 = vadd.f32 %v2316, %v2317
    %v2319 = vpack.c.bf16 %v2318, %v2318
    %s2320 = scalar_lea.vmem %s8, 20
    %2321 = vst [vmem:[%s2320] sm:$0xf] %v2319
    %s2322 = scalar_lea.vmem %s9, 8
    %2323 = vst [vmem:[%s2322] sm:$0xf] %v2319
    %v2324 = vld [vmem:[%s3] sm:$0xff]
    %v2325 = vld [vmem:[%s3 + $0x8] sm:$0xf]
    %v2326 = vld [vmem:[%s3 + $0xc] sm:$0xff]
    %v2327 = vld [vmem:[%s3 + $0x14] sm:$0xf]
    %v2328 = vld [vmem:[%s3 + $0x18] sm:$0xff]
    %v2329 = vld [vmem:[%s3 + $0x20] sm:$0xf]
    %v2330 = vld [vmem:[%s3 + $0x24] sm:$0xff]
    %v2331 = vld [vmem:[%s3 + $0x2c] sm:$0xf]
    %v2332 = vld [vmem:[%s3 + $0x30] sm:$0xff]
    %v2333 = vld [vmem:[%s3 + $0x38] sm:$0xf]
    %v2334 = vld [vmem:[%s3 + $0x3c] sm:$0xff]
    %v2335 = vld [vmem:[%s3 + $0x44] sm:$0xf]
    %v2336 = vld [vmem:[%s3 + $0x48] sm:$0xff]
    %v2337 = vld [vmem:[%s3 + $0x50] sm:$0xf]
    %v2338 = vld [vmem:[%s3 + $0x54] sm:$0xff]
    %v2339 = vld [vmem:[%s3 + $0x5c] sm:$0xf]
    %v2340 = vld [vmem:[%s3 + $0x60] sm:$0xff]
    %v2341 = vld [vmem:[%s3 + $0x68] sm:$0xf]
    %v2342 = vld [vmem:[%s3 + $0x6c] sm:$0xff]
    %v2343 = vld [vmem:[%s3 + $0x74] sm:$0xf]
    %v2344 = vld [vmem:[%s3 + $0x78] sm:$0xff]
    %v2345 = vld [vmem:[%s3 + $0x80] sm:$0xf]
    %v2346 = vld [vmem:[%s3 + $0x84] sm:$0xff]
    %v2347 = vld [vmem:[%s3 + $0x8c] sm:$0xf]
    %v2348 = vld [vmem:[%s3 + $0x90] sm:$0xff]
    %v2349 = vld [vmem:[%s3 + $0x98] sm:$0xf]
    %v2350 = vld [vmem:[%s3 + $0x9c] sm:$0xff]
    %v2351 = vld [vmem:[%s3 + $0xa4] sm:$0xf]
    %v2352 = vld [vmem:[%s3 + $0xa8] sm:$0xff]
    %v2353 = vld [vmem:[%s3 + $0xb0] sm:$0xf]
    %v2354 = vld [vmem:[%s3 + $0xb4] sm:$0xff]
    %v2355 = vld [vmem:[%s3 + $0xbc] sm:$0xf]
    %v2388 = vunpack.c.l.b16 %v2324
    %v2389 = vunpack.c.h.b16 %v2324
    %v2390 = vunpack.c.l.b16 %v2325
    %v2391 = vunpack.c.l.b16 %v2326
    %v2392 = vunpack.c.h.b16 %v2326
    %v2393 = vunpack.c.l.b16 %v2327
    %v2394 = vunpack.c.l.b16 %v2328
    %v2395 = vunpack.c.h.b16 %v2328
    %v2396 = vunpack.c.l.b16 %v2329
    %v2397 = vunpack.c.l.b16 %v2330
    %v2398 = vunpack.c.h.b16 %v2330
    %v2399 = vunpack.c.l.b16 %v2331
    %v2400 = vunpack.c.l.b16 %v2332
    %v2401 = vunpack.c.h.b16 %v2332
    %v2402 = vunpack.c.l.b16 %v2333
    %v2403 = vunpack.c.l.b16 %v2334
    %v2404 = vunpack.c.h.b16 %v2334
    %v2405 = vunpack.c.l.b16 %v2335
    %v2406 = vunpack.c.l.b16 %v2336
    %v2407 = vunpack.c.h.b16 %v2336
    %v2408 = vunpack.c.l.b16 %v2337
    %v2409 = vunpack.c.l.b16 %v2338
    %v2410 = vunpack.c.h.b16 %v2338
    %v2411 = vunpack.c.l.b16 %v2339
    %v2412 = vunpack.c.l.b16 %v2340
    %v2413 = vunpack.c.h.b16 %v2340
    %v2414 = vunpack.c.l.b16 %v2341
    %v2415 = vunpack.c.l.b16 %v2342
    %v2416 = vunpack.c.h.b16 %v2342
    %v2417 = vunpack.c.l.b16 %v2343
    %v2418 = vunpack.c.l.b16 %v2344
    %v2419 = vunpack.c.h.b16 %v2344
    %v2420 = vunpack.c.l.b16 %v2345
    %v2421 = vunpack.c.l.b16 %v2346
    %v2422 = vunpack.c.h.b16 %v2346
    %v2423 = vunpack.c.l.b16 %v2347
    %v2424 = vunpack.c.l.b16 %v2348
    %v2425 = vunpack.c.h.b16 %v2348
    %v2426 = vunpack.c.l.b16 %v2349
    %v2427 = vunpack.c.l.b16 %v2350
    %v2428 = vunpack.c.h.b16 %v2350
    %v2429 = vunpack.c.l.b16 %v2351
    %v2430 = vunpack.c.l.b16 %v2352
    %v2431 = vunpack.c.h.b16 %v2352
    %v2432 = vunpack.c.l.b16 %v2353
    %v2433 = vunpack.c.l.b16 %v2354
    %v2434 = vunpack.c.h.b16 %v2354
    %v2435 = vunpack.c.l.b16 %v2355
    %v2436 = vpack.c.b16 %v2391, %v2388
    %v2437 = vpack.c.b16 %v2392, %v2389
    %v2438 = vpack.c.b16 %v2393, %v2390
    %v2439 = vpack.c.b16 %v2397, %v2394
    %v2440 = vpack.c.b16 %v2398, %v2395
    %v2441 = vpack.c.b16 %v2399, %v2396
    %v2442 = vpack.c.b16 %v2403, %v2400
    %v2443 = vpack.c.b16 %v2404, %v2401
    %v2444 = vpack.c.b16 %v2405, %v2402
    %v2445 = vpack.c.b16 %v2409, %v2406
    %v2446 = vpack.c.b16 %v2410, %v2407
    %v2447 = vpack.c.b16 %v2411, %v2408
    %v2448 = vpack.c.b16 %v2415, %v2412
    %v2449 = vpack.c.b16 %v2416, %v2413
    %v2450 = vpack.c.b16 %v2417, %v2414
    %v2451 = vpack.c.b16 %v2421, %v2418
    %v2452 = vpack.c.b16 %v2422, %v2419
    %v2453 = vpack.c.b16 %v2423, %v2420
    %v2454 = vpack.c.b16 %v2427, %v2424
    %v2455 = vpack.c.b16 %v2428, %v2425
    %v2456 = vpack.c.b16 %v2429, %v2426
    %v2457 = vpack.c.b16 %v2433, %v2430
    %v2458 = vpack.c.b16 %v2434, %v2431
    %v2459 = vpack.c.b16 %v2435, %v2432
    %2484 = vmatprep.subr.bf16.mxu0 %v2458
    %2485 = vmatpush1.bf16.msra.mxu0 %v2457
    %2486 = vmatprep.subr.bf16.mxu0 %v2455
    %2487 = vmatpush1.bf16.msra.mxu0 %v2454
    %2488 = vmatprep.subr.bf16.mxu0 %v2452
    %2489 = vmatpush1.bf16.msra.mxu0 %v2451
    %2490 = vmatprep.subr.bf16.mxu0 %v2449
    %2491 = vmatpush1.bf16.msra.mxu0 %v2448
    %2492 = vmatprep.subr.bf16.mxu0 %v2446
    %2493 = vmatpush1.bf16.msra.mxu0 %v2445
    %2494 = vmatprep.subr.bf16.mxu0 %v2443
    %2495 = vmatpush1.bf16.msra.mxu0 %v2442
    %2496 = vmatprep.subr.bf16.mxu0 %v2440
    %2497 = vmatpush1.bf16.msra.mxu0 %v2439
    %2498 = vmatprep.subr.bf16.mxu0 %v2437
    %2499 = vmatpush1.bf16.msra.mxu0 %v2436
    %2500 = vmatprep.subr.bf16.mxu0 0
    %2501 = vmatpush2.bf16.msra.mxu0 0
    %2502 = vmatprep.subr.bf16.mxu0 0
    %2503 = vmatpush2.bf16.msra.mxu0 0
    %2504 = vmatprep.subr.bf16.mxu0 0
    %2505 = vmatpush2.bf16.msra.mxu0 0
    %2506 = vmatprep.subr.bf16.mxu0 0
    %2507 = vmatpush2.bf16.msra.mxu0 0
    %2508 = vmatprep.subr.bf16.mxu0 0
    %2509 = vmatpush2.bf16.msra.mxu0 0
    %2510 = vmatprep.subr.bf16.mxu0 0
    %2511 = vmatpush2.bf16.msra.mxu0 0
    %2512 = vmatprep.subr.bf16.mxu0 0
    %2513 = vmatpush2.bf16.msra.mxu0 0
    %2514 = vmatprep.subr.bf16.mxu0 0
    %2515 = vmatpush2.bf16.msra.mxu0 0
    %2516 = vmatprep.mubr.bf16.mxu0 0
    %2517 = vmatmul.mubr.bf16.gmra.mxu0 %v2319
    %v2518 = vpop.f32.mrf.mxu0
    %v2519 = vadd.f32 0.0, %v2518
    %v2520 = vpop.f32.mrf.mxu0
    %v2521 = vadd.f32 0.0, %v2520
    %v2522 = vpop.f32.mrf.mxu0
    %v2523 = vpop.f32.mrf.mxu0
    %2524 = vdwg.mxu0
    %2525 = vmatprep.subr.bf16.mxu0 0
    %2526 = vmatpush1.bf16.msra.mxu0 %v2459
    %2527 = vmatprep.subr.bf16.mxu0 0
    %2528 = vmatpush1.bf16.msra.mxu0 %v2456
    %2529 = vmatprep.subr.bf16.mxu0 0
    %2530 = vmatpush1.bf16.msra.mxu0 %v2453
    %2531 = vmatprep.subr.bf16.mxu0 0
    %2532 = vmatpush1.bf16.msra.mxu0 %v2450
    %2533 = vmatprep.subr.bf16.mxu0 0
    %2534 = vmatpush1.bf16.msra.mxu0 %v2447
    %2535 = vmatprep.subr.bf16.mxu0 0
    %2536 = vmatpush1.bf16.msra.mxu0 %v2444
    %2537 = vmatprep.subr.bf16.mxu0 0
    %2538 = vmatpush1.bf16.msra.mxu0 %v2441
    %2539 = vmatprep.subr.bf16.mxu0 0
    %2540 = vmatpush1.bf16.msra.mxu0 %v2438
    %2541 = vmatprep.subr.bf16.mxu0 0
    %2542 = vmatpush2.bf16.msra.mxu0 0
    %2543 = vmatprep.subr.bf16.mxu0 0
    %2544 = vmatpush2.bf16.msra.mxu0 0
    %2545 = vmatprep.subr.bf16.mxu0 0
    %2546 = vmatpush2.bf16.msra.mxu0 0
    %2547 = vmatprep.subr.bf16.mxu0 0
    %2548 = vmatpush2.bf16.msra.mxu0 0
    %2549 = vmatprep.subr.bf16.mxu0 0
    %2550 = vmatpush2.bf16.msra.mxu0 0
    %2551 = vmatprep.subr.bf16.mxu0 0
    %2552 = vmatpush2.bf16.msra.mxu0 0
    %2553 = vmatprep.subr.bf16.mxu0 0
    %2554 = vmatpush2.bf16.msra.mxu0 0
    %2555 = vmatprep.subr.bf16.mxu0 0
    %2556 = vmatpush2.bf16.msra.mxu0 0
    %2557 = vmatprep.mubr.bf16.mxu0 0
    %2558 = vmatmul.mubr.bf16.gmra.mxu0 %v2319
    %v2559 = vpop.f32.mrf.mxu0
    %v2560 = vadd.f32 0.0, %v2559
    %v2561 = vpop.f32.mrf.mxu0
    %v2562 = vpop.f32.mrf.mxu0
    %v2563 = vpop.f32.mrf.mxu0
    %2564 = vdwg.mxu0
    %v2565 = vld [vmem:[%s1178] sm:$0xff]
    %v2566 = vld [vmem:[%s1178 + $0x8] sm:$0xff]
    %v2567 = vld [vmem:[%s1178 + $0x10] sm:$0xff]
    %v2568 = vld [vmem:[%s1174] sm:$0xff]
    %v2569 = vld [vmem:[%s1174 + $0x8] sm:$0xff]
    %v2570 = vld [vmem:[%s1174 + $0x10] sm:$0xff]
    %v2571 = vsel %vm646, %v2565, %v2568
    %v2572 = vsel %vm647, %v2566, %v2569
    %v2573 = vsel %vm648, %v2567, %v2570
    %v2574 = vadd.f32 %v2571, %v2519
    %v2575 = vxor.u32 %v2574, 2147483648
    %v2576 = vmul.f32 %v2575, 1.442695
    %v2577 = vpow.pop %v2576
    %v2578 = vadd.f32 %v2577, 1.0
    %v2579 = vrcp.pop %v2578
    %v2580 = vmul.f32 1.0, %v2579
    %v2581 = vadd.f32 %v2572, %v2521
    %v2582 = vxor.u32 %v2581, 2147483648
    %v2583 = vmul.f32 %v2582, 1.442695
    %v2584 = vpow.pop %v2583
    %v2585 = vadd.f32 %v2584, 1.0
    %v2586 = vrcp.pop %v2585
    %v2587 = vmul.f32 1.0, %v2586
    %v2588 = vadd.f32 %v2560, %v654
    %v2589 = vmul.f32 %v2580, %v2588
    %v2590 = vadd.f32 %v2573, %v2589
    %v2591 = vtanh.pop %v2590
    %v2592 = vsub.f32 1.0, %v2587
    %v2593 = vmul.f32 %v2592, %v2591
    %v2594 = vmul.f32 %v2587, %v2318
    %v2595 = vadd.f32 %v2593, %v2594
    %v2596 = vpack.c.bf16 %v2595, %v2595
    %s2597 = scalar_lea.vmem %s8, 24
    %2598 = vst [vmem:[%s2597] sm:$0xf] %v2596
    %s2599 = scalar_lea.vmem %s9, 4
    %2600 = vst [vmem:[%s2599] sm:$0xf] %v2596
    %v2601 = vld [vmem:[%s3] sm:$0xff]
    %v2602 = vld [vmem:[%s3 + $0x8] sm:$0xf]
    %v2603 = vld [vmem:[%s3 + $0xc] sm:$0xff]
    %v2604 = vld [vmem:[%s3 + $0x14] sm:$0xf]
    %v2605 = vld [vmem:[%s3 + $0x18] sm:$0xff]
    %v2606 = vld [vmem:[%s3 + $0x20] sm:$0xf]
    %v2607 = vld [vmem:[%s3 + $0x24] sm:$0xff]
    %v2608 = vld [vmem:[%s3 + $0x2c] sm:$0xf]
    %v2609 = vld [vmem:[%s3 + $0x30] sm:$0xff]
    %v2610 = vld [vmem:[%s3 + $0x38] sm:$0xf]
    %v2611 = vld [vmem:[%s3 + $0x3c] sm:$0xff]
    %v2612 = vld [vmem:[%s3 + $0x44] sm:$0xf]
    %v2613 = vld [vmem:[%s3 + $0x48] sm:$0xff]
    %v2614 = vld [vmem:[%s3 + $0x50] sm:$0xf]
    %v2615 = vld [vmem:[%s3 + $0x54] sm:$0xff]
    %v2616 = vld [vmem:[%s3 + $0x5c] sm:$0xf]
    %v2617 = vld [vmem:[%s3 + $0x60] sm:$0xff]
    %v2618 = vld [vmem:[%s3 + $0x68] sm:$0xf]
    %v2619 = vld [vmem:[%s3 + $0x6c] sm:$0xff]
    %v2620 = vld [vmem:[%s3 + $0x74] sm:$0xf]
    %v2621 = vld [vmem:[%s3 + $0x78] sm:$0xff]
    %v2622 = vld [vmem:[%s3 + $0x80] sm:$0xf]
    %v2623 = vld [vmem:[%s3 + $0x84] sm:$0xff]
    %v2624 = vld [vmem:[%s3 + $0x8c] sm:$0xf]
    %v2625 = vld [vmem:[%s3 + $0x90] sm:$0xff]
    %v2626 = vld [vmem:[%s3 + $0x98] sm:$0xf]
    %v2627 = vld [vmem:[%s3 + $0x9c] sm:$0xff]
    %v2628 = vld [vmem:[%s3 + $0xa4] sm:$0xf]
    %v2629 = vld [vmem:[%s3 + $0xa8] sm:$0xff]
    %v2630 = vld [vmem:[%s3 + $0xb0] sm:$0xf]
    %v2631 = vld [vmem:[%s3 + $0xb4] sm:$0xff]
    %v2632 = vld [vmem:[%s3 + $0xbc] sm:$0xf]
    %v2665 = vunpack.c.l.b16 %v2601
    %v2666 = vunpack.c.h.b16 %v2601
    %v2667 = vunpack.c.l.b16 %v2602
    %v2668 = vunpack.c.l.b16 %v2603
    %v2669 = vunpack.c.h.b16 %v2603
    %v2670 = vunpack.c.l.b16 %v2604
    %v2671 = vunpack.c.l.b16 %v2605
    %v2672 = vunpack.c.h.b16 %v2605
    %v2673 = vunpack.c.l.b16 %v2606
    %v2674 = vunpack.c.l.b16 %v2607
    %v2675 = vunpack.c.h.b16 %v2607
    %v2676 = vunpack.c.l.b16 %v2608
    %v2677 = vunpack.c.l.b16 %v2609
    %v2678 = vunpack.c.h.b16 %v2609
    %v2679 = vunpack.c.l.b16 %v2610
    %v2680 = vunpack.c.l.b16 %v2611
    %v2681 = vunpack.c.h.b16 %v2611
    %v2682 = vunpack.c.l.b16 %v2612
    %v2683 = vunpack.c.l.b16 %v2613
    %v2684 = vunpack.c.h.b16 %v2613
    %v2685 = vunpack.c.l.b16 %v2614
    %v2686 = vunpack.c.l.b16 %v2615
    %v2687 = vunpack.c.h.b16 %v2615
    %v2688 = vunpack.c.l.b16 %v2616
    %v2689 = vunpack.c.l.b16 %v2617
    %v2690 = vunpack.c.h.b16 %v2617
    %v2691 = vunpack.c.l.b16 %v2618
    %v2692 = vunpack.c.l.b16 %v2619
    %v2693 = vunpack.c.h.b16 %v2619
    %v2694 = vunpack.c.l.b16 %v2620
    %v2695 = vunpack.c.l.b16 %v2621
    %v2696 = vunpack.c.h.b16 %v2621
    %v2697 = vunpack.c.l.b16 %v2622
    %v2698 = vunpack.c.l.b16 %v2623
    %v2699 = vunpack.c.h.b16 %v2623
    %v2700 = vunpack.c.l.b16 %v2624
    %v2701 = vunpack.c.l.b16 %v2625
    %v2702 = vunpack.c.h.b16 %v2625
    %v2703 = vunpack.c.l.b16 %v2626
    %v2704 = vunpack.c.l.b16 %v2627
    %v2705 = vunpack.c.h.b16 %v2627
    %v2706 = vunpack.c.l.b16 %v2628
    %v2707 = vunpack.c.l.b16 %v2629
    %v2708 = vunpack.c.h.b16 %v2629
    %v2709 = vunpack.c.l.b16 %v2630
    %v2710 = vunpack.c.l.b16 %v2631
    %v2711 = vunpack.c.h.b16 %v2631
    %v2712 = vunpack.c.l.b16 %v2632
    %v2713 = vpack.c.b16 %v2668, %v2665
    %v2714 = vpack.c.b16 %v2669, %v2666
    %v2715 = vpack.c.b16 %v2670, %v2667
    %v2716 = vpack.c.b16 %v2674, %v2671
    %v2717 = vpack.c.b16 %v2675, %v2672
    %v2718 = vpack.c.b16 %v2676, %v2673
    %v2719 = vpack.c.b16 %v2680, %v2677
    %v2720 = vpack.c.b16 %v2681, %v2678
    %v2721 = vpack.c.b16 %v2682, %v2679
    %v2722 = vpack.c.b16 %v2686, %v2683
    %v2723 = vpack.c.b16 %v2687, %v2684
    %v2724 = vpack.c.b16 %v2688, %v2685
    %v2725 = vpack.c.b16 %v2692, %v2689
    %v2726 = vpack.c.b16 %v2693, %v2690
    %v2727 = vpack.c.b16 %v2694, %v2691
    %v2728 = vpack.c.b16 %v2698, %v2695
    %v2729 = vpack.c.b16 %v2699, %v2696
    %v2730 = vpack.c.b16 %v2700, %v2697
    %v2731 = vpack.c.b16 %v2704, %v2701
    %v2732 = vpack.c.b16 %v2705, %v2702
    %v2733 = vpack.c.b16 %v2706, %v2703
    %v2734 = vpack.c.b16 %v2710, %v2707
    %v2735 = vpack.c.b16 %v2711, %v2708
    %v2736 = vpack.c.b16 %v2712, %v2709
    %2761 = vmatprep.subr.bf16.mxu0 %v2735
    %2762 = vmatpush1.bf16.msra.mxu0 %v2734
    %2763 = vmatprep.subr.bf16.mxu0 %v2732
    %2764 = vmatpush1.bf16.msra.mxu0 %v2731
    %2765 = vmatprep.subr.bf16.mxu0 %v2729
    %2766 = vmatpush1.bf16.msra.mxu0 %v2728
    %2767 = vmatprep.subr.bf16.mxu0 %v2726
    %2768 = vmatpush1.bf16.msra.mxu0 %v2725
    %2769 = vmatprep.subr.bf16.mxu0 %v2723
    %2770 = vmatpush1.bf16.msra.mxu0 %v2722
    %2771 = vmatprep.subr.bf16.mxu0 %v2720
    %2772 = vmatpush1.bf16.msra.mxu0 %v2719
    %2773 = vmatprep.subr.bf16.mxu0 %v2717
    %2774 = vmatpush1.bf16.msra.mxu0 %v2716
    %2775 = vmatprep.subr.bf16.mxu0 %v2714
    %2776 = vmatpush1.bf16.msra.mxu0 %v2713
    %2777 = vmatprep.subr.bf16.mxu0 0
    %2778 = vmatpush2.bf16.msra.mxu0 0
    %2779 = vmatprep.subr.bf16.mxu0 0
    %2780 = vmatpush2.bf16.msra.mxu0 0
    %2781 = vmatprep.subr.bf16.mxu0 0
    %2782 = vmatpush2.bf16.msra.mxu0 0
    %2783 = vmatprep.subr.bf16.mxu0 0
    %2784 = vmatpush2.bf16.msra.mxu0 0
    %2785 = vmatprep.subr.bf16.mxu0 0
    %2786 = vmatpush2.bf16.msra.mxu0 0
    %2787 = vmatprep.subr.bf16.mxu0 0
    %2788 = vmatpush2.bf16.msra.mxu0 0
    %2789 = vmatprep.subr.bf16.mxu0 0
    %2790 = vmatpush2.bf16.msra.mxu0 0
    %2791 = vmatprep.subr.bf16.mxu0 0
    %2792 = vmatpush2.bf16.msra.mxu0 0
    %2793 = vmatprep.mubr.bf16.mxu0 0
    %2794 = vmatmul.mubr.bf16.gmra.mxu0 %v2596
    %v2795 = vpop.f32.mrf.mxu0
    %v2796 = vadd.f32 0.0, %v2795
    %v2797 = vpop.f32.mrf.mxu0
    %v2798 = vadd.f32 0.0, %v2797
    %v2799 = vpop.f32.mrf.mxu0
    %v2800 = vpop.f32.mrf.mxu0
    %2801 = vdwg.mxu0
    %2802 = vmatprep.subr.bf16.mxu0 0
    %2803 = vmatpush1.bf16.msra.mxu0 %v2736
    %2804 = vmatprep.subr.bf16.mxu0 0
    %2805 = vmatpush1.bf16.msra.mxu0 %v2733
    %2806 = vmatprep.subr.bf16.mxu0 0
    %2807 = vmatpush1.bf16.msra.mxu0 %v2730
    %2808 = vmatprep.subr.bf16.mxu0 0
    %2809 = vmatpush1.bf16.msra.mxu0 %v2727
    %2810 = vmatprep.subr.bf16.mxu0 0
    %2811 = vmatpush1.bf16.msra.mxu0 %v2724
    %2812 = vmatprep.subr.bf16.mxu0 0
    %2813 = vmatpush1.bf16.msra.mxu0 %v2721
    %2814 = vmatprep.subr.bf16.mxu0 0
    %2815 = vmatpush1.bf16.msra.mxu0 %v2718
    %2816 = vmatprep.subr.bf16.mxu0 0
    %2817 = vmatpush1.bf16.msra.mxu0 %v2715
    %2818 = vmatprep.subr.bf16.mxu0 0
    %2819 = vmatpush2.bf16.msra.mxu0 0
    %2820 = vmatprep.subr.bf16.mxu0 0
    %2821 = vmatpush2.bf16.msra.mxu0 0
    %2822 = vmatprep.subr.bf16.mxu0 0
    %2823 = vmatpush2.bf16.msra.mxu0 0
    %2824 = vmatprep.subr.bf16.mxu0 0
    %2825 = vmatpush2.bf16.msra.mxu0 0
    %2826 = vmatprep.subr.bf16.mxu0 0
    %2827 = vmatpush2.bf16.msra.mxu0 0
    %2828 = vmatprep.subr.bf16.mxu0 0
    %2829 = vmatpush2.bf16.msra.mxu0 0
    %2830 = vmatprep.subr.bf16.mxu0 0
    %2831 = vmatpush2.bf16.msra.mxu0 0
    %2832 = vmatprep.subr.bf16.mxu0 0
    %2833 = vmatpush2.bf16.msra.mxu0 0
    %2834 = vmatprep.mubr.bf16.mxu0 0
    %2835 = vmatmul.mubr.bf16.gmra.mxu0 %v2596
    %v2836 = vpop.f32.mrf.mxu0
    %v2837 = vadd.f32 0.0, %v2836
    %v2838 = vpop.f32.mrf.mxu0
    %v2839 = vpop.f32.mrf.mxu0
    %v2840 = vpop.f32.mrf.mxu0
    %2841 = vdwg.mxu0
    %v2842 = vld [vmem:[%s900] sm:$0xff]
    %v2843 = vld [vmem:[%s900 + $0x8] sm:$0xff]
    %v2844 = vld [vmem:[%s900 + $0x10] sm:$0xff]
    %v2845 = vld [vmem:[#allocation2] sm:$0xff]
    %v2846 = vld [vmem:[#allocation2 + $0x8] sm:$0xff]
    %v2847 = vld [vmem:[#allocation2 + $0x10] sm:$0xff]
    %v2848 = vsel %vm646, %v2842, %v2845
    %v2849 = vsel %vm647, %v2843, %v2846
    %v2850 = vsel %vm648, %v2844, %v2847
    %v2851 = vadd.f32 %v2848, %v2796
    %v2852 = vxor.u32 %v2851, 2147483648
    %v2853 = vmul.f32 %v2852, 1.442695
    %v2854 = vpow.pop %v2853
    %v2855 = vadd.f32 %v2854, 1.0
    %v2856 = vrcp.pop %v2855
    %v2857 = vmul.f32 1.0, %v2856
    %v2858 = vadd.f32 %v2849, %v2798
    %v2859 = vxor.u32 %v2858, 2147483648
    %v2860 = vmul.f32 %v2859, 1.442695
    %v2861 = vpow.pop %v2860
    %v2862 = vadd.f32 %v2861, 1.0
    %v2863 = vrcp.pop %v2862
    %v2864 = vmul.f32 1.0, %v2863
    %v2865 = vadd.f32 %v2837, %v654
    %v2866 = vmul.f32 %v2857, %v2865
    %v2867 = vadd.f32 %v2850, %v2866
    %v2868 = vtanh.pop %v2867
    %v2869 = vsub.f32 1.0, %v2864
    %v2870 = vmul.f32 %v2869, %v2868
    %v2871 = vmul.f32 %v2864, %v2595
    %v2872 = vadd.f32 %v2870, %v2871
    %v2873 = vpack.c.bf16 %v2872, %v2872
    %s2874 = scalar_lea.vmem %s8, 28
    %2875 = vst [vmem:[%s2874] sm:$0xf] %v2873
    %2876 = vst [vmem:[%s9] sm:$0xf] %v2873
    %v2877 = vld [vmem:[%s8] sm:$0xf]
    %v2878 = vld [vmem:[%s8 + $0x4] sm:$0xf]
    %v2879 = vld [vmem:[%s8 + $0x8] sm:$0xf]
    %v2880 = vld [vmem:[%s8 + $0xc] sm:$0xf]
    %v2881 = vld [vmem:[%s8 + $0x10] sm:$0xf]
    %v2882 = vld [vmem:[%s8 + $0x14] sm:$0xf]
    %v2883 = vld [vmem:[%s8 + $0x18] sm:$0xf]
    %v2884 = vld [vmem:[%s8 + $0x1c] sm:$0xf]
    %v2885 = vld [vmem:[%s9] sm:$0xf]
    %v2886 = vld [vmem:[%s9 + $0x4] sm:$0xf]
    %v2887 = vld [vmem:[%s9 + $0x8] sm:$0xf]
    %v2888 = vld [vmem:[%s9 + $0xc] sm:$0xf]
    %v2889 = vld [vmem:[%s9 + $0x10] sm:$0xf]
    %v2890 = vld [vmem:[%s9 + $0x14] sm:$0xf]
    %v2891 = vld [vmem:[%s9 + $0x18] sm:$0xf]
    %v2892 = vld [vmem:[%s9 + $0x1c] sm:$0xf]
    %v2893 = vld [vmem:[%s5] sm:$0xf]
    %v2894 = vld [vmem:[%s5 + $0x4] sm:$0xf]
    %v2895 = vld [vmem:[%s5 + $0x8] sm:$0xf]
    %v2896 = vld [vmem:[%s5 + $0xc] sm:$0xf]
    %v2897 = vld [vmem:[%s5 + $0x10] sm:$0xf]
    %v2898 = vld [vmem:[%s5 + $0x14] sm:$0xf]
    %v2899 = vld [vmem:[%s5 + $0x18] sm:$0xf]
    %v2900 = vld [vmem:[%s5 + $0x1c] sm:$0xf]
    %v2901 = vld [vmem:[%s5 + $0x20] sm:$0xf]
    %v2902 = vld [vmem:[%s5 + $0x24] sm:$0xf]
    %v2903 = vld [vmem:[%s5 + $0x28] sm:$0xf]
    %v2904 = vld [vmem:[%s5 + $0x2c] sm:$0xf]
    %v2905 = vld [vmem:[%s5 + $0x30] sm:$0xf]
    %v2906 = vld [vmem:[%s5 + $0x34] sm:$0xf]
    %v2907 = vld [vmem:[%s5 + $0x38] sm:$0xf]
    %v2908 = vld [vmem:[%s5 + $0x3c] sm:$0xf]
    %v2909 = vld [vmem:[#allocation5] sm:$0xf]
    %v2910 = vld [vmem:[#allocation5 + $0x4] sm:$0xf]
    %v2911 = vld [vmem:[#allocation5 + $0x8] sm:$0xf]
    %v2912 = vld [vmem:[#allocation5 + $0xc] sm:$0xf]
    %v2913 = vld [vmem:[#allocation5 + $0x10] sm:$0xf]
    %v2914 = vld [vmem:[#allocation5 + $0x14] sm:$0xf]
    %v2915 = vld [vmem:[#allocation5 + $0x18] sm:$0xf]
    %v2916 = vld [vmem:[#allocation5 + $0x1c] sm:$0xf]
    %v2917 = vld [vmem:[#allocation5 + $0x20] sm:$0xf]
    %v2918 = vld [vmem:[#allocation5 + $0x24] sm:$0xf]
    %v2919 = vld [vmem:[#allocation5 + $0x28] sm:$0xf]
    %v2920 = vld [vmem:[#allocation5 + $0x2c] sm:$0xf]
    %v2921 = vld [vmem:[#allocation5 + $0x30] sm:$0xf]
    %v2922 = vld [vmem:[#allocation5 + $0x34] sm:$0xf]
    %v2923 = vld [vmem:[#allocation5 + $0x38] sm:$0xf]
    %v2924 = vld [vmem:[#allocation5 + $0x3c] sm:$0xf]
    %v2933 = vunpack.c.l.b16 %v2885
    %v2934 = vunpack.c.l.b16 %v2886
    %v2935 = vunpack.c.l.b16 %v2887
    %v2936 = vunpack.c.l.b16 %v2888
    %v2937 = vunpack.c.l.b16 %v2889
    %v2938 = vunpack.c.l.b16 %v2890
    %v2939 = vunpack.c.l.b16 %v2891
    %v2940 = vunpack.c.l.b16 %v2892
    %v2941 = vpack.c.b16 %v2934, %v2933
    %v2942 = vpack.c.b16 %v2936, %v2935
    %v2943 = vpack.c.b16 %v2938, %v2937
    %v2944 = vpack.c.b16 %v2940, %v2939
    %v2965 = vunpack.c.l.b16 %v2909
    %v2966 = vunpack.c.l.b16 %v2910
    %v2967 = vunpack.c.l.b16 %v2911
    %v2968 = vunpack.c.l.b16 %v2912
    %v2969 = vunpack.c.l.b16 %v2913
    %v2970 = vunpack.c.l.b16 %v2914
    %v2971 = vunpack.c.l.b16 %v2915
    %v2972 = vunpack.c.l.b16 %v2916
    %v2973 = vunpack.c.l.b16 %v2917
    %v2974 = vunpack.c.l.b16 %v2918
    %v2975 = vunpack.c.l.b16 %v2919
    %v2976 = vunpack.c.l.b16 %v2920
    %v2977 = vunpack.c.l.b16 %v2921
    %v2978 = vunpack.c.l.b16 %v2922
    %v2979 = vunpack.c.l.b16 %v2923
    %v2980 = vunpack.c.l.b16 %v2924
    %v2981 = vpack.c.b16 %v2966, %v2965
    %v2982 = vpack.c.b16 %v2968, %v2967
    %v2983 = vpack.c.b16 %v2970, %v2969
    %v2984 = vpack.c.b16 %v2972, %v2971
    %v2985 = vpack.c.b16 %v2974, %v2973
    %v2986 = vpack.c.b16 %v2976, %v2975
    %v2987 = vpack.c.b16 %v2978, %v2977
    %v2988 = vpack.c.b16 %v2980, %v2979
    %2997 = vmatprep.subr.bf16.mxu0 0
    %2998 = vmatpush1.bf16.msra.mxu0 %v2988
    %2999 = vmatprep.subr.bf16.mxu0 0
    %3000 = vmatpush1.bf16.msra.mxu0 %v2987
    %3001 = vmatprep.subr.bf16.mxu0 0
    %3002 = vmatpush1.bf16.msra.mxu0 %v2986
    %3003 = vmatprep.subr.bf16.mxu0 0
    %3004 = vmatpush1.bf16.msra.mxu0 %v2985
    %3005 = vmatprep.subr.bf16.mxu0 0
    %3006 = vmatpush1.bf16.msra.mxu0 %v2984
    %3007 = vmatprep.subr.bf16.mxu0 0
    %3008 = vmatpush1.bf16.msra.mxu0 %v2983
    %3009 = vmatprep.subr.bf16.mxu0 0
    %3010 = vmatpush1.bf16.msra.mxu0 %v2982
    %3011 = vmatprep.subr.bf16.mxu0 0
    %3012 = vmatpush1.bf16.msra.mxu0 %v2981
    %3013 = vmatprep.subr.bf16.mxu0 0
    %3014 = vmatpush2.bf16.msra.mxu0 0
    %3015 = vmatprep.subr.bf16.mxu0 0
    %3016 = vmatpush2.bf16.msra.mxu0 0
    %3017 = vmatprep.subr.bf16.mxu0 0
    %3018 = vmatpush2.bf16.msra.mxu0 0
    %3019 = vmatprep.subr.bf16.mxu0 0
    %3020 = vmatpush2.bf16.msra.mxu0 0
    %3021 = vmatprep.subr.bf16.mxu0 0
    %3022 = vmatpush2.bf16.msra.mxu0 0
    %3023 = vmatprep.subr.bf16.mxu0 0
    %3024 = vmatpush2.bf16.msra.mxu0 0
    %3025 = vmatprep.subr.bf16.mxu0 0
    %3026 = vmatpush2.bf16.msra.mxu0 0
    %3027 = vmatprep.subr.bf16.mxu0 0
    %3028 = vmatpush2.bf16.msra.mxu0 0
    %3029 = vmatprep.mubr.bf16.mxu0 0
    %3030 = vmatmul.mubr.bf16.gmra.mxu0 %v2941
    %v3031 = vpop.f32.mrf.mxu0
    %v3032 = vadd.f32 0.0, %v3031
    %v3033 = vpop.f32.mrf.mxu0
    %v3034 = vpop.f32.mrf.mxu0
    %v3035 = vadd.f32 0.0, %v3034
    %v3036 = vpop.f32.mrf.mxu0
    %3037 = vmatprep.mubr.bf16.mxu0 0
    %3038 = vmatmul.mubr.bf16.gmra.mxu0 %v2942
    %v3039 = vpop.f32.mrf.mxu0
    %v3040 = vadd.f32 0.0, %v3039
    %v3041 = vpop.f32.mrf.mxu0
    %v3042 = vpop.f32.mrf.mxu0
    %v3043 = vadd.f32 0.0, %v3042
    %v3044 = vpop.f32.mrf.mxu0
    %3045 = vmatprep.mubr.bf16.mxu0 0
    %3046 = vmatmul.mubr.bf16.gmra.mxu0 %v2943
    %v3047 = vpop.f32.mrf.mxu0
    %v3048 = vadd.f32 0.0, %v3047
    %v3049 = vpop.f32.mrf.mxu0
    %v3050 = vpop.f32.mrf.mxu0
    %v3051 = vadd.f32 0.0, %v3050
    %v3052 = vpop.f32.mrf.mxu0
    %3053 = vmatprep.mubr.bf16.mxu0 0
    %3054 = vmatmul.mubr.bf16.gmra.mxu0 %v2944
    %v3055 = vpop.f32.mrf.mxu0
    %v3056 = vadd.f32 0.0, %v3055
    %v3057 = vpop.f32.mrf.mxu0
    %v3058 = vpop.f32.mrf.mxu0
    %v3059 = vadd.f32 0.0, %v3058
    %v3060 = vpop.f32.mrf.mxu0
    %3061 = vdwg.mxu0
    %v3070 = vunpack.c.l.b16 %v2877
    %v3071 = vunpack.c.l.b16 %v2878
    %v3072 = vunpack.c.l.b16 %v2879
    %v3073 = vunpack.c.l.b16 %v2880
    %v3074 = vunpack.c.l.b16 %v2881
    %v3075 = vunpack.c.l.b16 %v2882
    %v3076 = vunpack.c.l.b16 %v2883
    %v3077 = vunpack.c.l.b16 %v2884
    %v3078 = vpack.c.b16 %v3071, %v3070
    %v3079 = vpack.c.b16 %v3073, %v3072
    %v3080 = vpack.c.b16 %v3075, %v3074
    %v3081 = vpack.c.b16 %v3077, %v3076
    %v3102 = vunpack.c.l.b16 %v2893
    %v3103 = vunpack.c.l.b16 %v2894
    %v3104 = vunpack.c.l.b16 %v2895
    %v3105 = vunpack.c.l.b16 %v2896
    %v3106 = vunpack.c.l.b16 %v2897
    %v3107 = vunpack.c.l.b16 %v2898
    %v3108 = vunpack.c.l.b16 %v2899
    %v3109 = vunpack.c.l.b16 %v2900
    %v3110 = vunpack.c.l.b16 %v2901
    %v3111 = vunpack.c.l.b16 %v2902
    %v3112 = vunpack.c.l.b16 %v2903
    %v3113 = vunpack.c.l.b16 %v2904
    %v3114 = vunpack.c.l.b16 %v2905
    %v3115 = vunpack.c.l.b16 %v2906
    %v3116 = vunpack.c.l.b16 %v2907
    %v3117 = vunpack.c.l.b16 %v2908
    %v3118 = vpack.c.b16 %v3103, %v3102
    %v3119 = vpack.c.b16 %v3105, %v3104
    %v3120 = vpack.c.b16 %v3107, %v3106
    %v3121 = vpack.c.b16 %v3109, %v3108
    %v3122 = vpack.c.b16 %v3111, %v3110
    %v3123 = vpack.c.b16 %v3113, %v3112
    %v3124 = vpack.c.b16 %v3115, %v3114
    %v3125 = vpack.c.b16 %v3117, %v3116
    %3134 = vmatprep.subr.bf16.mxu0 0
    %3135 = vmatpush1.bf16.msra.mxu0 %v3125
    %3136 = vmatprep.subr.bf16.mxu0 0
    %3137 = vmatpush1.bf16.msra.mxu0 %v3124
    %3138 = vmatprep.subr.bf16.mxu0 0
    %3139 = vmatpush1.bf16.msra.mxu0 %v3123
    %3140 = vmatprep.subr.bf16.mxu0 0
    %3141 = vmatpush1.bf16.msra.mxu0 %v3122
    %3142 = vmatprep.subr.bf16.mxu0 0
    %3143 = vmatpush1.bf16.msra.mxu0 %v3121
    %3144 = vmatprep.subr.bf16.mxu0 0
    %3145 = vmatpush1.bf16.msra.mxu0 %v3120
    %3146 = vmatprep.subr.bf16.mxu0 0
    %3147 = vmatpush1.bf16.msra.mxu0 %v3119
    %3148 = vmatprep.subr.bf16.mxu0 0
    %3149 = vmatpush1.bf16.msra.mxu0 %v3118
    %3150 = vmatprep.subr.bf16.mxu0 0
    %3151 = vmatpush2.bf16.msra.mxu0 0
    %3152 = vmatprep.subr.bf16.mxu0 0
    %3153 = vmatpush2.bf16.msra.mxu0 0
    %3154 = vmatprep.subr.bf16.mxu0 0
    %3155 = vmatpush2.bf16.msra.mxu0 0
    %3156 = vmatprep.subr.bf16.mxu0 0
    %3157 = vmatpush2.bf16.msra.mxu0 0
    %3158 = vmatprep.subr.bf16.mxu0 0
    %3159 = vmatpush2.bf16.msra.mxu0 0
    %3160 = vmatprep.subr.bf16.mxu0 0
    %3161 = vmatpush2.bf16.msra.mxu0 0
    %3162 = vmatprep.subr.bf16.mxu0 0
    %3163 = vmatpush2.bf16.msra.mxu0 0
    %3164 = vmatprep.subr.bf16.mxu0 0
    %3165 = vmatpush2.bf16.msra.mxu0 0
    %3166 = vmatprep.mubr.bf16.mxu0 0
    %3167 = vmatmul.mubr.bf16.gmra.mxu0 %v3078
    %v3168 = vpop.f32.mrf.mxu0
    %v3169 = vadd.f32 %v3032, %v3168
    %v3170 = vpop.f32.mrf.mxu0
    %v3171 = vpop.f32.mrf.mxu0
    %v3172 = vadd.f32 %v3035, %v3171
    %v3173 = vpop.f32.mrf.mxu0
    %3174 = vmatprep.mubr.bf16.mxu0 0
    %3175 = vmatmul.mubr.bf16.gmra.mxu0 %v3079
    %v3176 = vpop.f32.mrf.mxu0
    %v3177 = vadd.f32 %v3040, %v3176
    %v3178 = vpop.f32.mrf.mxu0
    %v3179 = vpop.f32.mrf.mxu0
    %v3180 = vadd.f32 %v3043, %v3179
    %v3181 = vpop.f32.mrf.mxu0
    %3182 = vmatprep.mubr.bf16.mxu0 0
    %3183 = vmatmul.mubr.bf16.gmra.mxu0 %v3080
    %v3184 = vpop.f32.mrf.mxu0
    %v3185 = vadd.f32 %v3048, %v3184
    %v3186 = vpop.f32.mrf.mxu0
    %v3187 = vpop.f32.mrf.mxu0
    %v3188 = vadd.f32 %v3051, %v3187
    %v3189 = vpop.f32.mrf.mxu0
    %3190 = vmatprep.mubr.bf16.mxu0 0
    %3191 = vmatmul.mubr.bf16.gmra.mxu0 %v3081
    %v3192 = vpop.f32.mrf.mxu0
    %v3193 = vadd.f32 %v3056, %v3192
    %v3194 = vpop.f32.mrf.mxu0
    %v3195 = vpop.f32.mrf.mxu0
    %v3196 = vadd.f32 %v3059, %v3195
    %v3197 = vpop.f32.mrf.mxu0
    %3198 = vdwg.mxu0
    %v3199 = vld [vmem:[%s7] sm:$0x1]
    %v3201 = vlaneseq
    %v3202 = vshrl.u32 %v3201, 7
    %v3203 = vsub.s32 0, %v3202
    %v3204 = vrot.slane %v3199, %v3203
    %v3206 = vadd.f32 %v3169, %v3204
    %v3207 = vadd.f32 %v3172, %v3204
    %v3208 = vadd.f32 %v3177, %v3204
    %v3209 = vadd.f32 %v3180, %v3204
    %v3210 = vadd.f32 %v3185, %v3204
    %v3211 = vadd.f32 %v3188, %v3204
    %v3212 = vadd.f32 %v3193, %v3204
    %v3213 = vadd.f32 %v3196, %v3204
    %3214 = vst [vmem:[%s10] sm:$0xff] %v3206
    %3215 = vst [vmem:[%s10 + $0x8] sm:$0xff] %v3207
    %3216 = vst [vmem:[%s10 + $0x10] sm:$0xff] %v3208
    %3217 = vst [vmem:[%s10 + $0x18] sm:$0xff] %v3209
    %3218 = vst [vmem:[%s10 + $0x20] sm:$0xff] %v3210
    %3219 = vst [vmem:[%s10 + $0x28] sm:$0xff] %v3211
    %3220 = vst [vmem:[%s10 + $0x30] sm:$0xff] %v3212
    %3221 = vst [vmem:[%s10 + $0x38] sm:$0xff] %v3213
    // Predicated region
    $region42: #{_encode_device.1} parent=1 // pred_check
      _
    $region43: #{_encode_device.1} parent=1 // pred_check_branch
      %3223 = sbr.rel (0) target = $region45
    $region44: #{_encode_device.1} parent=1 // pred_region
      _
    $region45: #{_encode_device.1} parent=1 // pred_fallthru
      _
    // Predicated region
    $region46: #{_encode_device.1} parent=1 // pred_check
      _
    $region47: #{_encode_device.1} parent=1 // pred_check_branch
      %3225 = sbr.rel (0) target = $region49
    $region48: #{_encode_device.1} parent=1 // pred_region
      _
    $region49: #{_encode_device.1} parent=1 // pred_fallthru
      _
    // Predicated region
    $region50: #{_encode_device.1} parent=1 // pred_check
      _
    $region51: #{_encode_device.1} parent=1 // pred_check_branch
      %3227 = sbr.rel (0) target = $region53
    $region52: #{_encode_device.1} parent=1 // pred_region
      _
    $region53: #{_encode_device.1} parent=1 // pred_fallthru
      _
    // Predicated region
    $region54: #{_encode_device.1} parent=1 // pred_check
      _
    $region55: #{_encode_device.1} parent=1 // pred_check_branch
      %3229 = sbr.rel (0) target = $region57
    $region56: #{_encode_device.1} parent=1 // pred_region
      _
    $region57: #{_encode_device.1} parent=1 // pred_fallthru
      _
    // Predicated region
    $region58: #{_encode_device.1} parent=1 // pred_check
      _
    $region59: #{_encode_device.1} parent=1 // pred_check_branch
      %3231 = sbr.rel (0) target = $region61
    $region60: #{_encode_device.1} parent=1 // pred_region
      _
    $region61: #{_encode_device.1} parent=1 // pred_fallthru
      _
    // Predicated region
    $region62: #{_encode_device.1} parent=1 // pred_check
      _
    $region63: #{_encode_device.1} parent=1 // pred_check_branch
      %3233 = sbr.rel (0) target = $region65
    $region64: #{_encode_device.1} parent=1 // pred_region
      _
    $region65: #{_encode_device.1} parent=1 // pred_fallthru
      _
    %3234 = vsyncpa [#allocation4], 1
    %3235 = vsyncpa [#allocation6], 1

</llo_original>
